<compile_context>
chip_gen: v6e
topology: v6e:2x2x1
jax: 0.10.0
libtpu: 0.0.40
codegen_flags: <defaults>
</compile_context>

<pallas_src>
import functools

import jax
import jax.numpy as jnp
import numpy as np
from jax.experimental import pallas as pl
from jax.experimental.pallas import tpu as pltpu

EPS = 1e-6


def _rmsnorm(x, scale):
    # x * rsqrt(mean(x^2) + eps) * scale   (rsqrt instead of divide-by-sqrt)
    inv = jax.lax.rsqrt(jnp.mean(x * x, axis=-1, keepdims=True) + EPS)
    return x * inv * scale


# ---------------------------------------------------------------------------
# Kernel 1: all transformer layers. grid=(n_layers,); residual stream is the
# resident output block (same block index every step).
# ---------------------------------------------------------------------------
def transformer_layers_kernel(
    x0_ref,          # (S, D)         embedded tokens (HBM-aliased with output)
    wq_ref,          # (1, H, D, Dh)  per-head Q proj, 1/sqrt(Dh) pre-folded
    wk_ref,          # (1, H, D, Dh)
    wv_ref,          # (1, H, D, Dh)
    wo_ref,          # (1, H, Dh, D)
    attn_scale_ref,  # (1, 1, D)      RMSNorm scale (pre-attn)
    mlp_scale_ref,   # (1, 1, D)      RMSNorm scale (pre-mlp)
    w_down_ref,      # (1, D, M)
    b_mlp_ref,       # (1, 1, M)
    w_up_ref,        # (1, M, D)
    x_out_ref,       # (S, D)         residual stream (output, resident)
):
    # Output blocks are write-buffers (not loaded from HBM), so the aliased
    # input still seeds the residual on the first grid step.
    @pl.when(pl.program_id(0) == 0)
    def _():
        x_out_ref[...] = x0_ref[...]

    X = x_out_ref[...]                       # f32 residual
    S, D = X.shape
    H = wq_ref.shape[1]
    wdt = wq_ref.dtype                       # MXU operand dtype (f32 or bf16)

    # ---- attention block -------------------------------------------------
    # TODO(synk): for non-toy S, tile attention over KV (flash-style online
    # softmax) and skip fully-masked upper-triangular KV tiles.
    xn = _rmsnorm(X, attn_scale_ref[0]).astype(wdt)            # (S, D)
    xb = jnp.broadcast_to(xn[None], (H, S, D))                 # (H, S, D)

    # batched per-head projections: (H,S,D) x (H,D,Dh) -> (H,S,Dh)
    Q = jnp.einsum("hsd,hde->hse", xb, wq_ref[0],
                   preferred_element_type=jnp.float32)
    K = jnp.einsum("hsd,hde->hse", xb, wk_ref[0],
                   preferred_element_type=jnp.float32)
    V = jnp.einsum("hsd,hde->hse", xb, wv_ref[0],
                   preferred_element_type=jnp.float32)

    # scores (scale already folded into Wq): (H,S,Dh)x(H,S,Dh) -> (H,S,S)
    s = jnp.einsum("hse,hte->hst", Q.astype(wdt), K.astype(wdt),
                   preferred_element_type=jnp.float32)
    row = jax.lax.broadcasted_iota(jnp.int32, (H, S, S), 1)
    col = jax.lax.broadcasted_iota(jnp.int32, (H, S, S), 2)
    s = jnp.where(col > row, -jnp.inf, s)                      # causal mask
    s = s - jnp.max(s, axis=-1, keepdims=True)
    p = jnp.exp(s)
    # (approx=True would push this fully onto the EUP; kept exact so the f32
    #  path matches the reference at 1e-4.)
    p = p * pl.reciprocal(jnp.sum(p, axis=-1, keepdims=True), approx=False)

    ctx = jnp.einsum("hst,hte->hse", p.astype(wdt), V.astype(wdt),
                     preferred_element_type=jnp.float32)        # (H,S,Dh)
    attn_h = jnp.einsum("hse,hed->hsd", ctx.astype(wdt), wo_ref[0],
                        preferred_element_type=jnp.float32)     # (H,S,D)
    X = X + jnp.sum(attn_h, axis=0)                             # sum over heads

    # ---- MLP block ---------------------------------------------------------
    # TODO(synk): for d_model/d_mlp large enough to pressure v7x's 64 MiB VMEM,
    # add an inner grid axis tiling W_down/W_up along d_mlp.
    xn2 = _rmsnorm(X, mlp_scale_ref[0]).astype(wdt)
    h1 = jnp.dot(xn2, w_down_ref[0],
                 preferred_element_type=jnp.float32) + b_mlp_ref[0]
    h1 = jnp.maximum(h1, 0.0).astype(wdt)                       # ReLU
    X = X + jnp.dot(h1, w_up_ref[0], preferred_element_type=jnp.float32)

    x_out_ref[...] = X


# ---------------------------------------------------------------------------
# Kernel 2: final RMSNorm + unembedding, tiled over the vocab.
# ---------------------------------------------------------------------------
def final_kernel(x_ref, scale_ref, w_out_ref, b_out_ref, o_ref):
    xn = _rmsnorm(x_ref[...], scale_ref[...]).astype(w_out_ref.dtype)
    acc = jnp.dot(xn, w_out_ref[...], preferred_element_type=jnp.float32)
    o_ref[...] = (acc + b_out_ref[...]).astype(o_ref.dtype)


# ---------------------------------------------------------------------------
# Wrapper
# ---------------------------------------------------------------------------
def _vmem_limit_bytes(working_set_bytes):
    # generous headroom, clamped so the value is legal on every generation
    return int(min(64 * 1024 * 1024,
                   max(32 * 1024 * 1024, 2 * working_set_bytes + (8 << 20))))


def transformer_forward(tokens, Pp, *, tile_v=1024):
    """Forward pass on packed params (see pack_params)."""
    X0 = Pp["emb"][tokens].astype(jnp.float32)   # glue: embedding gather in XLA
    S, D = X0.shape
    L, H, _, Dh = Pp["Wq"].shape
    M = Pp["W_down"].shape[-1]
    V = Pp["W_out"].shape[-1]

    wbytes = jnp.dtype(Pp["Wq"].dtype).itemsize
    per_layer_bytes = (4 * H * D * Dh + 2 * D * M) * wbytes + (2 * D + M) * 4
    act_bytes = S * D * 4

    layers = pl.pallas_call(
        transformer_layers_kernel,
        out_shape=jax.ShapeDtypeStruct((S, D), jnp.float32),
        grid_spec=pltpu.PrefetchScalarGridSpec(
            num_scalar_prefetch=0,
            grid=(L,),
            in_specs=[
                pl.BlockSpec((S, D),        lambda l: (0, 0)),        # X0
                pl.BlockSpec((1, H, D, Dh), lambda l: (l, 0, 0, 0)),  # Wq
                pl.BlockSpec((1, H, D, Dh), lambda l: (l, 0, 0, 0)),  # Wk
                pl.BlockSpec((1, H, D, Dh), lambda l: (l, 0, 0, 0)),  # Wv
                pl.BlockSpec((1, H, Dh, D), lambda l: (l, 0, 0, 0)),  # Wo
                pl.BlockSpec((1, 1, D),     lambda l: (l, 0, 0)),     # attn scale
                pl.BlockSpec((1, 1, D),     lambda l: (l, 0, 0)),     # mlp scale
                pl.BlockSpec((1, D, M),     lambda l: (l, 0, 0)),     # W_down
                pl.BlockSpec((1, 1, M),     lambda l: (l, 0, 0)),     # B
                pl.BlockSpec((1, M, D),     lambda l: (l, 0, 0)),     # W_up
            ],
            out_specs=pl.BlockSpec((S, D), lambda l: (0, 0)),
        ),
        input_output_aliases={0: 0},          # embedded input aliases the output
        compiler_params=pltpu.CompilerParams(
            dimension_semantics=("arbitrary",),
            vmem_limit_bytes=_vmem_limit_bytes(
                2 * per_layer_bytes + 4 * act_bytes),
        ),
    )
    X = layers(X0, Pp["Wq"], Pp["Wk"], Pp["Wv"], Pp["Wo"],
               Pp["attn_scale"], Pp["mlp_scale"],
               Pp["W_down"], Pp["B"], Pp["W_up"])

    # final RMSNorm + unembed, tiled over the vocab ("parallel" axis).
    tv = min(tile_v, V)
    if tv < V:
        tv = max(128, (tv // 128) * 128)      # keep lane-dense 128-multiple tiles
    nv = pl.cdiv(V, tv)
    wob = jnp.dtype(Pp["W_out"].dtype).itemsize

    logits = pl.pallas_call(
        final_kernel,
        out_shape=jax.ShapeDtypeStruct((S, V), jnp.float32),
        grid_spec=pltpu.PrefetchScalarGridSpec(
            num_scalar_prefetch=0,
            grid=(nv,),
            in_specs=[
                pl.BlockSpec((S, D),  lambda v: (0, 0)),
                pl.BlockSpec((1, D),  lambda v: (0, 0)),
                pl.BlockSpec((D, tv), lambda v: (0, v)),
                pl.BlockSpec((1, tv), lambda v: (0, v)),
            ],
            out_specs=pl.BlockSpec((S, tv), lambda v: (0, v)),
        ),
        compiler_params=pltpu.CompilerParams(
            dimension_semantics=("parallel",),
            vmem_limit_bytes=_vmem_limit_bytes(
                2 * (D * tv * wob + S * tv * 4) + act_bytes),
        ),
    )(X, Pp["final_scale"], Pp["W_out"], Pp["b_out"])
    return logits


# ---------------------------------------------------------------------------
# Parameter construction (matches the PyTorch module layout) + packing.
# ---------------------------------------------------------------------------
def make_params(key, *, d_vocab, d_model, d_mlp, n_heads, d_head, n_layers):
    ks = jax.random.split(key, 9)
    HDh = n_heads * d_head
    f32 = jnp.float32
    return {
        "emb":  (0.02 * jax.random.normal(ks[0], (d_vocab, d_model))).astype(f32),
        "Wq":   (jax.random.normal(ks[1], (n_layers, d_model, HDh)) / d_model ** 0.5).astype(f32),
        "Wk":   (jax.random.normal(ks[2], (n_layers, d_model, HDh)) / d_model ** 0.5).astype(f32),
        "Wv":   (jax.random.normal(ks[3], (n_layers, d_model, HDh)) / d_model ** 0.5).astype(f32),
        "Wo":   (jax.random.normal(ks[4], (n_layers, HDh, d_model)) / d_head ** 0.5).astype(f32),
        "attn_scale": jnp.ones((n_layers, 1, d_model), f32),
        "mlp_scale":  jnp.ones((n_layers, 1, d_model), f32),
        "W_down": (jax.random.normal(ks[5], (n_layers, d_model, d_mlp)) / d_model ** 0.5).astype(f32),
        "B":      jnp.zeros((n_layers, 1, d_mlp), f32),
        "W_up":   (jax.random.normal(ks[6], (n_layers, d_mlp, d_model)) / d_mlp ** 0.5).astype(f32),
        "final_scale": jnp.ones((1, d_model), f32),
        # out_layer: Linear(d_model, d_vocab); stored pre-transposed (d_model, d_vocab)
        "W_out": (0.02 * jax.random.normal(ks[7], (d_model, d_vocab))).astype(f32),
        "b_out": (0.01 * jax.random.normal(ks[8], (1, d_vocab))).astype(f32),
    }


def pack_params(P, *, n_heads, d_head, weight_dtype=jnp.float32):
    """Head-split the attention weights, fold 1/sqrt(d_head) into Wq and cast
    the matmul weights to `weight_dtype` (norm scales / biases stay f32)."""
    L, D, _ = P["Wq"].shape

    def split_in(w):    # (L, D, H*Dh) -> (L, H, D, Dh)
        return jnp.transpose(w.reshape(L, D, n_heads, d_head), (0, 2, 1, 3))

    def split_out(w):   # (L, H*Dh, D) -> (L, H, Dh, D)
        return w.reshape(L, n_heads, d_head, D)

    wd = weight_dtype
    return {
        "emb": P["emb"],
        "Wq": (split_in(P["Wq"]) * (1.0 / d_head ** 0.5)).astype(wd),
        "Wk": split_in(P["Wk"]).astype(wd),
        "Wv": split_in(P["Wv"]).astype(wd),
        "Wo": split_out(P["Wo"]).astype(wd),
        "attn_scale": P["attn_scale"],
        "mlp_scale":  P["mlp_scale"],
        "W_down": P["W_down"].astype(wd),
        "B":      P["B"],
        "W_up":   P["W_up"].astype(wd),
        "final_scale": P["final_scale"],
        "W_out": P["W_out"].astype(wd),
        "b_out": P["b_out"],
    }


# ---------------------------------------------------------------------------
# Pure-JAX reference (mirrors the PyTorch forward exactly, f32).
# ---------------------------------------------------------------------------
def reference_forward(tokens, P, *, n_layers, n_heads, d_head):
    def _rms(x, scale):
        rms = jnp.sqrt(jnp.mean(x * x, axis=-1, keepdims=True) + EPS)
        return (x / rms) * scale

    X = P["emb"][tokens]
    S = X.shape[0]
    mask = jnp.triu(jnp.full((S, S), -jnp.inf, jnp.float32), k=1)
    for l in range(n_layers):
        xn = _rms(X, P["attn_scale"][l, 0])
        Q, K, V = xn @ P["Wq"][l], xn @ P["Wk"][l], xn @ P["Wv"][l]
        attn_out = 0.0
        for h in range(n_heads):
            sl = slice(h * d_head, (h + 1) * d_head)
            scores = Q[:, sl] @ K[:, sl].T / (d_head ** 0.5) + mask
            p = jax.nn.softmax(scores, axis=-1)
            attn_out = attn_out + (p @ V[:, sl]) @ P["Wo"][l, sl]
        X = X + attn_out
        xn2 = _rms(X, P["mlp_scale"][l, 0])
        h1 = jnp.maximum(xn2 @ P["W_down"][l] + P["B"][l, 0], 0.0)
        X = X + h1 @ P["W_up"][l]
    X = _rms(X, P["final_scale"][0])
    return X @ P["W_out"] + P["b_out"][0]


# ---------------------------------------------------------------------------
if __name__ == "__main__":
    # small config consistent with GPTConfig (d_model/d_mlp/heads kept;
    # vocab & layers shrunk, seq=8)
    cfg = dict(d_vocab=256, d_model=128, d_mlp=512, n_heads=4, d_head=32, n_layers=2)
    seq = 8

    key = jax.random.PRNGKey(0)
    pkey, tkey = jax.random.split(key)
    P = make_params(pkey, **cfg)
    tokens = jax.random.randint(tkey, (seq,), 0, cfg["d_vocab"], dtype=jnp.int32)

    ref = reference_forward(tokens, P, n_layers=cfg["n_layers"],
                            n_heads=cfg["n_heads"], d_head=cfg["d_head"])

    run = jax.jit(functools.partial(transformer_forward, tile_v=128))

    # f32 weights: strict parity with the PyTorch/JAX reference.
    Pp32 = pack_params(P, n_heads=cfg["n_heads"], d_head=cfg["d_head"],
                       weight_dtype=jnp.float32)
    logits32 = jax.block_until_ready(run(tokens, Pp32))
    np.testing.assert_allclose(np.asarray(logits32), np.asarray(ref),
                               rtol=1e-4, atol=1e-4)

    # bf16 weight streaming (2x MXU throughput / half the DMA bytes), f32 accum;
    # loose tolerance vs the f32 reference.
    Ppbf = pack_params(P, n_heads=cfg["n_heads"], d_head=cfg["d_head"],
                       weight_dtype=jnp.bfloat16)
    logitsbf = jax.block_until_ready(run(tokens, Ppbf))
    np.testing.assert_allclose(np.asarray(logitsbf), np.asarray(ref),
                               rtol=1e-1, atol=1e-1)

    print("KERNEL_OK")
</pallas_src>

<mosaic_0001>
module attributes {stable_mosaic.version = 11 : i64} {
  func.func @transformer_layers_kernel(%arg0: i32, %arg1: memref<8x128xf32, #tpu.memory_space<vmem>>, %arg2: memref<1x4x128x32xf32, #tpu.memory_space<vmem>>, %arg3: memref<1x4x128x32xf32, #tpu.memory_space<vmem>>, %arg4: memref<1x4x128x32xf32, #tpu.memory_space<vmem>>, %arg5: memref<1x4x32x128xf32, #tpu.memory_space<vmem>>, %arg6: memref<1x1x128xf32, #tpu.memory_space<vmem>>, %arg7: memref<1x1x128xf32, #tpu.memory_space<vmem>>, %arg8: memref<1x128x512xf32, #tpu.memory_space<vmem>>, %arg9: memref<1x1x512xf32, #tpu.memory_space<vmem>>, %arg10: memref<1x512x128xf32, #tpu.memory_space<vmem>>, %arg11: memref<8x128xf32, #tpu.memory_space<vmem>>) attributes {dimension_semantics = [#tpu.dimension_semantics<arbitrary>], iteration_bounds = array<i64: 2>, scalar_prefetch = 0 : i64, scratch_operands = 0 : i64, tpu.core_type = #tpu.core_type<tc>, window_params = [{pipeline_mode = #tpu.pipeline_mode<synchronous>, transform_indices = @transform_0, window_bounds = array<i64: 8, 128>}, {transform_indices = @transform_1, window_bounds = array<i64: 1, 4, 128, 32>}, {transform_indices = @transform_2, window_bounds = array<i64: 1, 4, 128, 32>}, {transform_indices = @transform_3, window_bounds = array<i64: 1, 4, 128, 32>}, {transform_indices = @transform_4, window_bounds = array<i64: 1, 4, 32, 128>}, {transform_indices = @transform_5, window_bounds = array<i64: 1, 1, 128>}, {transform_indices = @transform_6, window_bounds = array<i64: 1, 1, 128>}, {transform_indices = @transform_7, window_bounds = array<i64: 1, 128, 512>}, {transform_indices = @transform_8, window_bounds = array<i64: 1, 1, 512>}, {transform_indices = @transform_9, window_bounds = array<i64: 1, 512, 128>}, {pipeline_mode = #tpu.pipeline_mode<synchronous>, transform_indices = @transform_10, window_bounds = array<i64: 8, 128>}]} {
    %c0_i32 = arith.constant 0 : i32
    %0 = arith.cmpi eq, %arg0, %c0_i32 : i32
    %1 = arith.extui %0 : i1 to i32
    %c0_i32_0 = arith.constant 0 : i32
    %2 = arith.cmpi ne, %1, %c0_i32_0 : i32
    scf.if %2 {
      %c0_53 = arith.constant 0 : index
      %c0_54 = arith.constant 0 : index
      %80 = vector.load %arg1[%c0_53, %c0_54] : memref<8x128xf32, #tpu.memory_space<vmem>>, vector<8x128xf32>
      %c0_55 = arith.constant 0 : index
      %c0_56 = arith.constant 0 : index
      %81 = vector.load %arg11[%c0_55, %c0_56] : memref<8x128xf32, #tpu.memory_space<vmem>>, vector<8x128xf32>
      tpu.vector_store %arg11[%c0_55, %c0_56], %80 {strides = array<i32>} : memref<8x128xf32, #tpu.memory_space<vmem>>, vector<8x128xf32>,
    } else {
    }
    %c0 = arith.constant 0 : index
    %c0_1 = arith.constant 0 : index
    %3 = vector.load %arg11[%c0, %c0_1] : memref<8x128xf32, #tpu.memory_space<vmem>>, vector<8x128xf32>
    %c0_2 = arith.constant 0 : index
    %c0_3 = arith.constant 0 : index
    %c0_4 = arith.constant 0 : index
    %4 = vector.load %arg6[%c0_2, %c0_3, %c0_4] : memref<1x1x128xf32, #tpu.memory_space<vmem>>, vector<1x1x128xf32>
    %5 = vector.shape_cast %4 : vector<1x1x128xf32> to vector<1x128xf32>
    %6 = arith.mulf %3, %3 : vector<8x128xf32>
    %cst = arith.constant dense<0.000000e+00> : vector<8xf32>
    %7 = vector.multi_reduction <add>, %6, %cst [1] : vector<8x128xf32> to vector<8xf32>
    %8 = vector.shape_cast %7 : vector<8xf32> to vector<8x1xf32>
    %cst_5 = arith.constant 1.280000e+02 : f32
    %9 = vector.broadcast %cst_5 : f32 to vector<8x1xf32>
    %10 = arith.divf %8, %9 : vector<8x1xf32>
    %cst_6 = arith.constant 9.99999997E-7 : f32
    %11 = vector.broadcast %cst_6 : f32 to vector<8x1xf32>
    %12 = arith.addf %10, %11 : vector<8x1xf32>
    %13 = math.rsqrt %12 : vector<8x1xf32>
    %14 = vector.broadcast %13 : vector<8x1xf32> to vector<8x128xf32>
    %15 = arith.mulf %3, %14 : vector<8x128xf32>
    %16 = vector.broadcast %5 : vector<1x128xf32> to vector<8x128xf32>
    %17 = arith.mulf %15, %16 : vector<8x128xf32>
    %18 = vector.shape_cast %17 : vector<8x128xf32> to vector<1x8x128xf32>
    %19 = vector.shape_cast %18 : vector<1x8x128xf32> to vector<1x8x128xf32>
    %20 = vector.broadcast %19 : vector<1x8x128xf32> to vector<4x8x128xf32>
    %c0_7 = arith.constant 0 : index
    %c0_8 = arith.constant 0 : index
    %c0_9 = arith.constant 0 : index
    %c0_10 = arith.constant 0 : index
    %21 = vector.load %arg2[%c0_7, %c0_8, %c0_9, %c0_10] : memref<1x4x128x32xf32, #tpu.memory_space<vmem>>, vector<1x4x128x32xf32>
    %22 = vector.shape_cast %21 : vector<1x4x128x32xf32> to vector<4x128x32xf32>
    "tpu.trace_start"() <{level = 10 : i32, message = "hsd,hde->hse"}> : () -> ()
    %cst_11 = arith.constant dense<0.000000e+00> : vector<4x8x32xf32>
    %23 = tpu.matmul %20, %22, %cst_11 {dimension_numbers = #tpu.dot_dimension_numbers<[2], [1], [1], [2], [0, 0, 0, 1, 1, 2], [0], [0]>} : vector<4x8x128xf32>, vector<4x128x32xf32>, vector<4x8x32xf32> -> vector<4x8x32xf32>
    "tpu.trace_stop"() : () -> ()
    %c0_12 = arith.constant 0 : index
    %c0_13 = arith.constant 0 : index
    %c0_14 = arith.constant 0 : index
    %c0_15 = arith.constant 0 : index
    %24 = vector.load %arg3[%c0_12, %c0_13, %c0_14, %c0_15] : memref<1x4x128x32xf32, #tpu.memory_space<vmem>>, vector<1x4x128x32xf32>
    %25 = vector.shape_cast %24 : vector<1x4x128x32xf32> to vector<4x128x32xf32>
    "tpu.trace_start"() <{level = 10 : i32, message = "hsd,hde->hse"}> : () -> ()
    %cst_16 = arith.constant dense<0.000000e+00> : vector<4x8x32xf32>
    %26 = tpu.matmul %20, %25, %cst_16 {dimension_numbers = #tpu.dot_dimension_numbers<[2], [1], [1], [2], [0, 0, 0, 1, 1, 2], [0], [0]>} : vector<4x8x128xf32>, vector<4x128x32xf32>, vector<4x8x32xf32> -> vector<4x8x32xf32>
    "tpu.trace_stop"() : () -> ()
    %c0_17 = arith.constant 0 : index
    %c0_18 = arith.constant 0 : index
    %c0_19 = arith.constant 0 : index
    %c0_20 = arith.constant 0 : index
    %27 = vector.load %arg4[%c0_17, %c0_18, %c0_19, %c0_20] : memref<1x4x128x32xf32, #tpu.memory_space<vmem>>, vector<1x4x128x32xf32>
    %28 = vector.shape_cast %27 : vector<1x4x128x32xf32> to vector<4x128x32xf32>
    "tpu.trace_start"() <{level = 10 : i32, message = "hsd,hde->hse"}> : () -> ()
    %cst_21 = arith.constant dense<0.000000e+00> : vector<4x8x32xf32>
    %29 = tpu.matmul %20, %28, %cst_21 {dimension_numbers = #tpu.dot_dimension_numbers<[2], [1], [1], [2], [0, 0, 0, 1, 1, 2], [0], [0]>} : vector<4x8x128xf32>, vector<4x128x32xf32>, vector<4x8x32xf32> -> vector<4x8x32xf32>
    "tpu.trace_stop"() : () -> ()
    "tpu.trace_start"() <{level = 10 : i32, message = "hse,hte->hst"}> : () -> ()
    %cst_22 = arith.constant dense<0.000000e+00> : vector<4x8x8xf32>
    %30 = tpu.matmul %23, %26, %cst_22 {dimension_numbers = #tpu.dot_dimension_numbers<[2], [2], [1], [1], [0, 0, 0, 1, 1, 1], [0], [0]>} : vector<4x8x32xf32>, vector<4x8x32xf32>, vector<4x8x8xf32> -> vector<4x8x8xf32>
    "tpu.trace_stop"() : () -> ()
    %31 = tpu.iota {dimensions = array<i32: 1>} : vector<4x8x8xi32>
    %32 = tpu.iota {dimensions = array<i32: 2>} : vector<4x8x8xi32>
    %33 = arith.cmpi sgt, %32, %31 : vector<4x8x8xi32>
    %cst_23 = arith.constant 0xFF800000 : f32
    %34 = vector.broadcast %cst_23 : f32 to vector<4x8x8xf32>
    %35 = arith.select %33, %34, %30 : vector<4x8x8xi1>, vector<4x8x8xf32>
    %cst_24 = arith.constant dense<0xFF800000> : vector<4x8xf32>
    %36 = vector.multi_reduction <maximumf>, %35, %cst_24 [2] : vector<4x8x8xf32> to vector<4x8xf32>
    %37 = vector.shape_cast %36 : vector<4x8xf32> to vector<4x8x1xf32>
    %38 = vector.broadcast %37 : vector<4x8x1xf32> to vector<4x8x8xf32>
    %39 = arith.subf %35, %38 : vector<4x8x8xf32>
    %40 = math.exp %39 : vector<4x8x8xf32>
    %cst_25 = arith.constant dense<0.000000e+00> : vector<4x8xf32>
    %41 = vector.multi_reduction <add>, %40, %cst_25 [2] : vector<4x8x8xf32> to vector<4x8xf32>
    %42 = vector.shape_cast %41 : vector<4x8xf32> to vector<4x8x1xf32>
    %43 = tpu.reciprocal %42 : vector<4x8x1xf32> -> vector<4x8x1xf32>
    %44 = vector.broadcast %43 : vector<4x8x1xf32> to vector<4x8x8xf32>
    %45 = arith.mulf %40, %44 : vector<4x8x8xf32>
    "tpu.trace_start"() <{level = 10 : i32, message = "hst,hte->hse"}> : () -> ()
    %cst_26 = arith.constant dense<0.000000e+00> : vector<4x8x32xf32>
    %46 = tpu.matmul %45, %29, %cst_26 {dimension_numbers = #tpu.dot_dimension_numbers<[2], [1], [1], [2], [0, 0, 0, 1, 1, 2], [0], [0]>} : vector<4x8x8xf32>, vector<4x8x32xf32>, vector<4x8x32xf32> -> vector<4x8x32xf32>
    "tpu.trace_stop"() : () -> ()
    %c0_27 = arith.constant 0 : index
    %c0_28 = arith.constant 0 : index
    %c0_29 = arith.constant 0 : index
    %c0_30 = arith.constant 0 : index
    %47 = vector.load %arg5[%c0_27, %c0_28, %c0_29, %c0_30] : memref<1x4x32x128xf32, #tpu.memory_space<vmem>>, vector<1x4x32x128xf32>
    %48 = vector.shape_cast %47 : vector<1x4x32x128xf32> to vector<4x32x128xf32>
    "tpu.trace_start"() <{level = 10 : i32, message = "hse,hed->hsd"}> : () -> ()
    %cst_31 = arith.constant dense<0.000000e+00> : vector<4x8x128xf32>
    %49 = tpu.matmul %46, %48, %cst_31 {dimension_numbers = #tpu.dot_dimension_numbers<[2], [1], [1], [2], [0, 0, 0, 1, 1, 2], [0], [0]>} : vector<4x8x32xf32>, vector<4x32x128xf32>, vector<4x8x128xf32> -> vector<4x8x128xf32>
    "tpu.trace_stop"() : () -> ()
    %cst_32 = arith.constant dense<0.000000e+00> : vector<8x128xf32>
    %50 = vector.multi_reduction <add>, %49, %cst_32 [0] : vector<4x8x128xf32> to vector<8x128xf32>
    %51 = arith.addf %3, %50 : vector<8x128xf32>
    %c0_33 = arith.constant 0 : index
    %c0_34 = arith.constant 0 : index
    %c0_35 = arith.constant 0 : index
    %52 = vector.load %arg7[%c0_33, %c0_34, %c0_35] : memref<1x1x128xf32, #tpu.memory_space<vmem>>, vector<1x1x128xf32>
    %53 = vector.shape_cast %52 : vector<1x1x128xf32> to vector<1x128xf32>
    %54 = arith.mulf %51, %51 : vector<8x128xf32>
    %cst_36 = arith.constant dense<0.000000e+00> : vector<8xf32>
    %55 = vector.multi_reduction <add>, %54, %cst_36 [1] : vector<8x128xf32> to vector<8xf32>
    %56 = vector.shape_cast %55 : vector<8xf32> to vector<8x1xf32>
    %cst_37 = arith.constant 1.280000e+02 : f32
    %57 = vector.broadcast %cst_37 : f32 to vector<8x1xf32>
    %58 = arith.divf %56, %57 : vector<8x1xf32>
    %cst_38 = arith.constant 9.99999997E-7 : f32
    %59 = vector.broadcast %cst_38 : f32 to vector<8x1xf32>
    %60 = arith.addf %58, %59 : vector<8x1xf32>
    %61 = math.rsqrt %60 : vector<8x1xf32>
    %62 = vector.broadcast %61 : vector<8x1xf32> to vector<8x128xf32>
    %63 = arith.mulf %51, %62 : vector<8x128xf32>
    %64 = vector.broadcast %53 : vector<1x128xf32> to vector<8x128xf32>
    %65 = arith.mulf %63, %64 : vector<8x128xf32>
    %c0_39 = arith.constant 0 : index
    %c0_40 = arith.constant 0 : index
    %c0_41 = arith.constant 0 : index
    %66 = vector.load %arg8[%c0_39, %c0_40, %c0_41] : memref<1x128x512xf32, #tpu.memory_space<vmem>>, vector<1x128x512xf32>
    %67 = vector.shape_cast %66 : vector<1x128x512xf32> to vector<128x512xf32>
    %cst_42 = arith.constant dense<0.000000e+00> : vector<8x512xf32>
    %68 = tpu.matmul %65, %67, %cst_42 {dimension_numbers = #tpu.dot_dimension_numbers<[1], [0], [0], [1], [0, 0, 1, 1], [], []>} : vector<8x128xf32>, vector<128x512xf32>, vector<8x512xf32> -> vector<8x512xf32>
    %c0_43 = arith.constant 0 : index
    %c0_44 = arith.constant 0 : index
    %c0_45 = arith.constant 0 : index
    %69 = vector.load %arg9[%c0_43, %c0_44, %c0_45] : memref<1x1x512xf32, #tpu.memory_space<vmem>>, vector<1x1x512xf32>
    %70 = vector.shape_cast %69 : vector<1x1x512xf32> to vector<1x512xf32>
    %71 = vector.broadcast %70 : vector<1x512xf32> to vector<8x512xf32>
    %72 = arith.addf %68, %71 : vector<8x512xf32>
    %cst_46 = arith.constant 0.000000e+00 : f32
    %73 = vector.broadcast %cst_46 : f32 to vector<8x512xf32>
    %74 = arith.maximumf %72, %73 : vector<8x512xf32>
    %c0_47 = arith.constant 0 : index
    %c0_48 = arith.constant 0 : index
    %c0_49 = arith.constant 0 : index
    %75 = vector.load %arg10[%c0_47, %c0_48, %c0_49] : memref<1x512x128xf32, #tpu.memory_space<vmem>>, vector<1x512x128xf32>
    %76 = vector.shape_cast %75 : vector<1x512x128xf32> to vector<512x128xf32>
    %cst_50 = arith.constant dense<0.000000e+00> : vector<8x128xf32>
    %77 = tpu.matmul %74, %76, %cst_50 {dimension_numbers = #tpu.dot_dimension_numbers<[1], [0], [0], [1], [0, 0, 1, 1], [], []>} : vector<8x512xf32>, vector<512x128xf32>, vector<8x128xf32> -> vector<8x128xf32>
    %78 = arith.addf %51, %77 : vector<8x128xf32>
    %c0_51 = arith.constant 0 : index
    %c0_52 = arith.constant 0 : index
    %79 = vector.load %arg11[%c0_51, %c0_52] : memref<8x128xf32, #tpu.memory_space<vmem>>, vector<8x128xf32>
    tpu.vector_store %arg11[%c0_51, %c0_52], %78 {strides = array<i32>} : memref<8x128xf32, #tpu.memory_space<vmem>>, vector<8x128xf32>,
    return
  }
  func.func @transform_0(%arg0: i32) -> (i32, i32) {
    %c0_i32 = arith.constant 0 : i32
    %c0_i32_0 = arith.constant 0 : i32
    %c0_i32_1 = arith.constant 0 : i32
    return %c0_i32, %c0_i32_0 : i32, i32
  }
  func.func @transform_1(%arg0: i32) -> (i32, i32, i32, i32) {
    %c0_i32 = arith.constant 0 : i32
    %c0_i32_0 = arith.constant 0 : i32
    %c0_i32_1 = arith.constant 0 : i32
    %c0_i32_2 = arith.constant 0 : i32
    return %arg0, %c0_i32, %c0_i32_0, %c0_i32_1 : i32, i32, i32, i32
  }
  func.func @transform_2(%arg0: i32) -> (i32, i32, i32, i32) {
    %c0_i32 = arith.constant 0 : i32
    %c0_i32_0 = arith.constant 0 : i32
    %c0_i32_1 = arith.constant 0 : i32
    %c0_i32_2 = arith.constant 0 : i32
    return %arg0, %c0_i32, %c0_i32_0, %c0_i32_1 : i32, i32, i32, i32
  }
  func.func @transform_3(%arg0: i32) -> (i32, i32, i32, i32) {
    %c0_i32 = arith.constant 0 : i32
    %c0_i32_0 = arith.constant 0 : i32
    %c0_i32_1 = arith.constant 0 : i32
    %c0_i32_2 = arith.constant 0 : i32
    return %arg0, %c0_i32, %c0_i32_0, %c0_i32_1 : i32, i32, i32, i32
  }
  func.func @transform_4(%arg0: i32) -> (i32, i32, i32, i32) {
    %c0_i32 = arith.constant 0 : i32
    %c0_i32_0 = arith.constant 0 : i32
    %c0_i32_1 = arith.constant 0 : i32
    %c0_i32_2 = arith.constant 0 : i32
    return %arg0, %c0_i32, %c0_i32_0, %c0_i32_1 : i32, i32, i32, i32
  }
  func.func @transform_5(%arg0: i32) -> (i32, i32, i32) {
    %c0_i32 = arith.constant 0 : i32
    %c0_i32_0 = arith.constant 0 : i32
    %c0_i32_1 = arith.constant 0 : i32
    return %arg0, %c0_i32, %c0_i32_0 : i32, i32, i32
  }
  func.func @transform_6(%arg0: i32) -> (i32, i32, i32) {
    %c0_i32 = arith.constant 0 : i32
    %c0_i32_0 = arith.constant 0 : i32
    %c0_i32_1 = arith.constant 0 : i32
    return %arg0, %c0_i32, %c0_i32_0 : i32, i32, i32
  }
  func.func @transform_7(%arg0: i32) -> (i32, i32, i32) {
    %c0_i32 = arith.constant 0 : i32
    %c0_i32_0 = arith.constant 0 : i32
    %c0_i32_1 = arith.constant 0 : i32
    return %arg0, %c0_i32, %c0_i32_0 : i32, i32, i32
  }
  func.func @transform_8(%arg0: i32) -> (i32, i32, i32) {
    %c0_i32 = arith.constant 0 : i32
    %c0_i32_0 = arith.constant 0 : i32
    %c0_i32_1 = arith.constant 0 : i32
    return %arg0, %c0_i32, %c0_i32_0 : i32, i32, i32
  }
  func.func @transform_9(%arg0: i32) -> (i32, i32, i32) {
    %c0_i32 = arith.constant 0 : i32
    %c0_i32_0 = arith.constant 0 : i32
    %c0_i32_1 = arith.constant 0 : i32
    return %arg0, %c0_i32, %c0_i32_0 : i32, i32, i32
  }
  func.func @transform_10(%arg0: i32) -> (i32, i32) {
    %c0_i32 = arith.constant 0 : i32
    %c0_i32_0 = arith.constant 0 : i32
    %c0_i32_1 = arith.constant 0 : i32
    return %c0_i32, %c0_i32_0 : i32, i32
  }
}

module attributes {stable_mosaic.version = 11 : i64} {
  func.func @final_kernel(%arg0: i32, %arg1: memref<8x128xf32, #tpu.memory_space<vmem>>, %arg2: memref<1x128xf32, #tpu.memory_space<vmem>>, %arg3: memref<128x128xf32, #tpu.memory_space<vmem>>, %arg4: memref<1x128xf32, #tpu.memory_space<vmem>>, %arg5: memref<8x128xf32, #tpu.memory_space<vmem>>) attributes {dimension_semantics = [#tpu.dimension_semantics<parallel>], iteration_bounds = array<i64: 2>, scalar_prefetch = 0 : i64, scratch_operands = 0 : i64, tpu.core_type = #tpu.core_type<tc>, window_params = [{pipeline_mode = #tpu.pipeline_mode<synchronous>, transform_indices = @transform_0, window_bounds = array<i64: 8, 128>}, {pipeline_mode = #tpu.pipeline_mode<synchronous>, transform_indices = @transform_1, window_bounds = array<i64: 1, 128>}, {transform_indices = @transform_2, window_bounds = array<i64: 128, 128>}, {transform_indices = @transform_3, window_bounds = array<i64: 1, 128>}, {transform_indices = @transform_4, window_bounds = array<i64: 8, 128>}]} {
    %c0 = arith.constant 0 : index
    %c0_0 = arith.constant 0 : index
    %0 = vector.load %arg1[%c0, %c0_0] : memref<8x128xf32, #tpu.memory_space<vmem>>, vector<8x128xf32>
    %c0_1 = arith.constant 0 : index
    %c0_2 = arith.constant 0 : index
    %1 = vector.load %arg2[%c0_1, %c0_2] : memref<1x128xf32, #tpu.memory_space<vmem>>, vector<1x128xf32>
    %2 = arith.mulf %0, %0 : vector<8x128xf32>
    %cst = arith.constant dense<0.000000e+00> : vector<8xf32>
    %3 = vector.multi_reduction <add>, %2, %cst [1] : vector<8x128xf32> to vector<8xf32>
    %4 = vector.shape_cast %3 : vector<8xf32> to vector<8x1xf32>
    %cst_3 = arith.constant 1.280000e+02 : f32
    %5 = vector.broadcast %cst_3 : f32 to vector<8x1xf32>
    %6 = arith.divf %4, %5 : vector<8x1xf32>
    %cst_4 = arith.constant 9.99999997E-7 : f32
    %7 = vector.broadcast %cst_4 : f32 to vector<8x1xf32>
    %8 = arith.addf %6, %7 : vector<8x1xf32>
    %9 = math.rsqrt %8 : vector<8x1xf32>
    %10 = vector.broadcast %9 : vector<8x1xf32> to vector<8x128xf32>
    %11 = arith.mulf %0, %10 : vector<8x128xf32>
    %12 = vector.broadcast %1 : vector<1x128xf32> to vector<8x128xf32>
    %13 = arith.mulf %11, %12 : vector<8x128xf32>
    %c0_5 = arith.constant 0 : index
    %c0_6 = arith.constant 0 : index
    %14 = vector.load %arg3[%c0_5, %c0_6] : memref<128x128xf32, #tpu.memory_space<vmem>>, vector<128x128xf32>
    %cst_7 = arith.constant dense<0.000000e+00> : vector<8x128xf32>
    %15 = tpu.matmul %13, %14, %cst_7 {dimension_numbers = #tpu.dot_dimension_numbers<[1], [0], [0], [1], [0, 0, 1, 1], [], []>} : vector<8x128xf32>, vector<128x128xf32>, vector<8x128xf32> -> vector<8x128xf32>
    %c0_8 = arith.constant 0 : index
    %c0_9 = arith.constant 0 : index
    %16 = vector.load %arg4[%c0_8, %c0_9] : memref<1x128xf32, #tpu.memory_space<vmem>>, vector<1x128xf32>
    %17 = vector.broadcast %16 : vector<1x128xf32> to vector<8x128xf32>
    %18 = arith.addf %15, %17 : vector<8x128xf32>
    %c0_10 = arith.constant 0 : index
    %c0_11 = arith.constant 0 : index
    %19 = vector.load %arg5[%c0_10, %c0_11] : memref<8x128xf32, #tpu.memory_space<vmem>>, vector<8x128xf32>
    tpu.vector_store %arg5[%c0_10, %c0_11], %18 {strides = array<i32>} : memref<8x128xf32, #tpu.memory_space<vmem>>, vector<8x128xf32>,
    return
  }
  func.func @transform_0(%arg0: i32) -> (i32, i32) {
    %c0_i32 = arith.constant 0 : i32
    %c0_i32_0 = arith.constant 0 : i32
    %c0_i32_1 = arith.constant 0 : i32
    return %c0_i32, %c0_i32_0 : i32, i32
  }
  func.func @transform_1(%arg0: i32) -> (i32, i32) {
    %c0_i32 = arith.constant 0 : i32
    %c0_i32_0 = arith.constant 0 : i32
    %c0_i32_1 = arith.constant 0 : i32
    return %c0_i32, %c0_i32_0 : i32, i32
  }
  func.func @transform_2(%arg0: i32) -> (i32, i32) {
    %c0_i32 = arith.constant 0 : i32
    %c0_i32_0 = arith.constant 0 : i32
    return %c0_i32, %arg0 : i32, i32
  }
  func.func @transform_3(%arg0: i32) -> (i32, i32) {
    %c0_i32 = arith.constant 0 : i32
    %c0_i32_0 = arith.constant 0 : i32
    return %c0_i32, %arg0 : i32, i32
  }
  func.func @transform_4(%arg0: i32) -> (i32, i32) {
    %c0_i32 = arith.constant 0 : i32
    %c0_i32_0 = arith.constant 0 : i32
    return %c0_i32, %arg0 : i32, i32
  }
}

</mosaic_0001>

<llo_original>
// kernel: transformer_forward.3
$region0: #{transformer_forward.3}
  #allocation0 [shape = 'u32[]', space=smem, size = 0x4, offset = 0x4, fixed_abs, tag = 'smem constant byte address 0x4 - core index']
  #allocation1 [shape = 'u32[144,128]{1,0:T(1,128)}', space=vmem, size = 0x12000, scoped, tag = 'internal scratch']
  %s0 = inlined_call_operand.vmem [shape: f32[8,128], index: 0, kind: input, shape index: {}]
  %s1 = inlined_call_operand.vmem [shape: f32[1,128], index: 1, kind: input, shape index: {}]
  %s2 = inlined_call_operand.vmem [shape: f32[128,256], index: 2, kind: input, shape index: {}]
  %s3 = inlined_call_operand.vmem [shape: f32[1,256], index: 3, kind: input, shape index: {}]
  %s4 = inlined_call_operand.hbm [shape: f32[8,256], index: 4, kind: output, shape index: {}]
  %s5 = sld [smem:[#allocation0]]
  $region87: #{transformer_forward.3} parent=0
    _
  %s7 = ssub.s32 1, %s5
  %s8 = scalar_select 0, %s7, %s5
  $region1: #{transformer_forward.3} parent=0
    #allocation2 [shape = 'u8[131072]{0}', space=vmem, size = 0x20000, scoped, tag = 'input window, operand 2']
    #allocation3 [shape = 'u8[8192]{0}', space=vmem, size = 0x2000, scoped, tag = 'output window, operand 0']
    #allocation4 [shape = 's32[2]{0}', space=sflag, size = 0x8, scoped, tag = 'scoped memory for transformer_forward.3']
    %9 = vsyncpa [#allocation4], 0
    %s10 = scalar_lea.sflag [#allocation4], 1
    %11 = vsyncpa %s10, 0
    loop: start=0, step=1, limit=4
    $region2: #{transformer_forward.3} parent=1 // loop_pre_header
      _
    $region3: #{transformer_forward.3} parent=1 // loop_header
      %s13 = sphi 0, %s17
      %p14 = scmp.ge.s32.totalorder %s13, 4
      %s21 = sphi 0, %s21
      %s23 = sphi 0, %s21
      %s24 = sphi 0, %s23
      %s38 = sphi 0, %s24
      %s42 = sphi 0, %s42
      %s44 = sphi 0, %s42
      %s45 = sphi 0, %s44
      %s59 = sphi 0, %s45
      %s65 = sphi 0, %s67
      %s68 = sphi 0, %s65
      %s69 = sphi 0, %s68
      %s85 = sphi 0, %s69
      %s91 = sphi 0, %s93
      %s94 = sphi 0, %s91
      %s95 = sphi 0, %s94
      %s111 = sphi 0, %s95
      %s117 = sphi 0, %s119
      %s120 = sphi 0, %s117
      %s121 = sphi 0, %s120
      %s137 = sphi 0, %s121
    $region4: #{transformer_forward.3} parent=1 // loop_header_branch
      %16 = sbr.rel (%p14) target = $region8
    $region5: #{transformer_forward.3} parent=1 // loop_body
      %s18 = ssub.s32 %s13, 1
      %s19 = ssub.s32 %s13, 2
      %s20 = sadd.s32 %s13, 1
      %s22 = sadd.s32 %s21, 1
      %p25 = scmp.eq.s32.totalorder %s13, 1
      %p26 = scmp.ne.s32.totalorder %s21, %s23
      %p27 = scmp.eq.s32.totalorder %s13, 0
      %p28 = por %p26, %p27
      %p29 = scmp.ne.s32.totalorder %s21, %s23
      %p30 = scmp.eq.s32.totalorder %s18, 1
      %p31 = por %p29, %p30
      %p32 = scmp.ne.s32.totalorder %s23, %s24
      %p33 = scmp.eq.s32.totalorder %s18, 0
      %p34 = por %p32, %p33
      %p35 = scmp.ne.s32.totalorder %s23, %s24
      %p36 = scmp.eq.s32.totalorder %s19, 1
      %p37 = por %p35, %p36
      %p39 = scmp.ne.s32.totalorder %s24, %s38
      %p40 = scmp.eq.s32.totalorder %s19, 0
      %p41 = por %p39, %p40
      %s43 = sadd.s32 %s42, 1
      %p46 = scmp.eq.s32.totalorder %s13, 1
      %p47 = scmp.ne.s32.totalorder %s42, %s44
      %p48 = scmp.eq.s32.totalorder %s13, 0
      %p49 = por %p47, %p48
      %p50 = scmp.ne.s32.totalorder %s42, %s44
      %p51 = scmp.eq.s32.totalorder %s18, 1
      %p52 = por %p50, %p51
      %p53 = scmp.ne.s32.totalorder %s44, %s45
      %p54 = scmp.eq.s32.totalorder %s18, 0
      %p55 = por %p53, %p54
      %p56 = scmp.ne.s32.totalorder %s44, %s45
      %p57 = scmp.eq.s32.totalorder %s19, 1
      %p58 = por %p56, %p57
      %p60 = scmp.ne.s32.totalorder %s45, %s59
      %p61 = scmp.eq.s32.totalorder %s19, 0
      %p62 = por %p60, %p61
      %s63 = ssub.s32 %s13, %s20
      %p64 = scmp.eq.s32.totalorder %s63, 0
      %s66 = sadd.s32 %s65, 1
      %s67 = scalar_select %p64, %s65, %s66
      %p70 = pneg %p64
      %p71 = scmp.eq.s32.totalorder %s13, 1
      %p72 = por %p70, %p71
      %p73 = scmp.ne.s32.totalorder %s65, %s68
      %p74 = scmp.eq.s32.totalorder %s13, 0
      %p75 = por %p73, %p74
      %p76 = scmp.ne.s32.totalorder %s65, %s68
      %p77 = scmp.eq.s32.totalorder %s18, 1
      %p78 = por %p76, %p77
      %p79 = scmp.ne.s32.totalorder %s68, %s69
      %p80 = scmp.eq.s32.totalorder %s18, 0
      %p81 = por %p79, %p80
      %p82 = scmp.ne.s32.totalorder %s68, %s69
      %p83 = scmp.eq.s32.totalorder %s19, 1
      %p84 = por %p82, %p83
      %p86 = scmp.ne.s32.totalorder %s69, %s85
      %p87 = scmp.eq.s32.totalorder %s19, 0
      %p88 = por %p86, %p87
      %s89 = ssub.s32 %s13, %s20
      %p90 = scmp.eq.s32.totalorder %s89, 0
      %s92 = sadd.s32 %s91, 1
      %s93 = scalar_select %p90, %s91, %s92
      %p96 = pneg %p90
      %p97 = scmp.eq.s32.totalorder %s13, 1
      %p98 = por %p96, %p97
      %p99 = scmp.ne.s32.totalorder %s91, %s94
      %p100 = scmp.eq.s32.totalorder %s13, 0
      %p101 = por %p99, %p100
      %p102 = scmp.ne.s32.totalorder %s91, %s94
      %p103 = scmp.eq.s32.totalorder %s18, 1
      %p104 = por %p102, %p103
      %p105 = scmp.ne.s32.totalorder %s94, %s95
      %p106 = scmp.eq.s32.totalorder %s18, 0
      %p107 = por %p105, %p106
      %p108 = scmp.ne.s32.totalorder %s94, %s95
      %p109 = scmp.eq.s32.totalorder %s19, 1
      %p110 = por %p108, %p109
      %p112 = scmp.ne.s32.totalorder %s95, %s111
      %p113 = scmp.eq.s32.totalorder %s19, 0
      %p114 = por %p112, %p113
      %s115 = ssub.s32 %s13, %s20
      %p116 = scmp.eq.s32.totalorder %s115, 0
      %s118 = sadd.s32 %s117, 1
      %s119 = scalar_select %p116, %s117, %s118
      %p122 = pneg %p116
      %p123 = scmp.eq.s32.totalorder %s13, 1
      %p124 = por %p122, %p123
      %p125 = scmp.ne.s32.totalorder %s117, %s120
      %p126 = scmp.eq.s32.totalorder %s13, 0
      %p127 = por %p125, %p126
      %p128 = scmp.ne.s32.totalorder %s117, %s120
      %p129 = scmp.eq.s32.totalorder %s18, 1
      %p130 = por %p128, %p129
      %p131 = scmp.ne.s32.totalorder %s120, %s121
      %p132 = scmp.eq.s32.totalorder %s18, 0
      %p133 = por %p131, %p132
      %p134 = scmp.ne.s32.totalorder %s120, %s121
      %p135 = scmp.eq.s32.totalorder %s19, 1
      %p136 = por %p134, %p135
      %p138 = scmp.ne.s32.totalorder %s121, %s137
      %p139 = scmp.eq.s32.totalorder %s19, 0
      %p140 = por %p138, %p139
      %p141 = scmp.le.s32.totalorder 1, %s13
      %p142 = scmp.lt.s32.totalorder %s13, 3
      %p143 = pnand %p141, %p142
      %p144 = pneg %p143
      // Predicated region
      $region9: #{transformer_forward.3} parent=5 // pred_check
        _
      $region10: #{transformer_forward.3} parent=5 // pred_check_branch
        %146 = sbr.rel (%p143) target = $region12
      $region11: #{transformer_forward.3} parent=5 // pred_region
        %s147 = ssub.s32 %s13, 1
        // Predicated region
        $region13: #{transformer_forward.3} parent=11 // pred_check
          %p148 = pneg %p34
        $region14: #{transformer_forward.3} parent=11 // pred_check_branch
          %150 = sbr.rel (%p148) target = $region16
        $region15: #{transformer_forward.3} parent=11 // pred_region
          _
        $region16: #{transformer_forward.3} parent=11 // pred_fallthru
          _
        // Predicated region
        $region17: #{transformer_forward.3} parent=11 // pred_check
          %p151 = pneg %p55
        $region18: #{transformer_forward.3} parent=11 // pred_check_branch
          %153 = sbr.rel (%p151) target = $region20
        $region19: #{transformer_forward.3} parent=11 // pred_region
          _
        $region20: #{transformer_forward.3} parent=11 // pred_fallthru
          _
      $region12: #{transformer_forward.3} parent=5 // pred_fallthru
        _
      %p154 = scmp.lt.s32.totalorder %s13, 2
      // Predicated region
      $region21: #{transformer_forward.3} parent=5 // pred_check
        %p155 = pneg %p154
      $region22: #{transformer_forward.3} parent=5 // pred_check_branch
        %157 = sbr.rel (%p155) target = $region24
      $region23: #{transformer_forward.3} parent=5 // pred_region
        // Predicated region
        $region25: #{transformer_forward.3} parent=23 // pred_check
          %p158 = pneg %p75
        $region26: #{transformer_forward.3} parent=23 // pred_check_branch
          %160 = sbr.rel (%p158) target = $region28
        $region27: #{transformer_forward.3} parent=23 // pred_region
          %s161 = sand.u32 %s65, 1
          %s162 = sand.u32 %s65, 1
          %s163 = smul.addr %s162, 128
          %s164 = scalar_lea.vmem [#allocation2], %s163
          %s165 = smul.addr %s13, 8
          %s166 = scalar_lea.vmem %s2, %s165
          // Predicated region
          $region29: #{transformer_forward.3} parent=27 // pred_check
            _
          $region30: #{transformer_forward.3} parent=27 // pred_check_branch
            %168 = sbr.rel (0) target = $region32
          $region31: #{transformer_forward.3} parent=27 // pred_region
            // Predicated region
            $region33: #{transformer_forward.3} parent=31 // pred_check
              _
            $region34: #{transformer_forward.3} parent=31 // pred_check_branch
              %170 = sbr.rel (0) target = $region36
            $region35: #{transformer_forward.3} parent=31 // pred_region
              // Predicated region
              $region48: #{transformer_forward.3} parent=35 // pred_check
                _
              $region49: #{transformer_forward.3} parent=35 // pred_check_branch
                %216 = sbr.rel (0) target = $region51
              $region50: #{transformer_forward.3} parent=35 // pred_region
                loop: start=0, step=1, limit=1
                $region52: #{transformer_forward.3} parent=50 // loop_pre_header
                  _
                $region53: #{transformer_forward.3} parent=50 // loop_header
                  %s218 = sphi 0, %s222
                  %p219 = scmp.ge.s32.totalorder %s218, 1
                  %s223 = sphi %s166, %s166
                  %s224 = sphi %s164, %s164
                $region54: #{transformer_forward.3} parent=50 // loop_header_branch
                  %221 = sbr.rel (%p219) target = $region58
                $region55: #{transformer_forward.3} parent=50 // loop_body
                  %v225 = vld [vmem:[%s223] sm:$0xff]
                  %226 = vst [vmem:[%s224] sm:$0xff] %v225
                  %v227 = vld [vmem:[%s223 + $0x10] sm:$0xff]
                  %228 = vst [vmem:[%s224 + $0x8] sm:$0xff] %v227
                  %v229 = vld [vmem:[%s223 + $0x20] sm:$0xff]
                  %230 = vst [vmem:[%s224 + $0x10] sm:$0xff] %v229
                  %v231 = vld [vmem:[%s223 + $0x30] sm:$0xff]
                  %232 = vst [vmem:[%s224 + $0x18] sm:$0xff] %v231
                  %v233 = vld [vmem:[%s223 + $0x40] sm:$0xff]
                  %234 = vst [vmem:[%s224 + $0x20] sm:$0xff] %v233
                  %v235 = vld [vmem:[%s223 + $0x50] sm:$0xff]
                  %236 = vst [vmem:[%s224 + $0x28] sm:$0xff] %v235
                  %v237 = vld [vmem:[%s223 + $0x60] sm:$0xff]
                  %238 = vst [vmem:[%s224 + $0x30] sm:$0xff] %v237
                  %v239 = vld [vmem:[%s223 + $0x70] sm:$0xff]
                  %240 = vst [vmem:[%s224 + $0x38] sm:$0xff] %v239
                  %v241 = vld [vmem:[%s223 + $0x80] sm:$0xff]
                  %242 = vst [vmem:[%s224 + $0x40] sm:$0xff] %v241
                  %v243 = vld [vmem:[%s223 + $0x90] sm:$0xff]
                  %244 = vst [vmem:[%s224 + $0x48] sm:$0xff] %v243
                  %v245 = vld [vmem:[%s223 + $0xa0] sm:$0xff]
                  %246 = vst [vmem:[%s224 + $0x50] sm:$0xff] %v245
                  %v247 = vld [vmem:[%s223 + $0xb0] sm:$0xff]
                  %248 = vst [vmem:[%s224 + $0x58] sm:$0xff] %v247
                  %v249 = vld [vmem:[%s223 + $0xc0] sm:$0xff]
                  %250 = vst [vmem:[%s224 + $0x60] sm:$0xff] %v249
                  %v251 = vld [vmem:[%s223 + $0xd0] sm:$0xff]
                  %252 = vst [vmem:[%s224 + $0x68] sm:$0xff] %v251
                  %v253 = vld [vmem:[%s223 + $0xe0] sm:$0xff]
                  %254 = vst [vmem:[%s224 + $0x70] sm:$0xff] %v253
                  %v255 = vld [vmem:[%s223 + $0xf0] sm:$0xff]
                  %256 = vst [vmem:[%s224 + $0x78] sm:$0xff] %v255
                $region56: #{transformer_forward.3} parent=50 // loop_footer
                  %s222 = sadd.s32 1, %s218
                $region57: #{transformer_forward.3} parent=50 // loop_footer_branch
                  %217 = sbr.rel target = $region53
                $region58: #{transformer_forward.3} parent=50 // loop_exit
                  _
              $region51: #{transformer_forward.3} parent=35 // pred_fallthru
                _
              // Predicated region
              $region59: #{transformer_forward.3} parent=35 // pred_check
                _
              $region60: #{transformer_forward.3} parent=35 // pred_check_branch
                %258 = sbr.rel target = $region62
              $region61: #{transformer_forward.3} parent=35 // pred_region
                _
              $region62: #{transformer_forward.3} parent=35 // pred_fallthru
                _
            $region36: #{transformer_forward.3} parent=31 // pred_fallthru
              _
            // Predicated region
            $region37: #{transformer_forward.3} parent=31 // pred_check
              _
            $region38: #{transformer_forward.3} parent=31 // pred_check_branch
              %172 = sbr.rel target = $region40
            $region39: #{transformer_forward.3} parent=31 // pred_region
              %s174 = ssub.s32 256, 1
              loop: start=0, step=1, limit=1
              $region41: #{transformer_forward.3} parent=39 // loop_pre_header
                _
              $region42: #{transformer_forward.3} parent=39 // loop_header
                %s176 = sphi 0, %s180
                %p177 = scmp.ge.s32.totalorder %s176, 1
                %s181 = sphi %s166, %s166
                %s182 = sphi %s164, %s164
              $region43: #{transformer_forward.3} parent=39 // loop_header_branch
                %179 = sbr.rel (%p177) target = $region47
              $region44: #{transformer_forward.3} parent=39 // loop_body
                %v183 = vld [vmem:[%s181] sm:%s174]
                %184 = vst [vmem:[%s182] sm:%s174] %v183
                %v185 = vld [vmem:[%s181 + $0x10] sm:%s174]
                %186 = vst [vmem:[%s182 + $0x8] sm:%s174] %v185
                %v187 = vld [vmem:[%s181 + $0x20] sm:%s174]
                %188 = vst [vmem:[%s182 + $0x10] sm:%s174] %v187
                %v189 = vld [vmem:[%s181 + $0x30] sm:%s174]
                %190 = vst [vmem:[%s182 + $0x18] sm:%s174] %v189
                %v191 = vld [vmem:[%s181 + $0x40] sm:%s174]
                %192 = vst [vmem:[%s182 + $0x20] sm:%s174] %v191
                %v193 = vld [vmem:[%s181 + $0x50] sm:%s174]
                %194 = vst [vmem:[%s182 + $0x28] sm:%s174] %v193
                %v195 = vld [vmem:[%s181 + $0x60] sm:%s174]
                %196 = vst [vmem:[%s182 + $0x30] sm:%s174] %v195
                %v197 = vld [vmem:[%s181 + $0x70] sm:%s174]
                %198 = vst [vmem:[%s182 + $0x38] sm:%s174] %v197
                %v199 = vld [vmem:[%s181 + $0x80] sm:%s174]
                %200 = vst [vmem:[%s182 + $0x40] sm:%s174] %v199
                %v201 = vld [vmem:[%s181 + $0x90] sm:%s174]
                %202 = vst [vmem:[%s182 + $0x48] sm:%s174] %v201
                %v203 = vld [vmem:[%s181 + $0xa0] sm:%s174]
                %204 = vst [vmem:[%s182 + $0x50] sm:%s174] %v203
                %v205 = vld [vmem:[%s181 + $0xb0] sm:%s174]
                %206 = vst [vmem:[%s182 + $0x58] sm:%s174] %v205
                %v207 = vld [vmem:[%s181 + $0xc0] sm:%s174]
                %208 = vst [vmem:[%s182 + $0x60] sm:%s174] %v207
                %v209 = vld [vmem:[%s181 + $0xd0] sm:%s174]
                %210 = vst [vmem:[%s182 + $0x68] sm:%s174] %v209
                %v211 = vld [vmem:[%s181 + $0xe0] sm:%s174]
                %212 = vst [vmem:[%s182 + $0x70] sm:%s174] %v211
                %v213 = vld [vmem:[%s181 + $0xf0] sm:%s174]
                %214 = vst [vmem:[%s182 + $0x78] sm:%s174] %v213
              $region45: #{transformer_forward.3} parent=39 // loop_footer
                %s180 = sadd.s32 1, %s176
              $region46: #{transformer_forward.3} parent=39 // loop_footer_branch
                %175 = sbr.rel target = $region42
              $region47: #{transformer_forward.3} parent=39 // loop_exit
                _
            $region40: #{transformer_forward.3} parent=31 // pred_fallthru
              _
          $region32: #{transformer_forward.3} parent=27 // pred_fallthru
            _
          %259 = vnop
        $region28: #{transformer_forward.3} parent=23 // pred_fallthru
          _
        // Predicated region
        $region63: #{transformer_forward.3} parent=23 // pred_check
          %p260 = pneg %p101
        $region64: #{transformer_forward.3} parent=23 // pred_check_branch
          %262 = sbr.rel (%p260) target = $region66
        $region65: #{transformer_forward.3} parent=23 // pred_region
          %p263 = scmp.lt.s32.totalorder %s13, 1
          %s264 = scalar_select %p263, %s13, 1
          %s265 = scalar_lea.vmem %s3, %s264
        $region66: #{transformer_forward.3} parent=23 // pred_fallthru
          _
      $region24: #{transformer_forward.3} parent=5 // pred_fallthru
        _
      %p266 = scmp.le.s32.totalorder 1, %s13
      %p267 = scmp.lt.s32.totalorder %s13, 3
      %p268 = pnand %p266, %p267
      %p269 = pneg %p268
      // Predicated region
      $region67: #{transformer_forward.3} parent=5 // pred_check
        _
      $region68: #{transformer_forward.3} parent=5 // pred_check_branch
        %271 = sbr.rel (%p268) target = $region70
      $region69: #{transformer_forward.3} parent=5 // pred_region
        %s272 = ssub.s32 %s13, 1
        %s273 = sand.u32 %s68, 1
        %s274 = sand.u32 %s68, 1
        %s275 = smul.addr %s274, 128
        %s276 = scalar_lea.vmem [#allocation2], %s275
        // Predicated region
        $region71: #{transformer_forward.3} parent=69 // pred_check
          %p277 = pneg %p81
        $region72: #{transformer_forward.3} parent=69 // pred_check_branch
          %279 = sbr.rel (%p277) target = $region74
        $region73: #{transformer_forward.3} parent=69 // pred_region
          _
        $region74: #{transformer_forward.3} parent=69 // pred_fallthru
          _
        %p280 = pneg %p34
        %p281 = pneg %p31
        %p282 = pneg %p55
        %p283 = pneg %p52
        %s284 = sand.u32 %s68, 1
        %s285 = sand.u32 %s68, 1
        %s286 = smul.addr %s285, 128
        %s287 = scalar_lea.vmem [#allocation2], %s286
        %p288 = pneg %p81
        %p289 = pneg %p78
        %p290 = scmp.lt.s32.totalorder %s18, 1
        %s291 = scalar_select %p290, %s18, 1
        %s292 = scalar_lea.vmem %s3, %s291
        %p293 = pneg %p107
        %p294 = pneg %p104
        %p295 = pneg %p133
        %p296 = pneg %p130
        %s297 = sand.u32 %s120, 1
        %s298 = scalar_lea.sflag [#allocation4], %s297
        %s299 = sand.u32 %s120, 1
        %s300 = smul.addr %s299, 8
        %s301 = scalar_lea.vmem [#allocation3], %s300
        %p302 = scmp.lt.s32.totalorder %s18, 1
        %s303 = scalar_select %p302, %s18, 1
        %s304 = scalar_lea.vmem %s3, %s303
        %v305 = vld [vmem:[%s0] sm:$0xff]
        %v306 = vld [vmem:[%s1] sm:$0x1]
        %v307 = vmul.f32 %v305, %v305
        %308 = vadd.xlane.f32.xlu0 %v307
        %v309 = vpop.xlane.xlu0 %308
        %v310 = vrcp.pop 128.0
        %v311 = vmul.f32 %v309, %v310
        %v312 = vadd.f32 %v311, 1e-06
        %v313 = vrsqrt.pop %v312
        %v314 = vmul.f32 %v305, %v313
        %v316 = vlaneseq
        %v317 = vshrl.u32 %v316, 7
        %v318 = vsub.s32 0, %v317
        %v319 = vrot.slane %v306, %v318
        %v321 = vmul.f32 %v314, %v319
        %v322 = vld [vmem:[%s276] sm:$0xff]
        %v323 = vld [vmem:[%s276 + $0x8] sm:$0xff]
        %v324 = vld [vmem:[%s276 + $0x10] sm:$0xff]
        %v325 = vld [vmem:[%s276 + $0x18] sm:$0xff]
        %v326 = vld [vmem:[%s276 + $0x20] sm:$0xff]
        %v327 = vld [vmem:[%s276 + $0x28] sm:$0xff]
        %v328 = vld [vmem:[%s276 + $0x30] sm:$0xff]
        %v329 = vld [vmem:[%s276 + $0x38] sm:$0xff]
        %v330 = vld [vmem:[%s276 + $0x40] sm:$0xff]
        %v331 = vld [vmem:[%s276 + $0x48] sm:$0xff]
        %v332 = vld [vmem:[%s276 + $0x50] sm:$0xff]
        %v333 = vld [vmem:[%s276 + $0x58] sm:$0xff]
        %v334 = vld [vmem:[%s276 + $0x60] sm:$0xff]
        %v335 = vld [vmem:[%s276 + $0x68] sm:$0xff]
        %v336 = vld [vmem:[%s276 + $0x70] sm:$0xff]
        %v337 = vld [vmem:[%s276 + $0x78] sm:$0xff]
        %v338 = vld [vmem:[%s304] sm:$0x1]
        %v340 = vlaneseq
        %v341 = vshrl.u32 %v340, 7
        %v342 = vsub.s32 0, %v341
        %v343 = vrot.slane %v338, %v342
        %345 = vmatprep.subr.mxu0 0.0
        %346 = vmatpush1.msra.mxu0 %v337
        %347 = vmatprep.subr.mxu0 0.0
        %348 = vmatpush1.msra.mxu0 %v336
        %349 = vmatprep.subr.mxu0 0.0
        %350 = vmatpush1.msra.mxu0 %v335
        %351 = vmatprep.subr.mxu0 0.0
        %352 = vmatpush1.msra.mxu0 %v334
        %353 = vmatprep.subr.mxu0 0.0
        %354 = vmatpush1.msra.mxu0 %v333
        %355 = vmatprep.subr.mxu0 0.0
        %356 = vmatpush1.msra.mxu0 %v332
        %357 = vmatprep.subr.mxu0 0.0
        %358 = vmatpush1.msra.mxu0 %v331
        %359 = vmatprep.subr.mxu0 0.0
        %360 = vmatpush1.msra.mxu0 %v330
        %361 = vmatprep.subr.mxu0 0.0
        %362 = vmatpush1.msra.mxu0 %v329
        %363 = vmatprep.subr.mxu0 0.0
        %364 = vmatpush1.msra.mxu0 %v328
        %365 = vmatprep.subr.mxu0 0.0
        %366 = vmatpush1.msra.mxu0 %v327
        %367 = vmatprep.subr.mxu0 0.0
        %368 = vmatpush1.msra.mxu0 %v326
        %369 = vmatprep.subr.mxu0 0.0
        %370 = vmatpush1.msra.mxu0 %v325
        %371 = vmatprep.subr.mxu0 0.0
        %372 = vmatpush1.msra.mxu0 %v324
        %373 = vmatprep.subr.mxu0 0.0
        %374 = vmatpush1.msra.mxu0 %v323
        %375 = vmatprep.subr.mxu0 0.0
        %376 = vmatpush1.msra.mxu0 %v322
        %377 = vmatprep.subr.mxu0 0.0
        %378 = vmatpush2.msra.mxu0 0.0
        %379 = vmatprep.subr.mxu0 0.0
        %380 = vmatpush2.msra.mxu0 0.0
        %381 = vmatprep.subr.mxu0 0.0
        %382 = vmatpush2.msra.mxu0 0.0
        %383 = vmatprep.subr.mxu0 0.0
        %384 = vmatpush2.msra.mxu0 0.0
        %385 = vmatprep.subr.mxu0 0.0
        %386 = vmatpush2.msra.mxu0 0.0
        %387 = vmatprep.subr.mxu0 0.0
        %388 = vmatpush2.msra.mxu0 0.0
        %389 = vmatprep.subr.mxu0 0.0
        %390 = vmatpush2.msra.mxu0 0.0
        %391 = vmatprep.subr.mxu0 0.0
        %392 = vmatpush2.msra.mxu0 0.0
        %393 = vmatprep.subr.mxu0 0.0
        %394 = vmatpush2.msra.mxu0 0.0
        %395 = vmatprep.subr.mxu0 0.0
        %396 = vmatpush2.msra.mxu0 0.0
        %397 = vmatprep.subr.mxu0 0.0
        %398 = vmatpush2.msra.mxu0 0.0
        %399 = vmatprep.subr.mxu0 0.0
        %400 = vmatpush2.msra.mxu0 0.0
        %401 = vmatprep.subr.mxu0 0.0
        %402 = vmatpush2.msra.mxu0 0.0
        %403 = vmatprep.subr.mxu0 0.0
        %404 = vmatpush2.msra.mxu0 0.0
        %405 = vmatprep.subr.mxu0 0.0
        %406 = vmatpush2.msra.mxu0 0.0
        %407 = vmatprep.subr.mxu0 0.0
        %408 = vmatpush2.msra.mxu0 0.0
        %409 = vmatprep.mubr.f32.mxu0 0.0
        %410 = vmatmul.mubr.f32.gmra.mxu0 %v321
        %v411 = vpop.f32.mrf.mxu0
        %v412 = vadd.f32 %v343, %v411
        %v413 = vpop.f32.mrf.mxu0
        %414 = vdwg.mxu0
        %415 = vst [vmem:[%s301] sm:$0xff] %v412
        %s416 = sand.u32 %s120, 1
        %s417 = scalar_lea.sflag [#allocation4], %s416
        %s418 = sand.u32 %s120, 1
        %s419 = smul.addr %s418, 8
        %s420 = scalar_lea.vmem [#allocation3], %s419
        // Predicated region
        $region75: #{transformer_forward.3} parent=69 // pred_check
          %p421 = pneg %p130
        $region76: #{transformer_forward.3} parent=69 // pred_check_branch
          %423 = sbr.rel (%p421) target = $region78
        $region77: #{transformer_forward.3} parent=69 // pred_region
          %s425 = ssub.s32 128, 128
          %426 = vsyncadd %s417, %s425
          %s427 = smul.addr %s18, 128
          %s428 = scalar_lea.hbm %s4, %s427
          %s430 = sshll.u32 %s420, 4
          %s431 = int_to_ptr.vmem [resolvable:$true] %s430
          %433 = dma.vmem_to_hbm [thread:$0]  %s431, 128, %s428, %s417
        $region78: #{transformer_forward.3} parent=69 // pred_fallthru
          _
      $region70: #{transformer_forward.3} parent=5 // pred_fallthru
        _
      %p434 = scmp.le.s32.totalorder 2, %s13
      // Predicated region
      $region79: #{transformer_forward.3} parent=5 // pred_check
        %p435 = pneg %p434
      $region80: #{transformer_forward.3} parent=5 // pred_check_branch
        %437 = sbr.rel (%p435) target = $region82
      $region81: #{transformer_forward.3} parent=5 // pred_region
        %s438 = ssub.s32 %s13, 2
        // Predicated region
        $region83: #{transformer_forward.3} parent=81 // pred_check
          %p439 = pneg %p136
        $region84: #{transformer_forward.3} parent=81 // pred_check_branch
          %441 = sbr.rel (%p439) target = $region86
        $region85: #{transformer_forward.3} parent=81 // pred_region
          %s442 = sand.u32 %s121, 1
          %s443 = scalar_lea.sflag [#allocation4], %s442
          %s444 = sand.u32 %s121, 1
          %s445 = smul.addr %s444, 8
          %s446 = scalar_lea.vmem [#allocation3], %s445
          %447 = dma.done %s443, 128
        $region86: #{transformer_forward.3} parent=81 // pred_fallthru
          _
      $region82: #{transformer_forward.3} parent=5 // pred_fallthru
        _
    $region6: #{transformer_forward.3} parent=1 // loop_footer
      %s17 = sadd.s32 1, %s13
    $region7: #{transformer_forward.3} parent=1 // loop_footer_branch
      %12 = sbr.rel target = $region3
    $region8: #{transformer_forward.3} parent=1 // loop_exit
      _
    %448 = vsyncpa [#allocation4], 1
    %s449 = scalar_lea.sflag [#allocation4], 1
    %450 = vsyncpa %s449, 1

// kernel: transformer_forward.2
$region0: #{transformer_forward.2}
  #allocation0 [shape = 'u32[]', space=smem, size = 0x4, offset = 0x4, fixed_abs, tag = 'smem constant byte address 0x4 - core index']
  #allocation1 [shape = 'u32[144,128]{1,0:T(1,128)}', space=vmem, size = 0x12000, scoped, tag = 'internal scratch']
  %s0 = inlined_call_operand.vmem [shape: f32[8,128], index: 0, kind: input, shape index: {}, may-alias: {0,10}]
  %s1 = inlined_call_operand.vmem [shape: f32[2,4,128,32], index: 1, kind: input, shape index: {}]
  %s2 = inlined_call_operand.vmem [shape: f32[2,4,128,32], index: 2, kind: input, shape index: {}]
  %s3 = inlined_call_operand.vmem [shape: f32[2,4,128,32], index: 3, kind: input, shape index: {}]
  %s4 = inlined_call_operand.vmem [shape: f32[2,4,32,128], index: 4, kind: input, shape index: {}]
  %s5 = inlined_call_operand.vmem [shape: f32[2,1,128], index: 5, kind: input, shape index: {}]
  %s6 = inlined_call_operand.vmem [shape: f32[2,1,128], index: 6, kind: input, shape index: {}]
  %s7 = inlined_call_operand.vmem [shape: f32[2,128,512], index: 7, kind: input, shape index: {}]
  %s8 = inlined_call_operand.vmem [shape: f32[2,1,512], index: 8, kind: input, shape index: {}]
  %s9 = inlined_call_operand.vmem [shape: f32[2,512,128], index: 9, kind: input, shape index: {}]
  %s10 = inlined_call_operand.vmem [shape: f32[8,128], index: 10, kind: output, shape index: {}, may-alias: {0,10}]
  %s11 = sld [smem:[#allocation0]]
  $region77: #{transformer_forward.2} parent=0
    _
  %s13 = ssub.s32 1, %s11
  %s14 = scalar_select 0, %s13, %s11
  loop: start=0, step=1, limit=4
  $region2: #{transformer_forward.2} parent=0 // loop_pre_header
    _
  $region3: #{transformer_forward.2} parent=0 // loop_header
    %s16 = sphi 0, %s20
    %p17 = scmp.ge.s32.totalorder %s16, 4
    %s24 = sphi 0, %s24
    %s26 = sphi 0, %s24
    %s27 = sphi 0, %s26
    %s41 = sphi 0, %s27
    %s47 = sphi 0, %s49
    %s50 = sphi 0, %s47
    %s51 = sphi 0, %s50
    %s67 = sphi 0, %s51
    %s73 = sphi 0, %s75
    %s76 = sphi 0, %s73
    %s77 = sphi 0, %s76
    %s93 = sphi 0, %s77
    %s99 = sphi 0, %s101
    %s102 = sphi 0, %s99
    %s103 = sphi 0, %s102
    %s119 = sphi 0, %s103
    %s125 = sphi 0, %s127
    %s128 = sphi 0, %s125
    %s129 = sphi 0, %s128
    %s145 = sphi 0, %s129
    %s151 = sphi 0, %s153
    %s154 = sphi 0, %s151
    %s155 = sphi 0, %s154
    %s171 = sphi 0, %s155
    %s177 = sphi 0, %s179
    %s180 = sphi 0, %s177
    %s181 = sphi 0, %s180
    %s197 = sphi 0, %s181
    %s203 = sphi 0, %s205
    %s206 = sphi 0, %s203
    %s207 = sphi 0, %s206
    %s223 = sphi 0, %s207
    %s229 = sphi 0, %s231
    %s232 = sphi 0, %s229
    %s233 = sphi 0, %s232
    %s249 = sphi 0, %s233
    %s255 = sphi 0, %s257
    %s258 = sphi 0, %s255
    %s259 = sphi 0, %s258
    %s275 = sphi 0, %s259
    %s279 = sphi 0, %s279
    %s281 = sphi 0, %s279
    %s282 = sphi 0, %s281
    %s296 = sphi 0, %s282
  $region4: #{transformer_forward.2} parent=0 // loop_header_branch
    %19 = sbr.rel (%p17) target = $region8
  $region5: #{transformer_forward.2} parent=0 // loop_body
    %s21 = ssub.s32 %s16, 1
    %s22 = ssub.s32 %s16, 2
    %s23 = sadd.s32 %s16, 1
    %s25 = sadd.s32 %s24, 1
    %p28 = scmp.eq.s32.totalorder %s16, 1
    %p29 = scmp.ne.s32.totalorder %s24, %s26
    %p30 = scmp.eq.s32.totalorder %s16, 0
    %p31 = por %p29, %p30
    %p32 = scmp.ne.s32.totalorder %s24, %s26
    %p33 = scmp.eq.s32.totalorder %s21, 1
    %p34 = por %p32, %p33
    %p35 = scmp.ne.s32.totalorder %s26, %s27
    %p36 = scmp.eq.s32.totalorder %s21, 0
    %p37 = por %p35, %p36
    %p38 = scmp.ne.s32.totalorder %s26, %s27
    %p39 = scmp.eq.s32.totalorder %s22, 1
    %p40 = por %p38, %p39
    %p42 = scmp.ne.s32.totalorder %s27, %s41
    %p43 = scmp.eq.s32.totalorder %s22, 0
    %p44 = por %p42, %p43
    %s45 = ssub.s32 %s16, %s23
    %p46 = scmp.eq.s32.totalorder %s45, 0
    %s48 = sadd.s32 %s47, 1
    %s49 = scalar_select %p46, %s47, %s48
    %p52 = pneg %p46
    %p53 = scmp.eq.s32.totalorder %s16, 1
    %p54 = por %p52, %p53
    %p55 = scmp.ne.s32.totalorder %s47, %s50
    %p56 = scmp.eq.s32.totalorder %s16, 0
    %p57 = por %p55, %p56
    %p58 = scmp.ne.s32.totalorder %s47, %s50
    %p59 = scmp.eq.s32.totalorder %s21, 1
    %p60 = por %p58, %p59
    %p61 = scmp.ne.s32.totalorder %s50, %s51
    %p62 = scmp.eq.s32.totalorder %s21, 0
    %p63 = por %p61, %p62
    %p64 = scmp.ne.s32.totalorder %s50, %s51
    %p65 = scmp.eq.s32.totalorder %s22, 1
    %p66 = por %p64, %p65
    %p68 = scmp.ne.s32.totalorder %s51, %s67
    %p69 = scmp.eq.s32.totalorder %s22, 0
    %p70 = por %p68, %p69
    %s71 = ssub.s32 %s16, %s23
    %p72 = scmp.eq.s32.totalorder %s71, 0
    %s74 = sadd.s32 %s73, 1
    %s75 = scalar_select %p72, %s73, %s74
    %p78 = pneg %p72
    %p79 = scmp.eq.s32.totalorder %s16, 1
    %p80 = por %p78, %p79
    %p81 = scmp.ne.s32.totalorder %s73, %s76
    %p82 = scmp.eq.s32.totalorder %s16, 0
    %p83 = por %p81, %p82
    %p84 = scmp.ne.s32.totalorder %s73, %s76
    %p85 = scmp.eq.s32.totalorder %s21, 1
    %p86 = por %p84, %p85
    %p87 = scmp.ne.s32.totalorder %s76, %s77
    %p88 = scmp.eq.s32.totalorder %s21, 0
    %p89 = por %p87, %p88
    %p90 = scmp.ne.s32.totalorder %s76, %s77
    %p91 = scmp.eq.s32.totalorder %s22, 1
    %p92 = por %p90, %p91
    %p94 = scmp.ne.s32.totalorder %s77, %s93
    %p95 = scmp.eq.s32.totalorder %s22, 0
    %p96 = por %p94, %p95
    %s97 = ssub.s32 %s16, %s23
    %p98 = scmp.eq.s32.totalorder %s97, 0
    %s100 = sadd.s32 %s99, 1
    %s101 = scalar_select %p98, %s99, %s100
    %p104 = pneg %p98
    %p105 = scmp.eq.s32.totalorder %s16, 1
    %p106 = por %p104, %p105
    %p107 = scmp.ne.s32.totalorder %s99, %s102
    %p108 = scmp.eq.s32.totalorder %s16, 0
    %p109 = por %p107, %p108
    %p110 = scmp.ne.s32.totalorder %s99, %s102
    %p111 = scmp.eq.s32.totalorder %s21, 1
    %p112 = por %p110, %p111
    %p113 = scmp.ne.s32.totalorder %s102, %s103
    %p114 = scmp.eq.s32.totalorder %s21, 0
    %p115 = por %p113, %p114
    %p116 = scmp.ne.s32.totalorder %s102, %s103
    %p117 = scmp.eq.s32.totalorder %s22, 1
    %p118 = por %p116, %p117
    %p120 = scmp.ne.s32.totalorder %s103, %s119
    %p121 = scmp.eq.s32.totalorder %s22, 0
    %p122 = por %p120, %p121
    %s123 = ssub.s32 %s16, %s23
    %p124 = scmp.eq.s32.totalorder %s123, 0
    %s126 = sadd.s32 %s125, 1
    %s127 = scalar_select %p124, %s125, %s126
    %p130 = pneg %p124
    %p131 = scmp.eq.s32.totalorder %s16, 1
    %p132 = por %p130, %p131
    %p133 = scmp.ne.s32.totalorder %s125, %s128
    %p134 = scmp.eq.s32.totalorder %s16, 0
    %p135 = por %p133, %p134
    %p136 = scmp.ne.s32.totalorder %s125, %s128
    %p137 = scmp.eq.s32.totalorder %s21, 1
    %p138 = por %p136, %p137
    %p139 = scmp.ne.s32.totalorder %s128, %s129
    %p140 = scmp.eq.s32.totalorder %s21, 0
    %p141 = por %p139, %p140
    %p142 = scmp.ne.s32.totalorder %s128, %s129
    %p143 = scmp.eq.s32.totalorder %s22, 1
    %p144 = por %p142, %p143
    %p146 = scmp.ne.s32.totalorder %s129, %s145
    %p147 = scmp.eq.s32.totalorder %s22, 0
    %p148 = por %p146, %p147
    %s149 = ssub.s32 %s16, %s23
    %p150 = scmp.eq.s32.totalorder %s149, 0
    %s152 = sadd.s32 %s151, 1
    %s153 = scalar_select %p150, %s151, %s152
    %p156 = pneg %p150
    %p157 = scmp.eq.s32.totalorder %s16, 1
    %p158 = por %p156, %p157
    %p159 = scmp.ne.s32.totalorder %s151, %s154
    %p160 = scmp.eq.s32.totalorder %s16, 0
    %p161 = por %p159, %p160
    %p162 = scmp.ne.s32.totalorder %s151, %s154
    %p163 = scmp.eq.s32.totalorder %s21, 1
    %p164 = por %p162, %p163
    %p165 = scmp.ne.s32.totalorder %s154, %s155
    %p166 = scmp.eq.s32.totalorder %s21, 0
    %p167 = por %p165, %p166
    %p168 = scmp.ne.s32.totalorder %s154, %s155
    %p169 = scmp.eq.s32.totalorder %s22, 1
    %p170 = por %p168, %p169
    %p172 = scmp.ne.s32.totalorder %s155, %s171
    %p173 = scmp.eq.s32.totalorder %s22, 0
    %p174 = por %p172, %p173
    %s175 = ssub.s32 %s16, %s23
    %p176 = scmp.eq.s32.totalorder %s175, 0
    %s178 = sadd.s32 %s177, 1
    %s179 = scalar_select %p176, %s177, %s178
    %p182 = pneg %p176
    %p183 = scmp.eq.s32.totalorder %s16, 1
    %p184 = por %p182, %p183
    %p185 = scmp.ne.s32.totalorder %s177, %s180
    %p186 = scmp.eq.s32.totalorder %s16, 0
    %p187 = por %p185, %p186
    %p188 = scmp.ne.s32.totalorder %s177, %s180
    %p189 = scmp.eq.s32.totalorder %s21, 1
    %p190 = por %p188, %p189
    %p191 = scmp.ne.s32.totalorder %s180, %s181
    %p192 = scmp.eq.s32.totalorder %s21, 0
    %p193 = por %p191, %p192
    %p194 = scmp.ne.s32.totalorder %s180, %s181
    %p195 = scmp.eq.s32.totalorder %s22, 1
    %p196 = por %p194, %p195
    %p198 = scmp.ne.s32.totalorder %s181, %s197
    %p199 = scmp.eq.s32.totalorder %s22, 0
    %p200 = por %p198, %p199
    %s201 = ssub.s32 %s16, %s23
    %p202 = scmp.eq.s32.totalorder %s201, 0
    %s204 = sadd.s32 %s203, 1
    %s205 = scalar_select %p202, %s203, %s204
    %p208 = pneg %p202
    %p209 = scmp.eq.s32.totalorder %s16, 1
    %p210 = por %p208, %p209
    %p211 = scmp.ne.s32.totalorder %s203, %s206
    %p212 = scmp.eq.s32.totalorder %s16, 0
    %p213 = por %p211, %p212
    %p214 = scmp.ne.s32.totalorder %s203, %s206
    %p215 = scmp.eq.s32.totalorder %s21, 1
    %p216 = por %p214, %p215
    %p217 = scmp.ne.s32.totalorder %s206, %s207
    %p218 = scmp.eq.s32.totalorder %s21, 0
    %p219 = por %p217, %p218
    %p220 = scmp.ne.s32.totalorder %s206, %s207
    %p221 = scmp.eq.s32.totalorder %s22, 1
    %p222 = por %p220, %p221
    %p224 = scmp.ne.s32.totalorder %s207, %s223
    %p225 = scmp.eq.s32.totalorder %s22, 0
    %p226 = por %p224, %p225
    %s227 = ssub.s32 %s16, %s23
    %p228 = scmp.eq.s32.totalorder %s227, 0
    %s230 = sadd.s32 %s229, 1
    %s231 = scalar_select %p228, %s229, %s230
    %p234 = pneg %p228
    %p235 = scmp.eq.s32.totalorder %s16, 1
    %p236 = por %p234, %p235
    %p237 = scmp.ne.s32.totalorder %s229, %s232
    %p238 = scmp.eq.s32.totalorder %s16, 0
    %p239 = por %p237, %p238
    %p240 = scmp.ne.s32.totalorder %s229, %s232
    %p241 = scmp.eq.s32.totalorder %s21, 1
    %p242 = por %p240, %p241
    %p243 = scmp.ne.s32.totalorder %s232, %s233
    %p244 = scmp.eq.s32.totalorder %s21, 0
    %p245 = por %p243, %p244
    %p246 = scmp.ne.s32.totalorder %s232, %s233
    %p247 = scmp.eq.s32.totalorder %s22, 1
    %p248 = por %p246, %p247
    %p250 = scmp.ne.s32.totalorder %s233, %s249
    %p251 = scmp.eq.s32.totalorder %s22, 0
    %p252 = por %p250, %p251
    %s253 = ssub.s32 %s16, %s23
    %p254 = scmp.eq.s32.totalorder %s253, 0
    %s256 = sadd.s32 %s255, 1
    %s257 = scalar_select %p254, %s255, %s256
    %p260 = pneg %p254
    %p261 = scmp.eq.s32.totalorder %s16, 1
    %p262 = por %p260, %p261
    %p263 = scmp.ne.s32.totalorder %s255, %s258
    %p264 = scmp.eq.s32.totalorder %s16, 0
    %p265 = por %p263, %p264
    %p266 = scmp.ne.s32.totalorder %s255, %s258
    %p267 = scmp.eq.s32.totalorder %s21, 1
    %p268 = por %p266, %p267
    %p269 = scmp.ne.s32.totalorder %s258, %s259
    %p270 = scmp.eq.s32.totalorder %s21, 0
    %p271 = por %p269, %p270
    %p272 = scmp.ne.s32.totalorder %s258, %s259
    %p273 = scmp.eq.s32.totalorder %s22, 1
    %p274 = por %p272, %p273
    %p276 = scmp.ne.s32.totalorder %s259, %s275
    %p277 = scmp.eq.s32.totalorder %s22, 0
    %p278 = por %p276, %p277
    %s280 = sadd.s32 %s279, 1
    %p283 = scmp.eq.s32.totalorder %s16, 1
    %p284 = scmp.ne.s32.totalorder %s279, %s281
    %p285 = scmp.eq.s32.totalorder %s16, 0
    %p286 = por %p284, %p285
    %p287 = scmp.ne.s32.totalorder %s279, %s281
    %p288 = scmp.eq.s32.totalorder %s21, 1
    %p289 = por %p287, %p288
    %p290 = scmp.ne.s32.totalorder %s281, %s282
    %p291 = scmp.eq.s32.totalorder %s21, 0
    %p292 = por %p290, %p291
    %p293 = scmp.ne.s32.totalorder %s281, %s282
    %p294 = scmp.eq.s32.totalorder %s22, 1
    %p295 = por %p293, %p294
    %p297 = scmp.ne.s32.totalorder %s282, %s296
    %p298 = scmp.eq.s32.totalorder %s22, 0
    %p299 = por %p297, %p298
    %p300 = scmp.le.s32.totalorder 1, %s16
    %p301 = scmp.lt.s32.totalorder %s16, 3
    %p302 = pnand %p300, %p301
    %p303 = pneg %p302
    // Predicated region
    $region9: #{transformer_forward.2} parent=5 // pred_check
      _
    $region10: #{transformer_forward.2} parent=5 // pred_check_branch
      %305 = sbr.rel (%p302) target = $region12
    $region11: #{transformer_forward.2} parent=5 // pred_region
      %s306 = ssub.s32 %s16, 1
      // Predicated region
      $region13: #{transformer_forward.2} parent=11 // pred_check
        %p307 = pneg %p37
      $region14: #{transformer_forward.2} parent=11 // pred_check_branch
        %309 = sbr.rel (%p307) target = $region16
      $region15: #{transformer_forward.2} parent=11 // pred_region
        _
      $region16: #{transformer_forward.2} parent=11 // pred_fallthru
        _
    $region12: #{transformer_forward.2} parent=5 // pred_fallthru
      _
    %p310 = scmp.lt.s32.totalorder %s16, 2
    // Predicated region
    $region17: #{transformer_forward.2} parent=5 // pred_check
      %p311 = pneg %p310
    $region18: #{transformer_forward.2} parent=5 // pred_check_branch
      %313 = sbr.rel (%p311) target = $region20
    $region19: #{transformer_forward.2} parent=5 // pred_region
      // Predicated region
      $region21: #{transformer_forward.2} parent=19 // pred_check
        %p314 = pneg %p57
      $region22: #{transformer_forward.2} parent=19 // pred_check_branch
        %316 = sbr.rel (%p314) target = $region24
      $region23: #{transformer_forward.2} parent=19 // pred_region
        %p317 = scmp.lt.s32.totalorder %s16, 1
        %s318 = scalar_select %p317, %s16, 1
        %s319 = smul.addr %s318, 64
        %s320 = smul.addr %s319, 8
        %s321 = scalar_lea.vmem %s1, %s320
      $region24: #{transformer_forward.2} parent=19 // pred_fallthru
        _
      // Predicated region
      $region25: #{transformer_forward.2} parent=19 // pred_check
        %p322 = pneg %p83
      $region26: #{transformer_forward.2} parent=19 // pred_check_branch
        %324 = sbr.rel (%p322) target = $region28
      $region27: #{transformer_forward.2} parent=19 // pred_region
        %p325 = scmp.lt.s32.totalorder %s16, 1
        %s326 = scalar_select %p325, %s16, 1
        %s327 = smul.addr %s326, 64
        %s328 = smul.addr %s327, 8
        %s329 = scalar_lea.vmem %s2, %s328
      $region28: #{transformer_forward.2} parent=19 // pred_fallthru
        _
      // Predicated region
      $region29: #{transformer_forward.2} parent=19 // pred_check
        %p330 = pneg %p109
      $region30: #{transformer_forward.2} parent=19 // pred_check_branch
        %332 = sbr.rel (%p330) target = $region32
      $region31: #{transformer_forward.2} parent=19 // pred_region
        %p333 = scmp.lt.s32.totalorder %s16, 1
        %s334 = scalar_select %p333, %s16, 1
        %s335 = smul.addr %s334, 64
        %s336 = smul.addr %s335, 8
        %s337 = scalar_lea.vmem %s3, %s336
      $region32: #{transformer_forward.2} parent=19 // pred_fallthru
        _
      // Predicated region
      $region33: #{transformer_forward.2} parent=19 // pred_check
        %p338 = pneg %p135
      $region34: #{transformer_forward.2} parent=19 // pred_check_branch
        %340 = sbr.rel (%p338) target = $region36
      $region35: #{transformer_forward.2} parent=19 // pred_region
        %p341 = scmp.lt.s32.totalorder %s16, 1
        %s342 = scalar_select %p341, %s16, 1
        %s343 = smul.addr %s342, 16
        %s344 = smul.addr %s343, 8
        %s345 = scalar_lea.vmem %s4, %s344
      $region36: #{transformer_forward.2} parent=19 // pred_fallthru
        _
      // Predicated region
      $region37: #{transformer_forward.2} parent=19 // pred_check
        %p346 = pneg %p161
      $region38: #{transformer_forward.2} parent=19 // pred_check_branch
        %348 = sbr.rel (%p346) target = $region40
      $region39: #{transformer_forward.2} parent=19 // pred_region
        %p349 = scmp.lt.s32.totalorder %s16, 1
        %s350 = scalar_select %p349, %s16, 1
        %s351 = scalar_lea.vmem %s5, %s350
      $region40: #{transformer_forward.2} parent=19 // pred_fallthru
        _
      // Predicated region
      $region41: #{transformer_forward.2} parent=19 // pred_check
        %p352 = pneg %p187
      $region42: #{transformer_forward.2} parent=19 // pred_check_branch
        %354 = sbr.rel (%p352) target = $region44
      $region43: #{transformer_forward.2} parent=19 // pred_region
        %p355 = scmp.lt.s32.totalorder %s16, 1
        %s356 = scalar_select %p355, %s16, 1
        %s357 = scalar_lea.vmem %s6, %s356
      $region44: #{transformer_forward.2} parent=19 // pred_fallthru
        _
      // Predicated region
      $region45: #{transformer_forward.2} parent=19 // pred_check
        %p358 = pneg %p213
      $region46: #{transformer_forward.2} parent=19 // pred_check_branch
        %360 = sbr.rel (%p358) target = $region48
      $region47: #{transformer_forward.2} parent=19 // pred_region
        %p361 = scmp.lt.s32.totalorder %s16, 1
        %s362 = scalar_select %p361, %s16, 1
        %s363 = smul.addr %s362, 64
        %s364 = smul.addr %s363, 8
        %s365 = scalar_lea.vmem %s7, %s364
      $region48: #{transformer_forward.2} parent=19 // pred_fallthru
        _
      // Predicated region
      $region49: #{transformer_forward.2} parent=19 // pred_check
        %p366 = pneg %p239
      $region50: #{transformer_forward.2} parent=19 // pred_check_branch
        %368 = sbr.rel (%p366) target = $region52
      $region51: #{transformer_forward.2} parent=19 // pred_region
        %p369 = scmp.lt.s32.totalorder %s16, 1
        %s370 = scalar_select %p369, %s16, 1
        %s371 = smul.addr %s370, 4
        %s372 = scalar_lea.vmem %s8, %s371
      $region52: #{transformer_forward.2} parent=19 // pred_fallthru
        _
      // Predicated region
      $region53: #{transformer_forward.2} parent=19 // pred_check
        %p373 = pneg %p265
      $region54: #{transformer_forward.2} parent=19 // pred_check_branch
        %375 = sbr.rel (%p373) target = $region56
      $region55: #{transformer_forward.2} parent=19 // pred_region
        %p376 = scmp.lt.s32.totalorder %s16, 1
        %s377 = scalar_select %p376, %s16, 1
        %s378 = smul.addr %s377, 64
        %s379 = smul.addr %s378, 8
        %s380 = scalar_lea.vmem %s9, %s379
      $region56: #{transformer_forward.2} parent=19 // pred_fallthru
        _
    $region20: #{transformer_forward.2} parent=5 // pred_fallthru
      _
    %p381 = scmp.le.s32.totalorder 1, %s16
    %p382 = scmp.lt.s32.totalorder %s16, 3
    %p383 = pnand %p381, %p382
    %p384 = pneg %p383
    // Predicated region
    $region57: #{transformer_forward.2} parent=5 // pred_check
      _
    $region58: #{transformer_forward.2} parent=5 // pred_check_branch
      %386 = sbr.rel (%p383) target = $region60
    $region59: #{transformer_forward.2} parent=5 // pred_region
      %s387 = ssub.s32 %s16, 1
      %p388 = pneg %p37
      %p389 = pneg %p34
      %p390 = scmp.lt.s32.totalorder %s21, 1
      %s391 = scalar_select %p390, %s21, 1
      %s392 = smul.addr %s391, 64
      %s393 = smul.addr %s392, 8
      %s394 = scalar_lea.vmem %s1, %s393
      %p395 = pneg %p63
      %p396 = pneg %p60
      %p397 = scmp.lt.s32.totalorder %s21, 1
      %s398 = scalar_select %p397, %s21, 1
      %s399 = smul.addr %s398, 64
      %s400 = smul.addr %s399, 8
      %s401 = scalar_lea.vmem %s2, %s400
      %p402 = pneg %p89
      %p403 = pneg %p86
      %p404 = scmp.lt.s32.totalorder %s21, 1
      %s405 = scalar_select %p404, %s21, 1
      %s406 = smul.addr %s405, 64
      %s407 = smul.addr %s406, 8
      %s408 = scalar_lea.vmem %s3, %s407
      %p409 = pneg %p115
      %p410 = pneg %p112
      %p411 = scmp.lt.s32.totalorder %s21, 1
      %s412 = scalar_select %p411, %s21, 1
      %s413 = smul.addr %s412, 16
      %s414 = smul.addr %s413, 8
      %s415 = scalar_lea.vmem %s4, %s414
      %p416 = pneg %p141
      %p417 = pneg %p138
      %p418 = scmp.lt.s32.totalorder %s21, 1
      %s419 = scalar_select %p418, %s21, 1
      %s420 = scalar_lea.vmem %s5, %s419
      %p421 = pneg %p167
      %p422 = pneg %p164
      %p423 = scmp.lt.s32.totalorder %s21, 1
      %s424 = scalar_select %p423, %s21, 1
      %s425 = scalar_lea.vmem %s6, %s424
      %p426 = pneg %p193
      %p427 = pneg %p190
      %p428 = scmp.lt.s32.totalorder %s21, 1
      %s429 = scalar_select %p428, %s21, 1
      %s430 = smul.addr %s429, 64
      %s431 = smul.addr %s430, 8
      %s432 = scalar_lea.vmem %s7, %s431
      %p433 = pneg %p219
      %p434 = pneg %p216
      %p435 = scmp.lt.s32.totalorder %s21, 1
      %s436 = scalar_select %p435, %s21, 1
      %s437 = smul.addr %s436, 4
      %s438 = scalar_lea.vmem %s8, %s437
      %p439 = pneg %p245
      %p440 = pneg %p242
      %p441 = scmp.lt.s32.totalorder %s21, 1
      %s442 = scalar_select %p441, %s21, 1
      %s443 = smul.addr %s442, 64
      %s444 = smul.addr %s443, 8
      %s445 = scalar_lea.vmem %s9, %s444
      %p446 = pneg %p271
      %p447 = pneg %p268
      %p448 = pneg %p292
      %p449 = pneg %p289
      %p450 = scmp.lt.s32.totalorder %s21, 1
      %s451 = scalar_select %p450, %s21, 1
      %s452 = smul.addr %s451, 64
      %s453 = smul.addr %s452, 8
      %s454 = scalar_lea.vmem %s1, %s453
      %p455 = scmp.lt.s32.totalorder %s21, 1
      %s456 = scalar_select %p455, %s21, 1
      %s457 = smul.addr %s456, 64
      %s458 = smul.addr %s457, 8
      %s459 = scalar_lea.vmem %s2, %s458
      %p460 = scmp.lt.s32.totalorder %s21, 1
      %s461 = scalar_select %p460, %s21, 1
      %s462 = smul.addr %s461, 64
      %s463 = smul.addr %s462, 8
      %s464 = scalar_lea.vmem %s3, %s463
      %p465 = scmp.lt.s32.totalorder %s21, 1
      %s466 = scalar_select %p465, %s21, 1
      %s467 = smul.addr %s466, 16
      %s468 = smul.addr %s467, 8
      %s469 = scalar_lea.vmem %s4, %s468
      %p470 = scmp.lt.s32.totalorder %s21, 1
      %s471 = scalar_select %p470, %s21, 1
      %s472 = scalar_lea.vmem %s5, %s471
      %p473 = scmp.lt.s32.totalorder %s21, 1
      %s474 = scalar_select %p473, %s21, 1
      %s475 = scalar_lea.vmem %s6, %s474
      %p476 = scmp.lt.s32.totalorder %s21, 1
      %s477 = scalar_select %p476, %s21, 1
      %s478 = smul.addr %s477, 64
      %s479 = smul.addr %s478, 8
      %s480 = scalar_lea.vmem %s7, %s479
      %p481 = scmp.lt.s32.totalorder %s21, 1
      %s482 = scalar_select %p481, %s21, 1
      %s483 = smul.addr %s482, 4
      %s484 = scalar_lea.vmem %s8, %s483
      %p485 = scmp.lt.s32.totalorder %s21, 1
      %s486 = scalar_select %p485, %s21, 1
      %s487 = smul.addr %s486, 64
      %s488 = smul.addr %s487, 8
      %s489 = scalar_lea.vmem %s9, %s488
      %p490 = scmp.eq.s32.totalorder %s21, 0
      // Predicated region
      $region61: #{transformer_forward.2} parent=59 // pred_check
        %p491 = pneg %p490
      $region62: #{transformer_forward.2} parent=59 // pred_check_branch
        %493 = sbr.rel (%p491) target = $region64
      $region63: #{transformer_forward.2} parent=59 // pred_region
        %v494 = vld [vmem:[%s0] sm:$0xff]
        %495 = vst [vmem:[%s10] sm:$0xff] %v494
      $region64: #{transformer_forward.2} parent=59 // pred_fallthru
        _
      %v496 = vld [vmem:[%s10] sm:$0xff]
      %v497 = vld [vmem:[%s472] sm:$0x1]
      %v498 = vmul.f32 %v496, %v496
      %499 = vadd.xlane.f32.xlu0 %v498
      %v500 = vpop.xlane.xlu0 %499
      %v501 = vrcp.pop 128.0
      %v502 = vmul.f32 %v500, %v501
      %v503 = vadd.f32 %v502, 1e-06
      %v504 = vrsqrt.pop %v503
      %v505 = vmul.f32 %v496, %v504
      %v507 = vlaneseq
      %v508 = vshrl.u32 %v507, 7
      %v509 = vsub.s32 0, %v508
      %v510 = vrot.slane %v497, %v509
      %v512 = vmul.f32 %v505, %v510
      %v513 = vld [vmem:[%s454] sm:$0xff]
      %v514 = vld [vmem:[%s454 + $0x8] sm:$0xff]
      %v515 = vld [vmem:[%s454 + $0x10] sm:$0xff]
      %v516 = vld [vmem:[%s454 + $0x18] sm:$0xff]
      %v517 = vld [vmem:[%s454 + $0x20] sm:$0xff]
      %v518 = vld [vmem:[%s454 + $0x28] sm:$0xff]
      %v519 = vld [vmem:[%s454 + $0x30] sm:$0xff]
      %v520 = vld [vmem:[%s454 + $0x38] sm:$0xff]
      %v521 = vld [vmem:[%s454 + $0x40] sm:$0xff]
      %v522 = vld [vmem:[%s454 + $0x48] sm:$0xff]
      %v523 = vld [vmem:[%s454 + $0x50] sm:$0xff]
      %v524 = vld [vmem:[%s454 + $0x58] sm:$0xff]
      %v525 = vld [vmem:[%s454 + $0x60] sm:$0xff]
      %v526 = vld [vmem:[%s454 + $0x68] sm:$0xff]
      %v527 = vld [vmem:[%s454 + $0x70] sm:$0xff]
      %v528 = vld [vmem:[%s454 + $0x78] sm:$0xff]
      %v529 = vld [vmem:[%s454 + $0x80] sm:$0xff]
      %v530 = vld [vmem:[%s454 + $0x88] sm:$0xff]
      %v531 = vld [vmem:[%s454 + $0x90] sm:$0xff]
      %v532 = vld [vmem:[%s454 + $0x98] sm:$0xff]
      %v533 = vld [vmem:[%s454 + $0xa0] sm:$0xff]
      %v534 = vld [vmem:[%s454 + $0xa8] sm:$0xff]
      %v535 = vld [vmem:[%s454 + $0xb0] sm:$0xff]
      %v536 = vld [vmem:[%s454 + $0xb8] sm:$0xff]
      %v537 = vld [vmem:[%s454 + $0xc0] sm:$0xff]
      %v538 = vld [vmem:[%s454 + $0xc8] sm:$0xff]
      %v539 = vld [vmem:[%s454 + $0xd0] sm:$0xff]
      %v540 = vld [vmem:[%s454 + $0xd8] sm:$0xff]
      %v541 = vld [vmem:[%s454 + $0xe0] sm:$0xff]
      %v542 = vld [vmem:[%s454 + $0xe8] sm:$0xff]
      %v543 = vld [vmem:[%s454 + $0xf0] sm:$0xff]
      %v544 = vld [vmem:[%s454 + $0xf8] sm:$0xff]
      %v545 = vld [vmem:[%s454 + $0x100] sm:$0xff]
      %v546 = vld [vmem:[%s454 + $0x108] sm:$0xff]
      %v547 = vld [vmem:[%s454 + $0x110] sm:$0xff]
      %v548 = vld [vmem:[%s454 + $0x118] sm:$0xff]
      %v549 = vld [vmem:[%s454 + $0x120] sm:$0xff]
      %v550 = vld [vmem:[%s454 + $0x128] sm:$0xff]
      %v551 = vld [vmem:[%s454 + $0x130] sm:$0xff]
      %v552 = vld [vmem:[%s454 + $0x138] sm:$0xff]
      %v553 = vld [vmem:[%s454 + $0x140] sm:$0xff]
      %v554 = vld [vmem:[%s454 + $0x148] sm:$0xff]
      %v555 = vld [vmem:[%s454 + $0x150] sm:$0xff]
      %v556 = vld [vmem:[%s454 + $0x158] sm:$0xff]
      %v557 = vld [vmem:[%s454 + $0x160] sm:$0xff]
      %v558 = vld [vmem:[%s454 + $0x168] sm:$0xff]
      %v559 = vld [vmem:[%s454 + $0x170] sm:$0xff]
      %v560 = vld [vmem:[%s454 + $0x178] sm:$0xff]
      %v561 = vld [vmem:[%s454 + $0x180] sm:$0xff]
      %v562 = vld [vmem:[%s454 + $0x188] sm:$0xff]
      %v563 = vld [vmem:[%s454 + $0x190] sm:$0xff]
      %v564 = vld [vmem:[%s454 + $0x198] sm:$0xff]
      %v565 = vld [vmem:[%s454 + $0x1a0] sm:$0xff]
      %v566 = vld [vmem:[%s454 + $0x1a8] sm:$0xff]
      %v567 = vld [vmem:[%s454 + $0x1b0] sm:$0xff]
      %v568 = vld [vmem:[%s454 + $0x1b8] sm:$0xff]
      %v569 = vld [vmem:[%s454 + $0x1c0] sm:$0xff]
      %v570 = vld [vmem:[%s454 + $0x1c8] sm:$0xff]
      %v571 = vld [vmem:[%s454 + $0x1d0] sm:$0xff]
      %v572 = vld [vmem:[%s454 + $0x1d8] sm:$0xff]
      %v573 = vld [vmem:[%s454 + $0x1e0] sm:$0xff]
      %v574 = vld [vmem:[%s454 + $0x1e8] sm:$0xff]
      %v575 = vld [vmem:[%s454 + $0x1f0] sm:$0xff]
      %v576 = vld [vmem:[%s454 + $0x1f8] sm:$0xff]
      %577 = vmatprep.subr.mxu0 0.0
      %578 = vmatpush1.msra.mxu0 %v528
      %579 = vmatprep.subr.mxu0 0.0
      %580 = vmatpush1.msra.mxu0 %v527
      %581 = vmatprep.subr.mxu0 0.0
      %582 = vmatpush1.msra.mxu0 %v526
      %583 = vmatprep.subr.mxu0 0.0
      %584 = vmatpush1.msra.mxu0 %v525
      %585 = vmatprep.subr.mxu0 0.0
      %586 = vmatpush1.msra.mxu0 %v524
      %587 = vmatprep.subr.mxu0 0.0
      %588 = vmatpush1.msra.mxu0 %v523
      %589 = vmatprep.subr.mxu0 0.0
      %590 = vmatpush1.msra.mxu0 %v522
      %591 = vmatprep.subr.mxu0 0.0
      %592 = vmatpush1.msra.mxu0 %v521
      %593 = vmatprep.subr.mxu0 0.0
      %594 = vmatpush1.msra.mxu0 %v520
      %595 = vmatprep.subr.mxu0 0.0
      %596 = vmatpush1.msra.mxu0 %v519
      %597 = vmatprep.subr.mxu0 0.0
      %598 = vmatpush1.msra.mxu0 %v518
      %599 = vmatprep.subr.mxu0 0.0
      %600 = vmatpush1.msra.mxu0 %v517
      %601 = vmatprep.subr.mxu0 0.0
      %602 = vmatpush1.msra.mxu0 %v516
      %603 = vmatprep.subr.mxu0 0.0
      %604 = vmatpush1.msra.mxu0 %v515
      %605 = vmatprep.subr.mxu0 0.0
      %606 = vmatpush1.msra.mxu0 %v514
      %607 = vmatprep.subr.mxu0 0.0
      %608 = vmatpush1.msra.mxu0 %v513
      %609 = vmatprep.subr.mxu0 0.0
      %610 = vmatpush2.msra.mxu0 0.0
      %611 = vmatprep.subr.mxu0 0.0
      %612 = vmatpush2.msra.mxu0 0.0
      %613 = vmatprep.subr.mxu0 0.0
      %614 = vmatpush2.msra.mxu0 0.0
      %615 = vmatprep.subr.mxu0 0.0
      %616 = vmatpush2.msra.mxu0 0.0
      %617 = vmatprep.subr.mxu0 0.0
      %618 = vmatpush2.msra.mxu0 0.0
      %619 = vmatprep.subr.mxu0 0.0
      %620 = vmatpush2.msra.mxu0 0.0
      %621 = vmatprep.subr.mxu0 0.0
      %622 = vmatpush2.msra.mxu0 0.0
      %623 = vmatprep.subr.mxu0 0.0
      %624 = vmatpush2.msra.mxu0 0.0
      %625 = vmatprep.subr.mxu0 0.0
      %626 = vmatpush2.msra.mxu0 0.0
      %627 = vmatprep.subr.mxu0 0.0
      %628 = vmatpush2.msra.mxu0 0.0
      %629 = vmatprep.subr.mxu0 0.0
      %630 = vmatpush2.msra.mxu0 0.0
      %631 = vmatprep.subr.mxu0 0.0
      %632 = vmatpush2.msra.mxu0 0.0
      %633 = vmatprep.subr.mxu0 0.0
      %634 = vmatpush2.msra.mxu0 0.0
      %635 = vmatprep.subr.mxu0 0.0
      %636 = vmatpush2.msra.mxu0 0.0
      %637 = vmatprep.subr.mxu0 0.0
      %638 = vmatpush2.msra.mxu0 0.0
      %639 = vmatprep.subr.mxu0 0.0
      %640 = vmatpush2.msra.mxu0 0.0
      %641 = vmatprep.mubr.f32.mxu0 0.0
      %642 = vmatmul.mubr.f32.gmra.mxu0 %v512
      %v643 = vpop.f32.mrf.mxu0
      %v644 = vadd.f32 0.0, %v643
      %v645 = vpop.f32.mrf.mxu0
      %646 = vdwg.mxu0
      %647 = vmatprep.subr.mxu0 0.0
      %648 = vmatpush1.msra.mxu0 %v544
      %649 = vmatprep.subr.mxu0 0.0
      %650 = vmatpush1.msra.mxu0 %v543
      %651 = vmatprep.subr.mxu0 0.0
      %652 = vmatpush1.msra.mxu0 %v542
      %653 = vmatprep.subr.mxu0 0.0
      %654 = vmatpush1.msra.mxu0 %v541
      %655 = vmatprep.subr.mxu0 0.0
      %656 = vmatpush1.msra.mxu0 %v540
      %657 = vmatprep.subr.mxu0 0.0
      %658 = vmatpush1.msra.mxu0 %v539
      %659 = vmatprep.subr.mxu0 0.0
      %660 = vmatpush1.msra.mxu0 %v538
      %661 = vmatprep.subr.mxu0 0.0
      %662 = vmatpush1.msra.mxu0 %v537
      %663 = vmatprep.subr.mxu0 0.0
      %664 = vmatpush1.msra.mxu0 %v536
      %665 = vmatprep.subr.mxu0 0.0
      %666 = vmatpush1.msra.mxu0 %v535
      %667 = vmatprep.subr.mxu0 0.0
      %668 = vmatpush1.msra.mxu0 %v534
      %669 = vmatprep.subr.mxu0 0.0
      %670 = vmatpush1.msra.mxu0 %v533
      %671 = vmatprep.subr.mxu0 0.0
      %672 = vmatpush1.msra.mxu0 %v532
      %673 = vmatprep.subr.mxu0 0.0
      %674 = vmatpush1.msra.mxu0 %v531
      %675 = vmatprep.subr.mxu0 0.0
      %676 = vmatpush1.msra.mxu0 %v530
      %677 = vmatprep.subr.mxu0 0.0
      %678 = vmatpush1.msra.mxu0 %v529
      %679 = vmatprep.subr.mxu0 0.0
      %680 = vmatpush2.msra.mxu0 0.0
      %681 = vmatprep.subr.mxu0 0.0
      %682 = vmatpush2.msra.mxu0 0.0
      %683 = vmatprep.subr.mxu0 0.0
      %684 = vmatpush2.msra.mxu0 0.0
      %685 = vmatprep.subr.mxu0 0.0
      %686 = vmatpush2.msra.mxu0 0.0
      %687 = vmatprep.subr.mxu0 0.0
      %688 = vmatpush2.msra.mxu0 0.0
      %689 = vmatprep.subr.mxu0 0.0
      %690 = vmatpush2.msra.mxu0 0.0
      %691 = vmatprep.subr.mxu0 0.0
      %692 = vmatpush2.msra.mxu0 0.0
      %693 = vmatprep.subr.mxu0 0.0
      %694 = vmatpush2.msra.mxu0 0.0
      %695 = vmatprep.subr.mxu0 0.0
      %696 = vmatpush2.msra.mxu0 0.0
      %697 = vmatprep.subr.mxu0 0.0
      %698 = vmatpush2.msra.mxu0 0.0
      %699 = vmatprep.subr.mxu0 0.0
      %700 = vmatpush2.msra.mxu0 0.0
      %701 = vmatprep.subr.mxu0 0.0
      %702 = vmatpush2.msra.mxu0 0.0
      %703 = vmatprep.subr.mxu0 0.0
      %704 = vmatpush2.msra.mxu0 0.0
      %705 = vmatprep.subr.mxu0 0.0
      %706 = vmatpush2.msra.mxu0 0.0
      %707 = vmatprep.subr.mxu0 0.0
      %708 = vmatpush2.msra.mxu0 0.0
      %709 = vmatprep.subr.mxu0 0.0
      %710 = vmatpush2.msra.mxu0 0.0
      %711 = vmatprep.mubr.f32.mxu0 0.0
      %712 = vmatmul.mubr.f32.gmra.mxu0 %v512
      %v713 = vpop.f32.mrf.mxu0
      %v714 = vadd.f32 0.0, %v713
      %v715 = vpop.f32.mrf.mxu0
      %716 = vdwg.mxu0
      %717 = vmatprep.subr.mxu0 0.0
      %718 = vmatpush1.msra.mxu0 %v560
      %719 = vmatprep.subr.mxu0 0.0
      %720 = vmatpush1.msra.mxu0 %v559
      %721 = vmatprep.subr.mxu0 0.0
      %722 = vmatpush1.msra.mxu0 %v558
      %723 = vmatprep.subr.mxu0 0.0
      %724 = vmatpush1.msra.mxu0 %v557
      %725 = vmatprep.subr.mxu0 0.0
      %726 = vmatpush1.msra.mxu0 %v556
      %727 = vmatprep.subr.mxu0 0.0
      %728 = vmatpush1.msra.mxu0 %v555
      %729 = vmatprep.subr.mxu0 0.0
      %730 = vmatpush1.msra.mxu0 %v554
      %731 = vmatprep.subr.mxu0 0.0
      %732 = vmatpush1.msra.mxu0 %v553
      %733 = vmatprep.subr.mxu0 0.0
      %734 = vmatpush1.msra.mxu0 %v552
      %735 = vmatprep.subr.mxu0 0.0
      %736 = vmatpush1.msra.mxu0 %v551
      %737 = vmatprep.subr.mxu0 0.0
      %738 = vmatpush1.msra.mxu0 %v550
      %739 = vmatprep.subr.mxu0 0.0
      %740 = vmatpush1.msra.mxu0 %v549
      %741 = vmatprep.subr.mxu0 0.0
      %742 = vmatpush1.msra.mxu0 %v548
      %743 = vmatprep.subr.mxu0 0.0
      %744 = vmatpush1.msra.mxu0 %v547
      %745 = vmatprep.subr.mxu0 0.0
      %746 = vmatpush1.msra.mxu0 %v546
      %747 = vmatprep.subr.mxu0 0.0
      %748 = vmatpush1.msra.mxu0 %v545
      %749 = vmatprep.subr.mxu0 0.0
      %750 = vmatpush2.msra.mxu0 0.0
      %751 = vmatprep.subr.mxu0 0.0
      %752 = vmatpush2.msra.mxu0 0.0
      %753 = vmatprep.subr.mxu0 0.0
      %754 = vmatpush2.msra.mxu0 0.0
      %755 = vmatprep.subr.mxu0 0.0
      %756 = vmatpush2.msra.mxu0 0.0
      %757 = vmatprep.subr.mxu0 0.0
      %758 = vmatpush2.msra.mxu0 0.0
      %759 = vmatprep.subr.mxu0 0.0
      %760 = vmatpush2.msra.mxu0 0.0
      %761 = vmatprep.subr.mxu0 0.0
      %762 = vmatpush2.msra.mxu0 0.0
      %763 = vmatprep.subr.mxu0 0.0
      %764 = vmatpush2.msra.mxu0 0.0
      %765 = vmatprep.subr.mxu0 0.0
      %766 = vmatpush2.msra.mxu0 0.0
      %767 = vmatprep.subr.mxu0 0.0
      %768 = vmatpush2.msra.mxu0 0.0
      %769 = vmatprep.subr.mxu0 0.0
      %770 = vmatpush2.msra.mxu0 0.0
      %771 = vmatprep.subr.mxu0 0.0
      %772 = vmatpush2.msra.mxu0 0.0
      %773 = vmatprep.subr.mxu0 0.0
      %774 = vmatpush2.msra.mxu0 0.0
      %775 = vmatprep.subr.mxu0 0.0
      %776 = vmatpush2.msra.mxu0 0.0
      %777 = vmatprep.subr.mxu0 0.0
      %778 = vmatpush2.msra.mxu0 0.0
      %779 = vmatprep.subr.mxu0 0.0
      %780 = vmatpush2.msra.mxu0 0.0
      %781 = vmatprep.mubr.f32.mxu0 0.0
      %782 = vmatmul.mubr.f32.gmra.mxu0 %v512
      %v783 = vpop.f32.mrf.mxu0
      %v784 = vadd.f32 0.0, %v783
      %v785 = vpop.f32.mrf.mxu0
      %786 = vdwg.mxu0
      %787 = vmatprep.subr.mxu0 0.0
      %788 = vmatpush1.msra.mxu0 %v576
      %789 = vmatprep.subr.mxu0 0.0
      %790 = vmatpush1.msra.mxu0 %v575
      %791 = vmatprep.subr.mxu0 0.0
      %792 = vmatpush1.msra.mxu0 %v574
      %793 = vmatprep.subr.mxu0 0.0
      %794 = vmatpush1.msra.mxu0 %v573
      %795 = vmatprep.subr.mxu0 0.0
      %796 = vmatpush1.msra.mxu0 %v572
      %797 = vmatprep.subr.mxu0 0.0
      %798 = vmatpush1.msra.mxu0 %v571
      %799 = vmatprep.subr.mxu0 0.0
      %800 = vmatpush1.msra.mxu0 %v570
      %801 = vmatprep.subr.mxu0 0.0
      %802 = vmatpush1.msra.mxu0 %v569
      %803 = vmatprep.subr.mxu0 0.0
      %804 = vmatpush1.msra.mxu0 %v568
      %805 = vmatprep.subr.mxu0 0.0
      %806 = vmatpush1.msra.mxu0 %v567
      %807 = vmatprep.subr.mxu0 0.0
      %808 = vmatpush1.msra.mxu0 %v566
      %809 = vmatprep.subr.mxu0 0.0
      %810 = vmatpush1.msra.mxu0 %v565
      %811 = vmatprep.subr.mxu0 0.0
      %812 = vmatpush1.msra.mxu0 %v564
      %813 = vmatprep.subr.mxu0 0.0
      %814 = vmatpush1.msra.mxu0 %v563
      %815 = vmatprep.subr.mxu0 0.0
      %816 = vmatpush1.msra.mxu0 %v562
      %817 = vmatprep.subr.mxu0 0.0
      %818 = vmatpush1.msra.mxu0 %v561
      %819 = vmatprep.subr.mxu0 0.0
      %820 = vmatpush2.msra.mxu0 0.0
      %821 = vmatprep.subr.mxu0 0.0
      %822 = vmatpush2.msra.mxu0 0.0
      %823 = vmatprep.subr.mxu0 0.0
      %824 = vmatpush2.msra.mxu0 0.0
      %825 = vmatprep.subr.mxu0 0.0
      %826 = vmatpush2.msra.mxu0 0.0
      %827 = vmatprep.subr.mxu0 0.0
      %828 = vmatpush2.msra.mxu0 0.0
      %829 = vmatprep.subr.mxu0 0.0
      %830 = vmatpush2.msra.mxu0 0.0
      %831 = vmatprep.subr.mxu0 0.0
      %832 = vmatpush2.msra.mxu0 0.0
      %833 = vmatprep.subr.mxu0 0.0
      %834 = vmatpush2.msra.mxu0 0.0
      %835 = vmatprep.subr.mxu0 0.0
      %836 = vmatpush2.msra.mxu0 0.0
      %837 = vmatprep.subr.mxu0 0.0
      %838 = vmatpush2.msra.mxu0 0.0
      %839 = vmatprep.subr.mxu0 0.0
      %840 = vmatpush2.msra.mxu0 0.0
      %841 = vmatprep.subr.mxu0 0.0
      %842 = vmatpush2.msra.mxu0 0.0
      %843 = vmatprep.subr.mxu0 0.0
      %844 = vmatpush2.msra.mxu0 0.0
      %845 = vmatprep.subr.mxu0 0.0
      %846 = vmatpush2.msra.mxu0 0.0
      %847 = vmatprep.subr.mxu0 0.0
      %848 = vmatpush2.msra.mxu0 0.0
      %849 = vmatprep.subr.mxu0 0.0
      %850 = vmatpush2.msra.mxu0 0.0
      %851 = vmatprep.mubr.f32.mxu0 0.0
      %852 = vmatmul.mubr.f32.gmra.mxu0 %v512
      %v853 = vpop.f32.mrf.mxu0
      %v854 = vadd.f32 0.0, %v853
      %v855 = vpop.f32.mrf.mxu0
      %856 = vdwg.mxu0
      %v857 = vld [vmem:[%s459] sm:$0xff]
      %v858 = vld [vmem:[%s459 + $0x8] sm:$0xff]
      %v859 = vld [vmem:[%s459 + $0x10] sm:$0xff]
      %v860 = vld [vmem:[%s459 + $0x18] sm:$0xff]
      %v861 = vld [vmem:[%s459 + $0x20] sm:$0xff]
      %v862 = vld [vmem:[%s459 + $0x28] sm:$0xff]
      %v863 = vld [vmem:[%s459 + $0x30] sm:$0xff]
      %v864 = vld [vmem:[%s459 + $0x38] sm:$0xff]
      %v865 = vld [vmem:[%s459 + $0x40] sm:$0xff]
      %v866 = vld [vmem:[%s459 + $0x48] sm:$0xff]
      %v867 = vld [vmem:[%s459 + $0x50] sm:$0xff]
      %v868 = vld [vmem:[%s459 + $0x58] sm:$0xff]
      %v869 = vld [vmem:[%s459 + $0x60] sm:$0xff]
      %v870 = vld [vmem:[%s459 + $0x68] sm:$0xff]
      %v871 = vld [vmem:[%s459 + $0x70] sm:$0xff]
      %v872 = vld [vmem:[%s459 + $0x78] sm:$0xff]
      %v873 = vld [vmem:[%s459 + $0x80] sm:$0xff]
      %v874 = vld [vmem:[%s459 + $0x88] sm:$0xff]
      %v875 = vld [vmem:[%s459 + $0x90] sm:$0xff]
      %v876 = vld [vmem:[%s459 + $0x98] sm:$0xff]
      %v877 = vld [vmem:[%s459 + $0xa0] sm:$0xff]
      %v878 = vld [vmem:[%s459 + $0xa8] sm:$0xff]
      %v879 = vld [vmem:[%s459 + $0xb0] sm:$0xff]
      %v880 = vld [vmem:[%s459 + $0xb8] sm:$0xff]
      %v881 = vld [vmem:[%s459 + $0xc0] sm:$0xff]
      %v882 = vld [vmem:[%s459 + $0xc8] sm:$0xff]
      %v883 = vld [vmem:[%s459 + $0xd0] sm:$0xff]
      %v884 = vld [vmem:[%s459 + $0xd8] sm:$0xff]
      %v885 = vld [vmem:[%s459 + $0xe0] sm:$0xff]
      %v886 = vld [vmem:[%s459 + $0xe8] sm:$0xff]
      %v887 = vld [vmem:[%s459 + $0xf0] sm:$0xff]
      %v888 = vld [vmem:[%s459 + $0xf8] sm:$0xff]
      %v889 = vld [vmem:[%s459 + $0x100] sm:$0xff]
      %v890 = vld [vmem:[%s459 + $0x108] sm:$0xff]
      %v891 = vld [vmem:[%s459 + $0x110] sm:$0xff]
      %v892 = vld [vmem:[%s459 + $0x118] sm:$0xff]
      %v893 = vld [vmem:[%s459 + $0x120] sm:$0xff]
      %v894 = vld [vmem:[%s459 + $0x128] sm:$0xff]
      %v895 = vld [vmem:[%s459 + $0x130] sm:$0xff]
      %v896 = vld [vmem:[%s459 + $0x138] sm:$0xff]
      %v897 = vld [vmem:[%s459 + $0x140] sm:$0xff]
      %v898 = vld [vmem:[%s459 + $0x148] sm:$0xff]
      %v899 = vld [vmem:[%s459 + $0x150] sm:$0xff]
      %v900 = vld [vmem:[%s459 + $0x158] sm:$0xff]
      %v901 = vld [vmem:[%s459 + $0x160] sm:$0xff]
      %v902 = vld [vmem:[%s459 + $0x168] sm:$0xff]
      %v903 = vld [vmem:[%s459 + $0x170] sm:$0xff]
      %v904 = vld [vmem:[%s459 + $0x178] sm:$0xff]
      %v905 = vld [vmem:[%s459 + $0x180] sm:$0xff]
      %v906 = vld [vmem:[%s459 + $0x188] sm:$0xff]
      %v907 = vld [vmem:[%s459 + $0x190] sm:$0xff]
      %v908 = vld [vmem:[%s459 + $0x198] sm:$0xff]
      %v909 = vld [vmem:[%s459 + $0x1a0] sm:$0xff]
      %v910 = vld [vmem:[%s459 + $0x1a8] sm:$0xff]
      %v911 = vld [vmem:[%s459 + $0x1b0] sm:$0xff]
      %v912 = vld [vmem:[%s459 + $0x1b8] sm:$0xff]
      %v913 = vld [vmem:[%s459 + $0x1c0] sm:$0xff]
      %v914 = vld [vmem:[%s459 + $0x1c8] sm:$0xff]
      %v915 = vld [vmem:[%s459 + $0x1d0] sm:$0xff]
      %v916 = vld [vmem:[%s459 + $0x1d8] sm:$0xff]
      %v917 = vld [vmem:[%s459 + $0x1e0] sm:$0xff]
      %v918 = vld [vmem:[%s459 + $0x1e8] sm:$0xff]
      %v919 = vld [vmem:[%s459 + $0x1f0] sm:$0xff]
      %v920 = vld [vmem:[%s459 + $0x1f8] sm:$0xff]
      %921 = vmatprep.subr.mxu0 0.0
      %922 = vmatpush1.msra.mxu0 %v872
      %923 = vmatprep.subr.mxu0 0.0
      %924 = vmatpush1.msra.mxu0 %v871
      %925 = vmatprep.subr.mxu0 0.0
      %926 = vmatpush1.msra.mxu0 %v870
      %927 = vmatprep.subr.mxu0 0.0
      %928 = vmatpush1.msra.mxu0 %v869
      %929 = vmatprep.subr.mxu0 0.0
      %930 = vmatpush1.msra.mxu0 %v868
      %931 = vmatprep.subr.mxu0 0.0
      %932 = vmatpush1.msra.mxu0 %v867
      %933 = vmatprep.subr.mxu0 0.0
      %934 = vmatpush1.msra.mxu0 %v866
      %935 = vmatprep.subr.mxu0 0.0
      %936 = vmatpush1.msra.mxu0 %v865
      %937 = vmatprep.subr.mxu0 0.0
      %938 = vmatpush1.msra.mxu0 %v864
      %939 = vmatprep.subr.mxu0 0.0
      %940 = vmatpush1.msra.mxu0 %v863
      %941 = vmatprep.subr.mxu0 0.0
      %942 = vmatpush1.msra.mxu0 %v862
      %943 = vmatprep.subr.mxu0 0.0
      %944 = vmatpush1.msra.mxu0 %v861
      %945 = vmatprep.subr.mxu0 0.0
      %946 = vmatpush1.msra.mxu0 %v860
      %947 = vmatprep.subr.mxu0 0.0
      %948 = vmatpush1.msra.mxu0 %v859
      %949 = vmatprep.subr.mxu0 0.0
      %950 = vmatpush1.msra.mxu0 %v858
      %951 = vmatprep.subr.mxu0 0.0
      %952 = vmatpush1.msra.mxu0 %v857
      %953 = vmatprep.subr.mxu0 0.0
      %954 = vmatpush2.msra.mxu0 0.0
      %955 = vmatprep.subr.mxu0 0.0
      %956 = vmatpush2.msra.mxu0 0.0
      %957 = vmatprep.subr.mxu0 0.0
      %958 = vmatpush2.msra.mxu0 0.0
      %959 = vmatprep.subr.mxu0 0.0
      %960 = vmatpush2.msra.mxu0 0.0
      %961 = vmatprep.subr.mxu0 0.0
      %962 = vmatpush2.msra.mxu0 0.0
      %963 = vmatprep.subr.mxu0 0.0
      %964 = vmatpush2.msra.mxu0 0.0
      %965 = vmatprep.subr.mxu0 0.0
      %966 = vmatpush2.msra.mxu0 0.0
      %967 = vmatprep.subr.mxu0 0.0
      %968 = vmatpush2.msra.mxu0 0.0
      %969 = vmatprep.subr.mxu0 0.0
      %970 = vmatpush2.msra.mxu0 0.0
      %971 = vmatprep.subr.mxu0 0.0
      %972 = vmatpush2.msra.mxu0 0.0
      %973 = vmatprep.subr.mxu0 0.0
      %974 = vmatpush2.msra.mxu0 0.0
      %975 = vmatprep.subr.mxu0 0.0
      %976 = vmatpush2.msra.mxu0 0.0
      %977 = vmatprep.subr.mxu0 0.0
      %978 = vmatpush2.msra.mxu0 0.0
      %979 = vmatprep.subr.mxu0 0.0
      %980 = vmatpush2.msra.mxu0 0.0
      %981 = vmatprep.subr.mxu0 0.0
      %982 = vmatpush2.msra.mxu0 0.0
      %983 = vmatprep.subr.mxu0 0.0
      %984 = vmatpush2.msra.mxu0 0.0
      %985 = vmatprep.mubr.f32.mxu0 0.0
      %986 = vmatmul.mubr.f32.gmra.mxu0 %v512
      %v987 = vpop.f32.mrf.mxu0
      %v988 = vadd.f32 0.0, %v987
      %v989 = vpop.f32.mrf.mxu0
      %990 = vdwg.mxu0
      %991 = vmatprep.subr.mxu0 0.0
      %992 = vmatpush1.msra.mxu0 %v888
      %993 = vmatprep.subr.mxu0 0.0
      %994 = vmatpush1.msra.mxu0 %v887
      %995 = vmatprep.subr.mxu0 0.0
      %996 = vmatpush1.msra.mxu0 %v886
      %997 = vmatprep.subr.mxu0 0.0
      %998 = vmatpush1.msra.mxu0 %v885
      %999 = vmatprep.subr.mxu0 0.0
      %1000 = vmatpush1.msra.mxu0 %v884
      %1001 = vmatprep.subr.mxu0 0.0
      %1002 = vmatpush1.msra.mxu0 %v883
      %1003 = vmatprep.subr.mxu0 0.0
      %1004 = vmatpush1.msra.mxu0 %v882
      %1005 = vmatprep.subr.mxu0 0.0
      %1006 = vmatpush1.msra.mxu0 %v881
      %1007 = vmatprep.subr.mxu0 0.0
      %1008 = vmatpush1.msra.mxu0 %v880
      %1009 = vmatprep.subr.mxu0 0.0
      %1010 = vmatpush1.msra.mxu0 %v879
      %1011 = vmatprep.subr.mxu0 0.0
      %1012 = vmatpush1.msra.mxu0 %v878
      %1013 = vmatprep.subr.mxu0 0.0
      %1014 = vmatpush1.msra.mxu0 %v877
      %1015 = vmatprep.subr.mxu0 0.0
      %1016 = vmatpush1.msra.mxu0 %v876
      %1017 = vmatprep.subr.mxu0 0.0
      %1018 = vmatpush1.msra.mxu0 %v875
      %1019 = vmatprep.subr.mxu0 0.0
      %1020 = vmatpush1.msra.mxu0 %v874
      %1021 = vmatprep.subr.mxu0 0.0
      %1022 = vmatpush1.msra.mxu0 %v873
      %1023 = vmatprep.subr.mxu0 0.0
      %1024 = vmatpush2.msra.mxu0 0.0
      %1025 = vmatprep.subr.mxu0 0.0
      %1026 = vmatpush2.msra.mxu0 0.0
      %1027 = vmatprep.subr.mxu0 0.0
      %1028 = vmatpush2.msra.mxu0 0.0
      %1029 = vmatprep.subr.mxu0 0.0
      %1030 = vmatpush2.msra.mxu0 0.0
      %1031 = vmatprep.subr.mxu0 0.0
      %1032 = vmatpush2.msra.mxu0 0.0
      %1033 = vmatprep.subr.mxu0 0.0
      %1034 = vmatpush2.msra.mxu0 0.0
      %1035 = vmatprep.subr.mxu0 0.0
      %1036 = vmatpush2.msra.mxu0 0.0
      %1037 = vmatprep.subr.mxu0 0.0
      %1038 = vmatpush2.msra.mxu0 0.0
      %1039 = vmatprep.subr.mxu0 0.0
      %1040 = vmatpush2.msra.mxu0 0.0
      %1041 = vmatprep.subr.mxu0 0.0
      %1042 = vmatpush2.msra.mxu0 0.0
      %1043 = vmatprep.subr.mxu0 0.0
      %1044 = vmatpush2.msra.mxu0 0.0
      %1045 = vmatprep.subr.mxu0 0.0
      %1046 = vmatpush2.msra.mxu0 0.0
      %1047 = vmatprep.subr.mxu0 0.0
      %1048 = vmatpush2.msra.mxu0 0.0
      %1049 = vmatprep.subr.mxu0 0.0
      %1050 = vmatpush2.msra.mxu0 0.0
      %1051 = vmatprep.subr.mxu0 0.0
      %1052 = vmatpush2.msra.mxu0 0.0
      %1053 = vmatprep.subr.mxu0 0.0
      %1054 = vmatpush2.msra.mxu0 0.0
      %1055 = vmatprep.mubr.f32.mxu0 0.0
      %1056 = vmatmul.mubr.f32.gmra.mxu0 %v512
      %v1057 = vpop.f32.mrf.mxu0
      %v1058 = vadd.f32 0.0, %v1057
      %v1059 = vpop.f32.mrf.mxu0
      %1060 = vdwg.mxu0
      %1061 = vmatprep.subr.mxu0 0.0
      %1062 = vmatpush1.msra.mxu0 %v904
      %1063 = vmatprep.subr.mxu0 0.0
      %1064 = vmatpush1.msra.mxu0 %v903
      %1065 = vmatprep.subr.mxu0 0.0
      %1066 = vmatpush1.msra.mxu0 %v902
      %1067 = vmatprep.subr.mxu0 0.0
      %1068 = vmatpush1.msra.mxu0 %v901
      %1069 = vmatprep.subr.mxu0 0.0
      %1070 = vmatpush1.msra.mxu0 %v900
      %1071 = vmatprep.subr.mxu0 0.0
      %1072 = vmatpush1.msra.mxu0 %v899
      %1073 = vmatprep.subr.mxu0 0.0
      %1074 = vmatpush1.msra.mxu0 %v898
      %1075 = vmatprep.subr.mxu0 0.0
      %1076 = vmatpush1.msra.mxu0 %v897
      %1077 = vmatprep.subr.mxu0 0.0
      %1078 = vmatpush1.msra.mxu0 %v896
      %1079 = vmatprep.subr.mxu0 0.0
      %1080 = vmatpush1.msra.mxu0 %v895
      %1081 = vmatprep.subr.mxu0 0.0
      %1082 = vmatpush1.msra.mxu0 %v894
      %1083 = vmatprep.subr.mxu0 0.0
      %1084 = vmatpush1.msra.mxu0 %v893
      %1085 = vmatprep.subr.mxu0 0.0
      %1086 = vmatpush1.msra.mxu0 %v892
      %1087 = vmatprep.subr.mxu0 0.0
      %1088 = vmatpush1.msra.mxu0 %v891
      %1089 = vmatprep.subr.mxu0 0.0
      %1090 = vmatpush1.msra.mxu0 %v890
      %1091 = vmatprep.subr.mxu0 0.0
      %1092 = vmatpush1.msra.mxu0 %v889
      %1093 = vmatprep.subr.mxu0 0.0
      %1094 = vmatpush2.msra.mxu0 0.0
      %1095 = vmatprep.subr.mxu0 0.0
      %1096 = vmatpush2.msra.mxu0 0.0
      %1097 = vmatprep.subr.mxu0 0.0
      %1098 = vmatpush2.msra.mxu0 0.0
      %1099 = vmatprep.subr.mxu0 0.0
      %1100 = vmatpush2.msra.mxu0 0.0
      %1101 = vmatprep.subr.mxu0 0.0
      %1102 = vmatpush2.msra.mxu0 0.0
      %1103 = vmatprep.subr.mxu0 0.0
      %1104 = vmatpush2.msra.mxu0 0.0
      %1105 = vmatprep.subr.mxu0 0.0
      %1106 = vmatpush2.msra.mxu0 0.0
      %1107 = vmatprep.subr.mxu0 0.0
      %1108 = vmatpush2.msra.mxu0 0.0
      %1109 = vmatprep.subr.mxu0 0.0
      %1110 = vmatpush2.msra.mxu0 0.0
      %1111 = vmatprep.subr.mxu0 0.0
      %1112 = vmatpush2.msra.mxu0 0.0
      %1113 = vmatprep.subr.mxu0 0.0
      %1114 = vmatpush2.msra.mxu0 0.0
      %1115 = vmatprep.subr.mxu0 0.0
      %1116 = vmatpush2.msra.mxu0 0.0
      %1117 = vmatprep.subr.mxu0 0.0
      %1118 = vmatpush2.msra.mxu0 0.0
      %1119 = vmatprep.subr.mxu0 0.0
      %1120 = vmatpush2.msra.mxu0 0.0
      %1121 = vmatprep.subr.mxu0 0.0
      %1122 = vmatpush2.msra.mxu0 0.0
      %1123 = vmatprep.subr.mxu0 0.0
      %1124 = vmatpush2.msra.mxu0 0.0
      %1125 = vmatprep.mubr.f32.mxu0 0.0
      %1126 = vmatmul.mubr.f32.gmra.mxu0 %v512
      %v1127 = vpop.f32.mrf.mxu0
      %v1128 = vadd.f32 0.0, %v1127
      %v1129 = vpop.f32.mrf.mxu0
      %1130 = vdwg.mxu0
      %1131 = vmatprep.subr.mxu0 0.0
      %1132 = vmatpush1.msra.mxu0 %v920
      %1133 = vmatprep.subr.mxu0 0.0
      %1134 = vmatpush1.msra.mxu0 %v919
      %1135 = vmatprep.subr.mxu0 0.0
      %1136 = vmatpush1.msra.mxu0 %v918
      %1137 = vmatprep.subr.mxu0 0.0
      %1138 = vmatpush1.msra.mxu0 %v917
      %1139 = vmatprep.subr.mxu0 0.0
      %1140 = vmatpush1.msra.mxu0 %v916
      %1141 = vmatprep.subr.mxu0 0.0
      %1142 = vmatpush1.msra.mxu0 %v915
      %1143 = vmatprep.subr.mxu0 0.0
      %1144 = vmatpush1.msra.mxu0 %v914
      %1145 = vmatprep.subr.mxu0 0.0
      %1146 = vmatpush1.msra.mxu0 %v913
      %1147 = vmatprep.subr.mxu0 0.0
      %1148 = vmatpush1.msra.mxu0 %v912
      %1149 = vmatprep.subr.mxu0 0.0
      %1150 = vmatpush1.msra.mxu0 %v911
      %1151 = vmatprep.subr.mxu0 0.0
      %1152 = vmatpush1.msra.mxu0 %v910
      %1153 = vmatprep.subr.mxu0 0.0
      %1154 = vmatpush1.msra.mxu0 %v909
      %1155 = vmatprep.subr.mxu0 0.0
      %1156 = vmatpush1.msra.mxu0 %v908
      %1157 = vmatprep.subr.mxu0 0.0
      %1158 = vmatpush1.msra.mxu0 %v907
      %1159 = vmatprep.subr.mxu0 0.0
      %1160 = vmatpush1.msra.mxu0 %v906
      %1161 = vmatprep.subr.mxu0 0.0
      %1162 = vmatpush1.msra.mxu0 %v905
      %1163 = vmatprep.subr.mxu0 0.0
      %1164 = vmatpush2.msra.mxu0 0.0
      %1165 = vmatprep.subr.mxu0 0.0
      %1166 = vmatpush2.msra.mxu0 0.0
      %1167 = vmatprep.subr.mxu0 0.0
      %1168 = vmatpush2.msra.mxu0 0.0
      %1169 = vmatprep.subr.mxu0 0.0
      %1170 = vmatpush2.msra.mxu0 0.0
      %1171 = vmatprep.subr.mxu0 0.0
      %1172 = vmatpush2.msra.mxu0 0.0
      %1173 = vmatprep.subr.mxu0 0.0
      %1174 = vmatpush2.msra.mxu0 0.0
      %1175 = vmatprep.subr.mxu0 0.0
      %1176 = vmatpush2.msra.mxu0 0.0
      %1177 = vmatprep.subr.mxu0 0.0
      %1178 = vmatpush2.msra.mxu0 0.0
      %1179 = vmatprep.subr.mxu0 0.0
      %1180 = vmatpush2.msra.mxu0 0.0
      %1181 = vmatprep.subr.mxu0 0.0
      %1182 = vmatpush2.msra.mxu0 0.0
      %1183 = vmatprep.subr.mxu0 0.0
      %1184 = vmatpush2.msra.mxu0 0.0
      %1185 = vmatprep.subr.mxu0 0.0
      %1186 = vmatpush2.msra.mxu0 0.0
      %1187 = vmatprep.subr.mxu0 0.0
      %1188 = vmatpush2.msra.mxu0 0.0
      %1189 = vmatprep.subr.mxu0 0.0
      %1190 = vmatpush2.msra.mxu0 0.0
      %1191 = vmatprep.subr.mxu0 0.0
      %1192 = vmatpush2.msra.mxu0 0.0
      %1193 = vmatprep.subr.mxu0 0.0
      %1194 = vmatpush2.msra.mxu0 0.0
      %1195 = vmatprep.mubr.f32.mxu0 0.0
      %1196 = vmatmul.mubr.f32.gmra.mxu0 %v512
      %v1197 = vpop.f32.mrf.mxu0
      %v1198 = vadd.f32 0.0, %v1197
      %v1199 = vpop.f32.mrf.mxu0
      %1200 = vdwg.mxu0
      %v1201 = vld [vmem:[%s464] sm:$0xff]
      %v1202 = vld [vmem:[%s464 + $0x8] sm:$0xff]
      %v1203 = vld [vmem:[%s464 + $0x10] sm:$0xff]
      %v1204 = vld [vmem:[%s464 + $0x18] sm:$0xff]
      %v1205 = vld [vmem:[%s464 + $0x20] sm:$0xff]
      %v1206 = vld [vmem:[%s464 + $0x28] sm:$0xff]
      %v1207 = vld [vmem:[%s464 + $0x30] sm:$0xff]
      %v1208 = vld [vmem:[%s464 + $0x38] sm:$0xff]
      %v1209 = vld [vmem:[%s464 + $0x40] sm:$0xff]
      %v1210 = vld [vmem:[%s464 + $0x48] sm:$0xff]
      %v1211 = vld [vmem:[%s464 + $0x50] sm:$0xff]
      %v1212 = vld [vmem:[%s464 + $0x58] sm:$0xff]
      %v1213 = vld [vmem:[%s464 + $0x60] sm:$0xff]
      %v1214 = vld [vmem:[%s464 + $0x68] sm:$0xff]
      %v1215 = vld [vmem:[%s464 + $0x70] sm:$0xff]
      %v1216 = vld [vmem:[%s464 + $0x78] sm:$0xff]
      %v1217 = vld [vmem:[%s464 + $0x80] sm:$0xff]
      %v1218 = vld [vmem:[%s464 + $0x88] sm:$0xff]
      %v1219 = vld [vmem:[%s464 + $0x90] sm:$0xff]
      %v1220 = vld [vmem:[%s464 + $0x98] sm:$0xff]
      %v1221 = vld [vmem:[%s464 + $0xa0] sm:$0xff]
      %v1222 = vld [vmem:[%s464 + $0xa8] sm:$0xff]
      %v1223 = vld [vmem:[%s464 + $0xb0] sm:$0xff]
      %v1224 = vld [vmem:[%s464 + $0xb8] sm:$0xff]
      %v1225 = vld [vmem:[%s464 + $0xc0] sm:$0xff]
      %v1226 = vld [vmem:[%s464 + $0xc8] sm:$0xff]
      %v1227 = vld [vmem:[%s464 + $0xd0] sm:$0xff]
      %v1228 = vld [vmem:[%s464 + $0xd8] sm:$0xff]
      %v1229 = vld [vmem:[%s464 + $0xe0] sm:$0xff]
      %v1230 = vld [vmem:[%s464 + $0xe8] sm:$0xff]
      %v1231 = vld [vmem:[%s464 + $0xf0] sm:$0xff]
      %v1232 = vld [vmem:[%s464 + $0xf8] sm:$0xff]
      %v1233 = vld [vmem:[%s464 + $0x100] sm:$0xff]
      %v1234 = vld [vmem:[%s464 + $0x108] sm:$0xff]
      %v1235 = vld [vmem:[%s464 + $0x110] sm:$0xff]
      %v1236 = vld [vmem:[%s464 + $0x118] sm:$0xff]
      %v1237 = vld [vmem:[%s464 + $0x120] sm:$0xff]
      %v1238 = vld [vmem:[%s464 + $0x128] sm:$0xff]
      %v1239 = vld [vmem:[%s464 + $0x130] sm:$0xff]
      %v1240 = vld [vmem:[%s464 + $0x138] sm:$0xff]
      %v1241 = vld [vmem:[%s464 + $0x140] sm:$0xff]
      %v1242 = vld [vmem:[%s464 + $0x148] sm:$0xff]
      %v1243 = vld [vmem:[%s464 + $0x150] sm:$0xff]
      %v1244 = vld [vmem:[%s464 + $0x158] sm:$0xff]
      %v1245 = vld [vmem:[%s464 + $0x160] sm:$0xff]
      %v1246 = vld [vmem:[%s464 + $0x168] sm:$0xff]
      %v1247 = vld [vmem:[%s464 + $0x170] sm:$0xff]
      %v1248 = vld [vmem:[%s464 + $0x178] sm:$0xff]
      %v1249 = vld [vmem:[%s464 + $0x180] sm:$0xff]
      %v1250 = vld [vmem:[%s464 + $0x188] sm:$0xff]
      %v1251 = vld [vmem:[%s464 + $0x190] sm:$0xff]
      %v1252 = vld [vmem:[%s464 + $0x198] sm:$0xff]
      %v1253 = vld [vmem:[%s464 + $0x1a0] sm:$0xff]
      %v1254 = vld [vmem:[%s464 + $0x1a8] sm:$0xff]
      %v1255 = vld [vmem:[%s464 + $0x1b0] sm:$0xff]
      %v1256 = vld [vmem:[%s464 + $0x1b8] sm:$0xff]
      %v1257 = vld [vmem:[%s464 + $0x1c0] sm:$0xff]
      %v1258 = vld [vmem:[%s464 + $0x1c8] sm:$0xff]
      %v1259 = vld [vmem:[%s464 + $0x1d0] sm:$0xff]
      %v1260 = vld [vmem:[%s464 + $0x1d8] sm:$0xff]
      %v1261 = vld [vmem:[%s464 + $0x1e0] sm:$0xff]
      %v1262 = vld [vmem:[%s464 + $0x1e8] sm:$0xff]
      %v1263 = vld [vmem:[%s464 + $0x1f0] sm:$0xff]
      %v1264 = vld [vmem:[%s464 + $0x1f8] sm:$0xff]
      %1265 = vmatprep.subr.mxu0 0.0
      %1266 = vmatpush1.msra.mxu0 %v1216
      %1267 = vmatprep.subr.mxu0 0.0
      %1268 = vmatpush1.msra.mxu0 %v1215
      %1269 = vmatprep.subr.mxu0 0.0
      %1270 = vmatpush1.msra.mxu0 %v1214
      %1271 = vmatprep.subr.mxu0 0.0
      %1272 = vmatpush1.msra.mxu0 %v1213
      %1273 = vmatprep.subr.mxu0 0.0
      %1274 = vmatpush1.msra.mxu0 %v1212
      %1275 = vmatprep.subr.mxu0 0.0
      %1276 = vmatpush1.msra.mxu0 %v1211
      %1277 = vmatprep.subr.mxu0 0.0
      %1278 = vmatpush1.msra.mxu0 %v1210
      %1279 = vmatprep.subr.mxu0 0.0
      %1280 = vmatpush1.msra.mxu0 %v1209
      %1281 = vmatprep.subr.mxu0 0.0
      %1282 = vmatpush1.msra.mxu0 %v1208
      %1283 = vmatprep.subr.mxu0 0.0
      %1284 = vmatpush1.msra.mxu0 %v1207
      %1285 = vmatprep.subr.mxu0 0.0
      %1286 = vmatpush1.msra.mxu0 %v1206
      %1287 = vmatprep.subr.mxu0 0.0
      %1288 = vmatpush1.msra.mxu0 %v1205
      %1289 = vmatprep.subr.mxu0 0.0
      %1290 = vmatpush1.msra.mxu0 %v1204
      %1291 = vmatprep.subr.mxu0 0.0
      %1292 = vmatpush1.msra.mxu0 %v1203
      %1293 = vmatprep.subr.mxu0 0.0
      %1294 = vmatpush1.msra.mxu0 %v1202
      %1295 = vmatprep.subr.mxu0 0.0
      %1296 = vmatpush1.msra.mxu0 %v1201
      %1297 = vmatprep.subr.mxu0 0.0
      %1298 = vmatpush2.msra.mxu0 0.0
      %1299 = vmatprep.subr.mxu0 0.0
      %1300 = vmatpush2.msra.mxu0 0.0
      %1301 = vmatprep.subr.mxu0 0.0
      %1302 = vmatpush2.msra.mxu0 0.0
      %1303 = vmatprep.subr.mxu0 0.0
      %1304 = vmatpush2.msra.mxu0 0.0
      %1305 = vmatprep.subr.mxu0 0.0
      %1306 = vmatpush2.msra.mxu0 0.0
      %1307 = vmatprep.subr.mxu0 0.0
      %1308 = vmatpush2.msra.mxu0 0.0
      %1309 = vmatprep.subr.mxu0 0.0
      %1310 = vmatpush2.msra.mxu0 0.0
      %1311 = vmatprep.subr.mxu0 0.0
      %1312 = vmatpush2.msra.mxu0 0.0
      %1313 = vmatprep.subr.mxu0 0.0
      %1314 = vmatpush2.msra.mxu0 0.0
      %1315 = vmatprep.subr.mxu0 0.0
      %1316 = vmatpush2.msra.mxu0 0.0
      %1317 = vmatprep.subr.mxu0 0.0
      %1318 = vmatpush2.msra.mxu0 0.0
      %1319 = vmatprep.subr.mxu0 0.0
      %1320 = vmatpush2.msra.mxu0 0.0
      %1321 = vmatprep.subr.mxu0 0.0
      %1322 = vmatpush2.msra.mxu0 0.0
      %1323 = vmatprep.subr.mxu0 0.0
      %1324 = vmatpush2.msra.mxu0 0.0
      %1325 = vmatprep.subr.mxu0 0.0
      %1326 = vmatpush2.msra.mxu0 0.0
      %1327 = vmatprep.subr.mxu0 0.0
      %1328 = vmatpush2.msra.mxu0 0.0
      %1329 = vmatprep.mubr.f32.mxu0 0.0
      %1330 = vmatmul.mubr.f32.gmra.mxu0 %v512
      %v1331 = vpop.f32.mrf.mxu0
      %v1332 = vadd.f32 0.0, %v1331
      %v1333 = vpop.f32.mrf.mxu0
      %1334 = vdwg.mxu0
      %1335 = vmatprep.subr.mxu0 0.0
      %1336 = vmatpush1.msra.mxu0 %v1232
      %1337 = vmatprep.subr.mxu0 0.0
      %1338 = vmatpush1.msra.mxu0 %v1231
      %1339 = vmatprep.subr.mxu0 0.0
      %1340 = vmatpush1.msra.mxu0 %v1230
      %1341 = vmatprep.subr.mxu0 0.0
      %1342 = vmatpush1.msra.mxu0 %v1229
      %1343 = vmatprep.subr.mxu0 0.0
      %1344 = vmatpush1.msra.mxu0 %v1228
      %1345 = vmatprep.subr.mxu0 0.0
      %1346 = vmatpush1.msra.mxu0 %v1227
      %1347 = vmatprep.subr.mxu0 0.0
      %1348 = vmatpush1.msra.mxu0 %v1226
      %1349 = vmatprep.subr.mxu0 0.0
      %1350 = vmatpush1.msra.mxu0 %v1225
      %1351 = vmatprep.subr.mxu0 0.0
      %1352 = vmatpush1.msra.mxu0 %v1224
      %1353 = vmatprep.subr.mxu0 0.0
      %1354 = vmatpush1.msra.mxu0 %v1223
      %1355 = vmatprep.subr.mxu0 0.0
      %1356 = vmatpush1.msra.mxu0 %v1222
      %1357 = vmatprep.subr.mxu0 0.0
      %1358 = vmatpush1.msra.mxu0 %v1221
      %1359 = vmatprep.subr.mxu0 0.0
      %1360 = vmatpush1.msra.mxu0 %v1220
      %1361 = vmatprep.subr.mxu0 0.0
      %1362 = vmatpush1.msra.mxu0 %v1219
      %1363 = vmatprep.subr.mxu0 0.0
      %1364 = vmatpush1.msra.mxu0 %v1218
      %1365 = vmatprep.subr.mxu0 0.0
      %1366 = vmatpush1.msra.mxu0 %v1217
      %1367 = vmatprep.subr.mxu0 0.0
      %1368 = vmatpush2.msra.mxu0 0.0
      %1369 = vmatprep.subr.mxu0 0.0
      %1370 = vmatpush2.msra.mxu0 0.0
      %1371 = vmatprep.subr.mxu0 0.0
      %1372 = vmatpush2.msra.mxu0 0.0
      %1373 = vmatprep.subr.mxu0 0.0
      %1374 = vmatpush2.msra.mxu0 0.0
      %1375 = vmatprep.subr.mxu0 0.0
      %1376 = vmatpush2.msra.mxu0 0.0
      %1377 = vmatprep.subr.mxu0 0.0
      %1378 = vmatpush2.msra.mxu0 0.0
      %1379 = vmatprep.subr.mxu0 0.0
      %1380 = vmatpush2.msra.mxu0 0.0
      %1381 = vmatprep.subr.mxu0 0.0
      %1382 = vmatpush2.msra.mxu0 0.0
      %1383 = vmatprep.subr.mxu0 0.0
      %1384 = vmatpush2.msra.mxu0 0.0
      %1385 = vmatprep.subr.mxu0 0.0
      %1386 = vmatpush2.msra.mxu0 0.0
      %1387 = vmatprep.subr.mxu0 0.0
      %1388 = vmatpush2.msra.mxu0 0.0
      %1389 = vmatprep.subr.mxu0 0.0
      %1390 = vmatpush2.msra.mxu0 0.0
      %1391 = vmatprep.subr.mxu0 0.0
      %1392 = vmatpush2.msra.mxu0 0.0
      %1393 = vmatprep.subr.mxu0 0.0
      %1394 = vmatpush2.msra.mxu0 0.0
      %1395 = vmatprep.subr.mxu0 0.0
      %1396 = vmatpush2.msra.mxu0 0.0
      %1397 = vmatprep.subr.mxu0 0.0
      %1398 = vmatpush2.msra.mxu0 0.0
      %1399 = vmatprep.mubr.f32.mxu0 0.0
      %1400 = vmatmul.mubr.f32.gmra.mxu0 %v512
      %v1401 = vpop.f32.mrf.mxu0
      %v1402 = vadd.f32 0.0, %v1401
      %v1403 = vpop.f32.mrf.mxu0
      %1404 = vdwg.mxu0
      %1405 = vmatprep.subr.mxu0 0.0
      %1406 = vmatpush1.msra.mxu0 %v1248
      %1407 = vmatprep.subr.mxu0 0.0
      %1408 = vmatpush1.msra.mxu0 %v1247
      %1409 = vmatprep.subr.mxu0 0.0
      %1410 = vmatpush1.msra.mxu0 %v1246
      %1411 = vmatprep.subr.mxu0 0.0
      %1412 = vmatpush1.msra.mxu0 %v1245
      %1413 = vmatprep.subr.mxu0 0.0
      %1414 = vmatpush1.msra.mxu0 %v1244
      %1415 = vmatprep.subr.mxu0 0.0
      %1416 = vmatpush1.msra.mxu0 %v1243
      %1417 = vmatprep.subr.mxu0 0.0
      %1418 = vmatpush1.msra.mxu0 %v1242
      %1419 = vmatprep.subr.mxu0 0.0
      %1420 = vmatpush1.msra.mxu0 %v1241
      %1421 = vmatprep.subr.mxu0 0.0
      %1422 = vmatpush1.msra.mxu0 %v1240
      %1423 = vmatprep.subr.mxu0 0.0
      %1424 = vmatpush1.msra.mxu0 %v1239
      %1425 = vmatprep.subr.mxu0 0.0
      %1426 = vmatpush1.msra.mxu0 %v1238
      %1427 = vmatprep.subr.mxu0 0.0
      %1428 = vmatpush1.msra.mxu0 %v1237
      %1429 = vmatprep.subr.mxu0 0.0
      %1430 = vmatpush1.msra.mxu0 %v1236
      %1431 = vmatprep.subr.mxu0 0.0
      %1432 = vmatpush1.msra.mxu0 %v1235
      %1433 = vmatprep.subr.mxu0 0.0
      %1434 = vmatpush1.msra.mxu0 %v1234
      %1435 = vmatprep.subr.mxu0 0.0
      %1436 = vmatpush1.msra.mxu0 %v1233
      %1437 = vmatprep.subr.mxu0 0.0
      %1438 = vmatpush2.msra.mxu0 0.0
      %1439 = vmatprep.subr.mxu0 0.0
      %1440 = vmatpush2.msra.mxu0 0.0
      %1441 = vmatprep.subr.mxu0 0.0
      %1442 = vmatpush2.msra.mxu0 0.0
      %1443 = vmatprep.subr.mxu0 0.0
      %1444 = vmatpush2.msra.mxu0 0.0
      %1445 = vmatprep.subr.mxu0 0.0
      %1446 = vmatpush2.msra.mxu0 0.0
      %1447 = vmatprep.subr.mxu0 0.0
      %1448 = vmatpush2.msra.mxu0 0.0
      %1449 = vmatprep.subr.mxu0 0.0
      %1450 = vmatpush2.msra.mxu0 0.0
      %1451 = vmatprep.subr.mxu0 0.0
      %1452 = vmatpush2.msra.mxu0 0.0
      %1453 = vmatprep.subr.mxu0 0.0
      %1454 = vmatpush2.msra.mxu0 0.0
      %1455 = vmatprep.subr.mxu0 0.0
      %1456 = vmatpush2.msra.mxu0 0.0
      %1457 = vmatprep.subr.mxu0 0.0
      %1458 = vmatpush2.msra.mxu0 0.0
      %1459 = vmatprep.subr.mxu0 0.0
      %1460 = vmatpush2.msra.mxu0 0.0
      %1461 = vmatprep.subr.mxu0 0.0
      %1462 = vmatpush2.msra.mxu0 0.0
      %1463 = vmatprep.subr.mxu0 0.0
      %1464 = vmatpush2.msra.mxu0 0.0
      %1465 = vmatprep.subr.mxu0 0.0
      %1466 = vmatpush2.msra.mxu0 0.0
      %1467 = vmatprep.subr.mxu0 0.0
      %1468 = vmatpush2.msra.mxu0 0.0
      %1469 = vmatprep.mubr.f32.mxu0 0.0
      %1470 = vmatmul.mubr.f32.gmra.mxu0 %v512
      %v1471 = vpop.f32.mrf.mxu0
      %v1472 = vadd.f32 0.0, %v1471
      %v1473 = vpop.f32.mrf.mxu0
      %1474 = vdwg.mxu0
      %1475 = vmatprep.subr.mxu0 0.0
      %1476 = vmatpush1.msra.mxu0 %v1264
      %1477 = vmatprep.subr.mxu0 0.0
      %1478 = vmatpush1.msra.mxu0 %v1263
      %1479 = vmatprep.subr.mxu0 0.0
      %1480 = vmatpush1.msra.mxu0 %v1262
      %1481 = vmatprep.subr.mxu0 0.0
      %1482 = vmatpush1.msra.mxu0 %v1261
      %1483 = vmatprep.subr.mxu0 0.0
      %1484 = vmatpush1.msra.mxu0 %v1260
      %1485 = vmatprep.subr.mxu0 0.0
      %1486 = vmatpush1.msra.mxu0 %v1259
      %1487 = vmatprep.subr.mxu0 0.0
      %1488 = vmatpush1.msra.mxu0 %v1258
      %1489 = vmatprep.subr.mxu0 0.0
      %1490 = vmatpush1.msra.mxu0 %v1257
      %1491 = vmatprep.subr.mxu0 0.0
      %1492 = vmatpush1.msra.mxu0 %v1256
      %1493 = vmatprep.subr.mxu0 0.0
      %1494 = vmatpush1.msra.mxu0 %v1255
      %1495 = vmatprep.subr.mxu0 0.0
      %1496 = vmatpush1.msra.mxu0 %v1254
      %1497 = vmatprep.subr.mxu0 0.0
      %1498 = vmatpush1.msra.mxu0 %v1253
      %1499 = vmatprep.subr.mxu0 0.0
      %1500 = vmatpush1.msra.mxu0 %v1252
      %1501 = vmatprep.subr.mxu0 0.0
      %1502 = vmatpush1.msra.mxu0 %v1251
      %1503 = vmatprep.subr.mxu0 0.0
      %1504 = vmatpush1.msra.mxu0 %v1250
      %1505 = vmatprep.subr.mxu0 0.0
      %1506 = vmatpush1.msra.mxu0 %v1249
      %1507 = vmatprep.subr.mxu0 0.0
      %1508 = vmatpush2.msra.mxu0 0.0
      %1509 = vmatprep.subr.mxu0 0.0
      %1510 = vmatpush2.msra.mxu0 0.0
      %1511 = vmatprep.subr.mxu0 0.0
      %1512 = vmatpush2.msra.mxu0 0.0
      %1513 = vmatprep.subr.mxu0 0.0
      %1514 = vmatpush2.msra.mxu0 0.0
      %1515 = vmatprep.subr.mxu0 0.0
      %1516 = vmatpush2.msra.mxu0 0.0
      %1517 = vmatprep.subr.mxu0 0.0
      %1518 = vmatpush2.msra.mxu0 0.0
      %1519 = vmatprep.subr.mxu0 0.0
      %1520 = vmatpush2.msra.mxu0 0.0
      %1521 = vmatprep.subr.mxu0 0.0
      %1522 = vmatpush2.msra.mxu0 0.0
      %1523 = vmatprep.subr.mxu0 0.0
      %1524 = vmatpush2.msra.mxu0 0.0
      %1525 = vmatprep.subr.mxu0 0.0
      %1526 = vmatpush2.msra.mxu0 0.0
      %1527 = vmatprep.subr.mxu0 0.0
      %1528 = vmatpush2.msra.mxu0 0.0
      %1529 = vmatprep.subr.mxu0 0.0
      %1530 = vmatpush2.msra.mxu0 0.0
      %1531 = vmatprep.subr.mxu0 0.0
      %1532 = vmatpush2.msra.mxu0 0.0
      %1533 = vmatprep.subr.mxu0 0.0
      %1534 = vmatpush2.msra.mxu0 0.0
      %1535 = vmatprep.subr.mxu0 0.0
      %1536 = vmatpush2.msra.mxu0 0.0
      %1537 = vmatprep.subr.mxu0 0.0
      %1538 = vmatpush2.msra.mxu0 0.0
      %1539 = vmatprep.mubr.f32.mxu0 0.0
      %1540 = vmatmul.mubr.f32.gmra.mxu0 %v512
      %v1541 = vpop.f32.mrf.mxu0
      %v1542 = vadd.f32 0.0, %v1541
      %v1543 = vpop.f32.mrf.mxu0
      %1544 = vdwg.mxu0
      %vm1545 = vcmask 261120
      %v1547 = vsel %vm1545, %v644, 0
      %v1550 = vsel %vm1545, %v988, 0
      %1552 = vmatprep.subr.mxu0 0.0
      %1553 = vmatpush1.xpose.msra.mxu0 0.0
      %1554 = vmatprep.subr.mxu0 0.0
      %1555 = vmatpush1.xpose.msra.mxu0 0.0
      %1556 = vmatprep.subr.mxu0 0.0
      %1557 = vmatpush1.xpose.msra.mxu0 0.0
      %1558 = vmatprep.subr.mxu0 0.0
      %1559 = vmatpush1.xpose.msra.mxu0 0.0
      %1560 = vmatprep.subr.mxu0 0.0
      %1561 = vmatpush1.xpose.msra.mxu0 0.0
      %1562 = vmatprep.subr.mxu0 0.0
      %1563 = vmatpush1.xpose.msra.mxu0 0.0
      %1564 = vmatprep.subr.mxu0 0.0
      %1565 = vmatpush1.xpose.msra.mxu0 0.0
      %1566 = vmatprep.subr.mxu0 0.0
      %1567 = vmatpush1.xpose.msra.mxu0 0.0
      %1568 = vmatprep.subr.mxu0 0.0
      %1569 = vmatpush1.xpose.msra.mxu0 0.0
      %1570 = vmatprep.subr.mxu0 0.0
      %1571 = vmatpush1.xpose.msra.mxu0 0.0
      %1572 = vmatprep.subr.mxu0 0.0
      %1573 = vmatpush1.xpose.msra.mxu0 0.0
      %1574 = vmatprep.subr.mxu0 0.0
      %1575 = vmatpush1.xpose.msra.mxu0 0.0
      %1576 = vmatprep.subr.mxu0 0.0
      %1577 = vmatpush1.xpose.msra.mxu0 0.0
      %1578 = vmatprep.subr.mxu0 0.0
      %1579 = vmatpush1.xpose.msra.mxu0 0.0
      %1580 = vmatprep.subr.mxu0 0.0
      %1581 = vmatpush1.xpose.msra.mxu0 0.0
      %1582 = vmatprep.subr.mxu0 0.0
      %1583 = vmatpush1.xpose.msra.mxu0 %v1550
      %1584 = vmatprep.subr.mxu0 0.0
      %1585 = vmatpush2.xpose.msra.mxu0 0.0
      %1586 = vmatprep.subr.mxu0 0.0
      %1587 = vmatpush2.xpose.msra.mxu0 0.0
      %1588 = vmatprep.subr.mxu0 0.0
      %1589 = vmatpush2.xpose.msra.mxu0 0.0
      %1590 = vmatprep.subr.mxu0 0.0
      %1591 = vmatpush2.xpose.msra.mxu0 0.0
      %1592 = vmatprep.subr.mxu0 0.0
      %1593 = vmatpush2.xpose.msra.mxu0 0.0
      %1594 = vmatprep.subr.mxu0 0.0
      %1595 = vmatpush2.xpose.msra.mxu0 0.0
      %1596 = vmatprep.subr.mxu0 0.0
      %1597 = vmatpush2.xpose.msra.mxu0 0.0
      %1598 = vmatprep.subr.mxu0 0.0
      %1599 = vmatpush2.xpose.msra.mxu0 0.0
      %1600 = vmatprep.subr.mxu0 0.0
      %1601 = vmatpush2.xpose.msra.mxu0 0.0
      %1602 = vmatprep.subr.mxu0 0.0
      %1603 = vmatpush2.xpose.msra.mxu0 0.0
      %1604 = vmatprep.subr.mxu0 0.0
      %1605 = vmatpush2.xpose.msra.mxu0 0.0
      %1606 = vmatprep.subr.mxu0 0.0
      %1607 = vmatpush2.xpose.msra.mxu0 0.0
      %1608 = vmatprep.subr.mxu0 0.0
      %1609 = vmatpush2.xpose.msra.mxu0 0.0
      %1610 = vmatprep.subr.mxu0 0.0
      %1611 = vmatpush2.xpose.msra.mxu0 0.0
      %1612 = vmatprep.subr.mxu0 0.0
      %1613 = vmatpush2.xpose.msra.mxu0 0.0
      %1614 = vmatprep.subr.mxu0 0.0
      %1615 = vmatpush2.xpose.msra.mxu0 0.0
      %1616 = vmatprep.mubr.f32.mxu0 0.0
      %1617 = vmatmul.mubr.f32.gmra.mxu0 %v1547
      %v1618 = vpop.f32.mrf.mxu0
      %v1619 = vadd.f32 0.0, %v1618
      %v1620 = vpop.f32.mrf.mxu0
      %1621 = vdwg.mxu0
      %v1623 = vsel %vm1545, %v714, 0
      %v1626 = vsel %vm1545, %v1058, 0
      %1628 = vmatprep.subr.mxu0 0.0
      %1629 = vmatpush1.xpose.msra.mxu0 0.0
      %1630 = vmatprep.subr.mxu0 0.0
      %1631 = vmatpush1.xpose.msra.mxu0 0.0
      %1632 = vmatprep.subr.mxu0 0.0
      %1633 = vmatpush1.xpose.msra.mxu0 0.0
      %1634 = vmatprep.subr.mxu0 0.0
      %1635 = vmatpush1.xpose.msra.mxu0 0.0
      %1636 = vmatprep.subr.mxu0 0.0
      %1637 = vmatpush1.xpose.msra.mxu0 0.0
      %1638 = vmatprep.subr.mxu0 0.0
      %1639 = vmatpush1.xpose.msra.mxu0 0.0
      %1640 = vmatprep.subr.mxu0 0.0
      %1641 = vmatpush1.xpose.msra.mxu0 0.0
      %1642 = vmatprep.subr.mxu0 0.0
      %1643 = vmatpush1.xpose.msra.mxu0 0.0
      %1644 = vmatprep.subr.mxu0 0.0
      %1645 = vmatpush1.xpose.msra.mxu0 0.0
      %1646 = vmatprep.subr.mxu0 0.0
      %1647 = vmatpush1.xpose.msra.mxu0 0.0
      %1648 = vmatprep.subr.mxu0 0.0
      %1649 = vmatpush1.xpose.msra.mxu0 0.0
      %1650 = vmatprep.subr.mxu0 0.0
      %1651 = vmatpush1.xpose.msra.mxu0 0.0
      %1652 = vmatprep.subr.mxu0 0.0
      %1653 = vmatpush1.xpose.msra.mxu0 0.0
      %1654 = vmatprep.subr.mxu0 0.0
      %1655 = vmatpush1.xpose.msra.mxu0 0.0
      %1656 = vmatprep.subr.mxu0 0.0
      %1657 = vmatpush1.xpose.msra.mxu0 0.0
      %1658 = vmatprep.subr.mxu0 0.0
      %1659 = vmatpush1.xpose.msra.mxu0 %v1626
      %1660 = vmatprep.subr.mxu0 0.0
      %1661 = vmatpush2.xpose.msra.mxu0 0.0
      %1662 = vmatprep.subr.mxu0 0.0
      %1663 = vmatpush2.xpose.msra.mxu0 0.0
      %1664 = vmatprep.subr.mxu0 0.0
      %1665 = vmatpush2.xpose.msra.mxu0 0.0
      %1666 = vmatprep.subr.mxu0 0.0
      %1667 = vmatpush2.xpose.msra.mxu0 0.0
      %1668 = vmatprep.subr.mxu0 0.0
      %1669 = vmatpush2.xpose.msra.mxu0 0.0
      %1670 = vmatprep.subr.mxu0 0.0
      %1671 = vmatpush2.xpose.msra.mxu0 0.0
      %1672 = vmatprep.subr.mxu0 0.0
      %1673 = vmatpush2.xpose.msra.mxu0 0.0
      %1674 = vmatprep.subr.mxu0 0.0
      %1675 = vmatpush2.xpose.msra.mxu0 0.0
      %1676 = vmatprep.subr.mxu0 0.0
      %1677 = vmatpush2.xpose.msra.mxu0 0.0
      %1678 = vmatprep.subr.mxu0 0.0
      %1679 = vmatpush2.xpose.msra.mxu0 0.0
      %1680 = vmatprep.subr.mxu0 0.0
      %1681 = vmatpush2.xpose.msra.mxu0 0.0
      %1682 = vmatprep.subr.mxu0 0.0
      %1683 = vmatpush2.xpose.msra.mxu0 0.0
      %1684 = vmatprep.subr.mxu0 0.0
      %1685 = vmatpush2.xpose.msra.mxu0 0.0
      %1686 = vmatprep.subr.mxu0 0.0
      %1687 = vmatpush2.xpose.msra.mxu0 0.0
      %1688 = vmatprep.subr.mxu0 0.0
      %1689 = vmatpush2.xpose.msra.mxu0 0.0
      %1690 = vmatprep.subr.mxu0 0.0
      %1691 = vmatpush2.xpose.msra.mxu0 0.0
      %1692 = vmatprep.mubr.f32.mxu0 0.0
      %1693 = vmatmul.mubr.f32.gmra.mxu0 %v1623
      %v1694 = vpop.f32.mrf.mxu0
      %v1695 = vadd.f32 0.0, %v1694
      %v1696 = vpop.f32.mrf.mxu0
      %1697 = vdwg.mxu0
      %v1699 = vsel %vm1545, %v784, 0
      %v1702 = vsel %vm1545, %v1128, 0
      %1704 = vmatprep.subr.mxu0 0.0
      %1705 = vmatpush1.xpose.msra.mxu0 0.0
      %1706 = vmatprep.subr.mxu0 0.0
      %1707 = vmatpush1.xpose.msra.mxu0 0.0
      %1708 = vmatprep.subr.mxu0 0.0
      %1709 = vmatpush1.xpose.msra.mxu0 0.0
      %1710 = vmatprep.subr.mxu0 0.0
      %1711 = vmatpush1.xpose.msra.mxu0 0.0
      %1712 = vmatprep.subr.mxu0 0.0
      %1713 = vmatpush1.xpose.msra.mxu0 0.0
      %1714 = vmatprep.subr.mxu0 0.0
      %1715 = vmatpush1.xpose.msra.mxu0 0.0
      %1716 = vmatprep.subr.mxu0 0.0
      %1717 = vmatpush1.xpose.msra.mxu0 0.0
      %1718 = vmatprep.subr.mxu0 0.0
      %1719 = vmatpush1.xpose.msra.mxu0 0.0
      %1720 = vmatprep.subr.mxu0 0.0
      %1721 = vmatpush1.xpose.msra.mxu0 0.0
      %1722 = vmatprep.subr.mxu0 0.0
      %1723 = vmatpush1.xpose.msra.mxu0 0.0
      %1724 = vmatprep.subr.mxu0 0.0
      %1725 = vmatpush1.xpose.msra.mxu0 0.0
      %1726 = vmatprep.subr.mxu0 0.0
      %1727 = vmatpush1.xpose.msra.mxu0 0.0
      %1728 = vmatprep.subr.mxu0 0.0
      %1729 = vmatpush1.xpose.msra.mxu0 0.0
      %1730 = vmatprep.subr.mxu0 0.0
      %1731 = vmatpush1.xpose.msra.mxu0 0.0
      %1732 = vmatprep.subr.mxu0 0.0
      %1733 = vmatpush1.xpose.msra.mxu0 0.0
      %1734 = vmatprep.subr.mxu0 0.0
      %1735 = vmatpush1.xpose.msra.mxu0 %v1702
      %1736 = vmatprep.subr.mxu0 0.0
      %1737 = vmatpush2.xpose.msra.mxu0 0.0
      %1738 = vmatprep.subr.mxu0 0.0
      %1739 = vmatpush2.xpose.msra.mxu0 0.0
      %1740 = vmatprep.subr.mxu0 0.0
      %1741 = vmatpush2.xpose.msra.mxu0 0.0
      %1742 = vmatprep.subr.mxu0 0.0
      %1743 = vmatpush2.xpose.msra.mxu0 0.0
      %1744 = vmatprep.subr.mxu0 0.0
      %1745 = vmatpush2.xpose.msra.mxu0 0.0
      %1746 = vmatprep.subr.mxu0 0.0
      %1747 = vmatpush2.xpose.msra.mxu0 0.0
      %1748 = vmatprep.subr.mxu0 0.0
      %1749 = vmatpush2.xpose.msra.mxu0 0.0
      %1750 = vmatprep.subr.mxu0 0.0
      %1751 = vmatpush2.xpose.msra.mxu0 0.0
      %1752 = vmatprep.subr.mxu0 0.0
      %1753 = vmatpush2.xpose.msra.mxu0 0.0
      %1754 = vmatprep.subr.mxu0 0.0
      %1755 = vmatpush2.xpose.msra.mxu0 0.0
      %1756 = vmatprep.subr.mxu0 0.0
      %1757 = vmatpush2.xpose.msra.mxu0 0.0
      %1758 = vmatprep.subr.mxu0 0.0
      %1759 = vmatpush2.xpose.msra.mxu0 0.0
      %1760 = vmatprep.subr.mxu0 0.0
      %1761 = vmatpush2.xpose.msra.mxu0 0.0
      %1762 = vmatprep.subr.mxu0 0.0
      %1763 = vmatpush2.xpose.msra.mxu0 0.0
      %1764 = vmatprep.subr.mxu0 0.0
      %1765 = vmatpush2.xpose.msra.mxu0 0.0
      %1766 = vmatprep.subr.mxu0 0.0
      %1767 = vmatpush2.xpose.msra.mxu0 0.0
      %1768 = vmatprep.mubr.f32.mxu0 0.0
      %1769 = vmatmul.mubr.f32.gmra.mxu0 %v1699
      %v1770 = vpop.f32.mrf.mxu0
      %v1771 = vadd.f32 0.0, %v1770
      %v1772 = vpop.f32.mrf.mxu0
      %1773 = vdwg.mxu0
      %v1775 = vsel %vm1545, %v854, 0
      %v1778 = vsel %vm1545, %v1198, 0
      %1780 = vmatprep.subr.mxu0 0.0
      %1781 = vmatpush1.xpose.msra.mxu0 0.0
      %1782 = vmatprep.subr.mxu0 0.0
      %1783 = vmatpush1.xpose.msra.mxu0 0.0
      %1784 = vmatprep.subr.mxu0 0.0
      %1785 = vmatpush1.xpose.msra.mxu0 0.0
      %1786 = vmatprep.subr.mxu0 0.0
      %1787 = vmatpush1.xpose.msra.mxu0 0.0
      %1788 = vmatprep.subr.mxu0 0.0
      %1789 = vmatpush1.xpose.msra.mxu0 0.0
      %1790 = vmatprep.subr.mxu0 0.0
      %1791 = vmatpush1.xpose.msra.mxu0 0.0
      %1792 = vmatprep.subr.mxu0 0.0
      %1793 = vmatpush1.xpose.msra.mxu0 0.0
      %1794 = vmatprep.subr.mxu0 0.0
      %1795 = vmatpush1.xpose.msra.mxu0 0.0
      %1796 = vmatprep.subr.mxu0 0.0
      %1797 = vmatpush1.xpose.msra.mxu0 0.0
      %1798 = vmatprep.subr.mxu0 0.0
      %1799 = vmatpush1.xpose.msra.mxu0 0.0
      %1800 = vmatprep.subr.mxu0 0.0
      %1801 = vmatpush1.xpose.msra.mxu0 0.0
      %1802 = vmatprep.subr.mxu0 0.0
      %1803 = vmatpush1.xpose.msra.mxu0 0.0
      %1804 = vmatprep.subr.mxu0 0.0
      %1805 = vmatpush1.xpose.msra.mxu0 0.0
      %1806 = vmatprep.subr.mxu0 0.0
      %1807 = vmatpush1.xpose.msra.mxu0 0.0
      %1808 = vmatprep.subr.mxu0 0.0
      %1809 = vmatpush1.xpose.msra.mxu0 0.0
      %1810 = vmatprep.subr.mxu0 0.0
      %1811 = vmatpush1.xpose.msra.mxu0 %v1778
      %1812 = vmatprep.subr.mxu0 0.0
      %1813 = vmatpush2.xpose.msra.mxu0 0.0
      %1814 = vmatprep.subr.mxu0 0.0
      %1815 = vmatpush2.xpose.msra.mxu0 0.0
      %1816 = vmatprep.subr.mxu0 0.0
      %1817 = vmatpush2.xpose.msra.mxu0 0.0
      %1818 = vmatprep.subr.mxu0 0.0
      %1819 = vmatpush2.xpose.msra.mxu0 0.0
      %1820 = vmatprep.subr.mxu0 0.0
      %1821 = vmatpush2.xpose.msra.mxu0 0.0
      %1822 = vmatprep.subr.mxu0 0.0
      %1823 = vmatpush2.xpose.msra.mxu0 0.0
      %1824 = vmatprep.subr.mxu0 0.0
      %1825 = vmatpush2.xpose.msra.mxu0 0.0
      %1826 = vmatprep.subr.mxu0 0.0
      %1827 = vmatpush2.xpose.msra.mxu0 0.0
      %1828 = vmatprep.subr.mxu0 0.0
      %1829 = vmatpush2.xpose.msra.mxu0 0.0
      %1830 = vmatprep.subr.mxu0 0.0
      %1831 = vmatpush2.xpose.msra.mxu0 0.0
      %1832 = vmatprep.subr.mxu0 0.0
      %1833 = vmatpush2.xpose.msra.mxu0 0.0
      %1834 = vmatprep.subr.mxu0 0.0
      %1835 = vmatpush2.xpose.msra.mxu0 0.0
      %1836 = vmatprep.subr.mxu0 0.0
      %1837 = vmatpush2.xpose.msra.mxu0 0.0
      %1838 = vmatprep.subr.mxu0 0.0
      %1839 = vmatpush2.xpose.msra.mxu0 0.0
      %1840 = vmatprep.subr.mxu0 0.0
      %1841 = vmatpush2.xpose.msra.mxu0 0.0
      %1842 = vmatprep.subr.mxu0 0.0
      %1843 = vmatpush2.xpose.msra.mxu0 0.0
      %1844 = vmatprep.mubr.f32.mxu0 0.0
      %1845 = vmatmul.mubr.f32.gmra.mxu0 %v1775
      %v1846 = vpop.f32.mrf.mxu0
      %v1847 = vadd.f32 0.0, %v1846
      %v1848 = vpop.f32.mrf.mxu0
      %1849 = vdwg.mxu0
      %v1850 = vlaneseq
      %v1851 = vshrl.u32 %v1850, 7
      %v1852 = vlaneseq
      %v1853 = vand.u32 %v1852, 127
      %vm1854 = vcmp.gt.s32.totalorder %v1853, %v1851
      %v1855 = vsel %vm1854, -inf, %v1619
      %v1856 = vsel %vm1854, -inf, %v1695
      %v1857 = vsel %vm1854, -inf, %v1771
      %v1858 = vsel %vm1854, -inf, %v1847
      %vm1859 = vcmask 64512
      %v1860 = vsel %vm1859, %v1855, -inf
      %1861 = vmax.xlane.f32.xlu0 %v1860
      %v1862 = vpop.xlane.xlu0 %1861
      %v1863 = vsel %vm1859, %v1856, -inf
      %1864 = vmax.xlane.f32.xlu0 %v1863
      %v1865 = vpop.xlane.xlu0 %1864
      %v1866 = vsel %vm1859, %v1857, -inf
      %1867 = vmax.xlane.f32.xlu0 %v1866
      %v1868 = vpop.xlane.xlu0 %1867
      %v1869 = vsel %vm1859, %v1858, -inf
      %1870 = vmax.xlane.f32.xlu0 %v1869
      %v1871 = vpop.xlane.xlu0 %1870
      %v1872 = vsub.f32 %v1855, %v1862
      %v1873 = vsub.f32 %v1856, %v1865
      %v1874 = vsub.f32 %v1857, %v1868
      %v1875 = vsub.f32 %v1858, %v1871
      %v1876 = vmul.f32 %v1872, 1.442695
      %v1877 = vpow.pop %v1876
      %v1878 = vmul.f32 %v1873, 1.442695
      %v1879 = vpow.pop %v1878
      %v1880 = vmul.f32 %v1874, 1.442695
      %v1881 = vpow.pop %v1880
      %v1882 = vmul.f32 %v1875, 1.442695
      %v1883 = vpow.pop %v1882
      %v1884 = vsel %vm1859, %v1877, 0.0
      %1885 = vadd.xlane.f32.xlu0 %v1884
      %v1886 = vpop.xlane.xlu0 %1885
      %v1887 = vsel %vm1859, %v1879, 0.0
      %1888 = vadd.xlane.f32.xlu0 %v1887
      %v1889 = vpop.xlane.xlu0 %1888
      %v1890 = vsel %vm1859, %v1881, 0.0
      %1891 = vadd.xlane.f32.xlu0 %v1890
      %v1892 = vpop.xlane.xlu0 %1891
      %v1893 = vsel %vm1859, %v1883, 0.0
      %1894 = vadd.xlane.f32.xlu0 %v1893
      %v1895 = vpop.xlane.xlu0 %1894
      %v1896 = vrcp.pop %v1886
      %v1897 = vrcp.pop %v1889
      %v1898 = vrcp.pop %v1892
      %v1899 = vrcp.pop %v1895
      %v1900 = vmul.f32 %v1877, %v1896
      %v1901 = vmul.f32 %v1879, %v1897
      %v1902 = vmul.f32 %v1881, %v1898
      %v1903 = vmul.f32 %v1883, %v1899
      %v1905 = vsel %vm1859, %v1900, 0
      %1907 = vmatprep.subr.mxu0 0.0
      %1908 = vmatpush1.msra.mxu0 0.0
      %1909 = vmatprep.subr.mxu0 0.0
      %1910 = vmatpush1.msra.mxu0 0.0
      %1911 = vmatprep.subr.mxu0 0.0
      %1912 = vmatpush1.msra.mxu0 0.0
      %1913 = vmatprep.subr.mxu0 0.0
      %1914 = vmatpush1.msra.mxu0 0.0
      %1915 = vmatprep.subr.mxu0 0.0
      %1916 = vmatpush1.msra.mxu0 0.0
      %1917 = vmatprep.subr.mxu0 0.0
      %1918 = vmatpush1.msra.mxu0 0.0
      %1919 = vmatprep.subr.mxu0 0.0
      %1920 = vmatpush1.msra.mxu0 0.0
      %1921 = vmatprep.subr.mxu0 0.0
      %1922 = vmatpush1.msra.mxu0 0.0
      %1923 = vmatprep.subr.mxu0 0.0
      %1924 = vmatpush1.msra.mxu0 0.0
      %1925 = vmatprep.subr.mxu0 0.0
      %1926 = vmatpush1.msra.mxu0 0.0
      %1927 = vmatprep.subr.mxu0 0.0
      %1928 = vmatpush1.msra.mxu0 0.0
      %1929 = vmatprep.subr.mxu0 0.0
      %1930 = vmatpush1.msra.mxu0 0.0
      %1931 = vmatprep.subr.mxu0 0.0
      %1932 = vmatpush1.msra.mxu0 0.0
      %1933 = vmatprep.subr.mxu0 0.0
      %1934 = vmatpush1.msra.mxu0 0.0
      %1935 = vmatprep.subr.mxu0 0.0
      %1936 = vmatpush1.msra.mxu0 0.0
      %1937 = vmatprep.subr.mxu0 0.0
      %1938 = vmatpush1.msra.mxu0 %v1332
      %1939 = vmatprep.subr.mxu0 0.0
      %1940 = vmatpush2.msra.mxu0 0.0
      %1941 = vmatprep.subr.mxu0 0.0
      %1942 = vmatpush2.msra.mxu0 0.0
      %1943 = vmatprep.subr.mxu0 0.0
      %1944 = vmatpush2.msra.mxu0 0.0
      %1945 = vmatprep.subr.mxu0 0.0
      %1946 = vmatpush2.msra.mxu0 0.0
      %1947 = vmatprep.subr.mxu0 0.0
      %1948 = vmatpush2.msra.mxu0 0.0
      %1949 = vmatprep.subr.mxu0 0.0
      %1950 = vmatpush2.msra.mxu0 0.0
      %1951 = vmatprep.subr.mxu0 0.0
      %1952 = vmatpush2.msra.mxu0 0.0
      %1953 = vmatprep.subr.mxu0 0.0
      %1954 = vmatpush2.msra.mxu0 0.0
      %1955 = vmatprep.subr.mxu0 0.0
      %1956 = vmatpush2.msra.mxu0 0.0
      %1957 = vmatprep.subr.mxu0 0.0
      %1958 = vmatpush2.msra.mxu0 0.0
      %1959 = vmatprep.subr.mxu0 0.0
      %1960 = vmatpush2.msra.mxu0 0.0
      %1961 = vmatprep.subr.mxu0 0.0
      %1962 = vmatpush2.msra.mxu0 0.0
      %1963 = vmatprep.subr.mxu0 0.0
      %1964 = vmatpush2.msra.mxu0 0.0
      %1965 = vmatprep.subr.mxu0 0.0
      %1966 = vmatpush2.msra.mxu0 0.0
      %1967 = vmatprep.subr.mxu0 0.0
      %1968 = vmatpush2.msra.mxu0 0.0
      %1969 = vmatprep.subr.mxu0 0.0
      %1970 = vmatpush2.msra.mxu0 0.0
      %1971 = vmatprep.mubr.f32.mxu0 0.0
      %1972 = vmatmul.mubr.f32.gmra.mxu0 %v1905
      %v1973 = vpop.f32.mrf.mxu0
      %v1974 = vadd.f32 0.0, %v1973
      %v1975 = vpop.f32.mrf.mxu0
      %1976 = vdwg.mxu0
      %v1978 = vsel %vm1859, %v1901, 0
      %1980 = vmatprep.subr.mxu0 0.0
      %1981 = vmatpush1.msra.mxu0 0.0
      %1982 = vmatprep.subr.mxu0 0.0
      %1983 = vmatpush1.msra.mxu0 0.0
      %1984 = vmatprep.subr.mxu0 0.0
      %1985 = vmatpush1.msra.mxu0 0.0
      %1986 = vmatprep.subr.mxu0 0.0
      %1987 = vmatpush1.msra.mxu0 0.0
      %1988 = vmatprep.subr.mxu0 0.0
      %1989 = vmatpush1.msra.mxu0 0.0
      %1990 = vmatprep.subr.mxu0 0.0
      %1991 = vmatpush1.msra.mxu0 0.0
      %1992 = vmatprep.subr.mxu0 0.0
      %1993 = vmatpush1.msra.mxu0 0.0
      %1994 = vmatprep.subr.mxu0 0.0
      %1995 = vmatpush1.msra.mxu0 0.0
      %1996 = vmatprep.subr.mxu0 0.0
      %1997 = vmatpush1.msra.mxu0 0.0
      %1998 = vmatprep.subr.mxu0 0.0
      %1999 = vmatpush1.msra.mxu0 0.0
      %2000 = vmatprep.subr.mxu0 0.0
      %2001 = vmatpush1.msra.mxu0 0.0
      %2002 = vmatprep.subr.mxu0 0.0
      %2003 = vmatpush1.msra.mxu0 0.0
      %2004 = vmatprep.subr.mxu0 0.0
      %2005 = vmatpush1.msra.mxu0 0.0
      %2006 = vmatprep.subr.mxu0 0.0
      %2007 = vmatpush1.msra.mxu0 0.0
      %2008 = vmatprep.subr.mxu0 0.0
      %2009 = vmatpush1.msra.mxu0 0.0
      %2010 = vmatprep.subr.mxu0 0.0
      %2011 = vmatpush1.msra.mxu0 %v1402
      %2012 = vmatprep.subr.mxu0 0.0
      %2013 = vmatpush2.msra.mxu0 0.0
      %2014 = vmatprep.subr.mxu0 0.0
      %2015 = vmatpush2.msra.mxu0 0.0
      %2016 = vmatprep.subr.mxu0 0.0
      %2017 = vmatpush2.msra.mxu0 0.0
      %2018 = vmatprep.subr.mxu0 0.0
      %2019 = vmatpush2.msra.mxu0 0.0
      %2020 = vmatprep.subr.mxu0 0.0
      %2021 = vmatpush2.msra.mxu0 0.0
      %2022 = vmatprep.subr.mxu0 0.0
      %2023 = vmatpush2.msra.mxu0 0.0
      %2024 = vmatprep.subr.mxu0 0.0
      %2025 = vmatpush2.msra.mxu0 0.0
      %2026 = vmatprep.subr.mxu0 0.0
      %2027 = vmatpush2.msra.mxu0 0.0
      %2028 = vmatprep.subr.mxu0 0.0
      %2029 = vmatpush2.msra.mxu0 0.0
      %2030 = vmatprep.subr.mxu0 0.0
      %2031 = vmatpush2.msra.mxu0 0.0
      %2032 = vmatprep.subr.mxu0 0.0
      %2033 = vmatpush2.msra.mxu0 0.0
      %2034 = vmatprep.subr.mxu0 0.0
      %2035 = vmatpush2.msra.mxu0 0.0
      %2036 = vmatprep.subr.mxu0 0.0
      %2037 = vmatpush2.msra.mxu0 0.0
      %2038 = vmatprep.subr.mxu0 0.0
      %2039 = vmatpush2.msra.mxu0 0.0
      %2040 = vmatprep.subr.mxu0 0.0
      %2041 = vmatpush2.msra.mxu0 0.0
      %2042 = vmatprep.subr.mxu0 0.0
      %2043 = vmatpush2.msra.mxu0 0.0
      %2044 = vmatprep.mubr.f32.mxu0 0.0
      %2045 = vmatmul.mubr.f32.gmra.mxu0 %v1978
      %v2046 = vpop.f32.mrf.mxu0
      %v2047 = vadd.f32 0.0, %v2046
      %v2048 = vpop.f32.mrf.mxu0
      %2049 = vdwg.mxu0
      %v2051 = vsel %vm1859, %v1902, 0
      %2053 = vmatprep.subr.mxu0 0.0
      %2054 = vmatpush1.msra.mxu0 0.0
      %2055 = vmatprep.subr.mxu0 0.0
      %2056 = vmatpush1.msra.mxu0 0.0
      %2057 = vmatprep.subr.mxu0 0.0
      %2058 = vmatpush1.msra.mxu0 0.0
      %2059 = vmatprep.subr.mxu0 0.0
      %2060 = vmatpush1.msra.mxu0 0.0
      %2061 = vmatprep.subr.mxu0 0.0
      %2062 = vmatpush1.msra.mxu0 0.0
      %2063 = vmatprep.subr.mxu0 0.0
      %2064 = vmatpush1.msra.mxu0 0.0
      %2065 = vmatprep.subr.mxu0 0.0
      %2066 = vmatpush1.msra.mxu0 0.0
      %2067 = vmatprep.subr.mxu0 0.0
      %2068 = vmatpush1.msra.mxu0 0.0
      %2069 = vmatprep.subr.mxu0 0.0
      %2070 = vmatpush1.msra.mxu0 0.0
      %2071 = vmatprep.subr.mxu0 0.0
      %2072 = vmatpush1.msra.mxu0 0.0
      %2073 = vmatprep.subr.mxu0 0.0
      %2074 = vmatpush1.msra.mxu0 0.0
      %2075 = vmatprep.subr.mxu0 0.0
      %2076 = vmatpush1.msra.mxu0 0.0
      %2077 = vmatprep.subr.mxu0 0.0
      %2078 = vmatpush1.msra.mxu0 0.0
      %2079 = vmatprep.subr.mxu0 0.0
      %2080 = vmatpush1.msra.mxu0 0.0
      %2081 = vmatprep.subr.mxu0 0.0
      %2082 = vmatpush1.msra.mxu0 0.0
      %2083 = vmatprep.subr.mxu0 0.0
      %2084 = vmatpush1.msra.mxu0 %v1472
      %2085 = vmatprep.subr.mxu0 0.0
      %2086 = vmatpush2.msra.mxu0 0.0
      %2087 = vmatprep.subr.mxu0 0.0
      %2088 = vmatpush2.msra.mxu0 0.0
      %2089 = vmatprep.subr.mxu0 0.0
      %2090 = vmatpush2.msra.mxu0 0.0
      %2091 = vmatprep.subr.mxu0 0.0
      %2092 = vmatpush2.msra.mxu0 0.0
      %2093 = vmatprep.subr.mxu0 0.0
      %2094 = vmatpush2.msra.mxu0 0.0
      %2095 = vmatprep.subr.mxu0 0.0
      %2096 = vmatpush2.msra.mxu0 0.0
      %2097 = vmatprep.subr.mxu0 0.0
      %2098 = vmatpush2.msra.mxu0 0.0
      %2099 = vmatprep.subr.mxu0 0.0
      %2100 = vmatpush2.msra.mxu0 0.0
      %2101 = vmatprep.subr.mxu0 0.0
      %2102 = vmatpush2.msra.mxu0 0.0
      %2103 = vmatprep.subr.mxu0 0.0
      %2104 = vmatpush2.msra.mxu0 0.0
      %2105 = vmatprep.subr.mxu0 0.0
      %2106 = vmatpush2.msra.mxu0 0.0
      %2107 = vmatprep.subr.mxu0 0.0
      %2108 = vmatpush2.msra.mxu0 0.0
      %2109 = vmatprep.subr.mxu0 0.0
      %2110 = vmatpush2.msra.mxu0 0.0
      %2111 = vmatprep.subr.mxu0 0.0
      %2112 = vmatpush2.msra.mxu0 0.0
      %2113 = vmatprep.subr.mxu0 0.0
      %2114 = vmatpush2.msra.mxu0 0.0
      %2115 = vmatprep.subr.mxu0 0.0
      %2116 = vmatpush2.msra.mxu0 0.0
      %2117 = vmatprep.mubr.f32.mxu0 0.0
      %2118 = vmatmul.mubr.f32.gmra.mxu0 %v2051
      %v2119 = vpop.f32.mrf.mxu0
      %v2120 = vadd.f32 0.0, %v2119
      %v2121 = vpop.f32.mrf.mxu0
      %2122 = vdwg.mxu0
      %v2124 = vsel %vm1859, %v1903, 0
      %2126 = vmatprep.subr.mxu0 0.0
      %2127 = vmatpush1.msra.mxu0 0.0
      %2128 = vmatprep.subr.mxu0 0.0
      %2129 = vmatpush1.msra.mxu0 0.0
      %2130 = vmatprep.subr.mxu0 0.0
      %2131 = vmatpush1.msra.mxu0 0.0
      %2132 = vmatprep.subr.mxu0 0.0
      %2133 = vmatpush1.msra.mxu0 0.0
      %2134 = vmatprep.subr.mxu0 0.0
      %2135 = vmatpush1.msra.mxu0 0.0
      %2136 = vmatprep.subr.mxu0 0.0
      %2137 = vmatpush1.msra.mxu0 0.0
      %2138 = vmatprep.subr.mxu0 0.0
      %2139 = vmatpush1.msra.mxu0 0.0
      %2140 = vmatprep.subr.mxu0 0.0
      %2141 = vmatpush1.msra.mxu0 0.0
      %2142 = vmatprep.subr.mxu0 0.0
      %2143 = vmatpush1.msra.mxu0 0.0
      %2144 = vmatprep.subr.mxu0 0.0
      %2145 = vmatpush1.msra.mxu0 0.0
      %2146 = vmatprep.subr.mxu0 0.0
      %2147 = vmatpush1.msra.mxu0 0.0
      %2148 = vmatprep.subr.mxu0 0.0
      %2149 = vmatpush1.msra.mxu0 0.0
      %2150 = vmatprep.subr.mxu0 0.0
      %2151 = vmatpush1.msra.mxu0 0.0
      %2152 = vmatprep.subr.mxu0 0.0
      %2153 = vmatpush1.msra.mxu0 0.0
      %2154 = vmatprep.subr.mxu0 0.0
      %2155 = vmatpush1.msra.mxu0 0.0
      %2156 = vmatprep.subr.mxu0 0.0
      %2157 = vmatpush1.msra.mxu0 %v1542
      %2158 = vmatprep.subr.mxu0 0.0
      %2159 = vmatpush2.msra.mxu0 0.0
      %2160 = vmatprep.subr.mxu0 0.0
      %2161 = vmatpush2.msra.mxu0 0.0
      %2162 = vmatprep.subr.mxu0 0.0
      %2163 = vmatpush2.msra.mxu0 0.0
      %2164 = vmatprep.subr.mxu0 0.0
      %2165 = vmatpush2.msra.mxu0 0.0
      %2166 = vmatprep.subr.mxu0 0.0
      %2167 = vmatpush2.msra.mxu0 0.0
      %2168 = vmatprep.subr.mxu0 0.0
      %2169 = vmatpush2.msra.mxu0 0.0
      %2170 = vmatprep.subr.mxu0 0.0
      %2171 = vmatpush2.msra.mxu0 0.0
      %2172 = vmatprep.subr.mxu0 0.0
      %2173 = vmatpush2.msra.mxu0 0.0
      %2174 = vmatprep.subr.mxu0 0.0
      %2175 = vmatpush2.msra.mxu0 0.0
      %2176 = vmatprep.subr.mxu0 0.0
      %2177 = vmatpush2.msra.mxu0 0.0
      %2178 = vmatprep.subr.mxu0 0.0
      %2179 = vmatpush2.msra.mxu0 0.0
      %2180 = vmatprep.subr.mxu0 0.0
      %2181 = vmatpush2.msra.mxu0 0.0
      %2182 = vmatprep.subr.mxu0 0.0
      %2183 = vmatpush2.msra.mxu0 0.0
      %2184 = vmatprep.subr.mxu0 0.0
      %2185 = vmatpush2.msra.mxu0 0.0
      %2186 = vmatprep.subr.mxu0 0.0
      %2187 = vmatpush2.msra.mxu0 0.0
      %2188 = vmatprep.subr.mxu0 0.0
      %2189 = vmatpush2.msra.mxu0 0.0
      %2190 = vmatprep.mubr.f32.mxu0 0.0
      %2191 = vmatmul.mubr.f32.gmra.mxu0 %v2124
      %v2192 = vpop.f32.mrf.mxu0
      %v2193 = vadd.f32 0.0, %v2192
      %v2194 = vpop.f32.mrf.mxu0
      %2195 = vdwg.mxu0
      %v2196 = vld [vmem:[%s469] sm:$0xff]
      %v2197 = vld [vmem:[%s469 + $0x8] sm:$0xff]
      %v2198 = vld [vmem:[%s469 + $0x10] sm:$0xff]
      %v2199 = vld [vmem:[%s469 + $0x18] sm:$0xff]
      %v2200 = vld [vmem:[%s469 + $0x20] sm:$0xff]
      %v2201 = vld [vmem:[%s469 + $0x28] sm:$0xff]
      %v2202 = vld [vmem:[%s469 + $0x30] sm:$0xff]
      %v2203 = vld [vmem:[%s469 + $0x38] sm:$0xff]
      %v2204 = vld [vmem:[%s469 + $0x40] sm:$0xff]
      %v2205 = vld [vmem:[%s469 + $0x48] sm:$0xff]
      %v2206 = vld [vmem:[%s469 + $0x50] sm:$0xff]
      %v2207 = vld [vmem:[%s469 + $0x58] sm:$0xff]
      %v2208 = vld [vmem:[%s469 + $0x60] sm:$0xff]
      %v2209 = vld [vmem:[%s469 + $0x68] sm:$0xff]
      %v2210 = vld [vmem:[%s469 + $0x70] sm:$0xff]
      %v2211 = vld [vmem:[%s469 + $0x78] sm:$0xff]
      %v2213 = vsel %vm1545, %v1974, 0
      %2215 = vmatprep.subr.mxu0 0.0
      %2216 = vmatpush1.msra.mxu0 0.0
      %2217 = vmatprep.subr.mxu0 0.0
      %2218 = vmatpush1.msra.mxu0 0.0
      %2219 = vmatprep.subr.mxu0 0.0
      %2220 = vmatpush1.msra.mxu0 0.0
      %2221 = vmatprep.subr.mxu0 0.0
      %2222 = vmatpush1.msra.mxu0 0.0
      %2223 = vmatprep.subr.mxu0 0.0
      %2224 = vmatpush1.msra.mxu0 0.0
      %2225 = vmatprep.subr.mxu0 0.0
      %2226 = vmatpush1.msra.mxu0 0.0
      %2227 = vmatprep.subr.mxu0 0.0
      %2228 = vmatpush1.msra.mxu0 0.0
      %2229 = vmatprep.subr.mxu0 0.0
      %2230 = vmatpush1.msra.mxu0 0.0
      %2231 = vmatprep.subr.mxu0 0.0
      %2232 = vmatpush1.msra.mxu0 0.0
      %2233 = vmatprep.subr.mxu0 0.0
      %2234 = vmatpush1.msra.mxu0 0.0
      %2235 = vmatprep.subr.mxu0 0.0
      %2236 = vmatpush1.msra.mxu0 0.0
      %2237 = vmatprep.subr.mxu0 0.0
      %2238 = vmatpush1.msra.mxu0 0.0
      %2239 = vmatprep.subr.mxu0 0.0
      %2240 = vmatpush1.msra.mxu0 %v2199
      %2241 = vmatprep.subr.mxu0 0.0
      %2242 = vmatpush1.msra.mxu0 %v2198
      %2243 = vmatprep.subr.mxu0 0.0
      %2244 = vmatpush1.msra.mxu0 %v2197
      %2245 = vmatprep.subr.mxu0 0.0
      %2246 = vmatpush1.msra.mxu0 %v2196
      %2247 = vmatprep.subr.mxu0 0.0
      %2248 = vmatpush2.msra.mxu0 0.0
      %2249 = vmatprep.subr.mxu0 0.0
      %2250 = vmatpush2.msra.mxu0 0.0
      %2251 = vmatprep.subr.mxu0 0.0
      %2252 = vmatpush2.msra.mxu0 0.0
      %2253 = vmatprep.subr.mxu0 0.0
      %2254 = vmatpush2.msra.mxu0 0.0
      %2255 = vmatprep.subr.mxu0 0.0
      %2256 = vmatpush2.msra.mxu0 0.0
      %2257 = vmatprep.subr.mxu0 0.0
      %2258 = vmatpush2.msra.mxu0 0.0
      %2259 = vmatprep.subr.mxu0 0.0
      %2260 = vmatpush2.msra.mxu0 0.0
      %2261 = vmatprep.subr.mxu0 0.0
      %2262 = vmatpush2.msra.mxu0 0.0
      %2263 = vmatprep.subr.mxu0 0.0
      %2264 = vmatpush2.msra.mxu0 0.0
      %2265 = vmatprep.subr.mxu0 0.0
      %2266 = vmatpush2.msra.mxu0 0.0
      %2267 = vmatprep.subr.mxu0 0.0
      %2268 = vmatpush2.msra.mxu0 0.0
      %2269 = vmatprep.subr.mxu0 0.0
      %2270 = vmatpush2.msra.mxu0 0.0
      %2271 = vmatprep.subr.mxu0 0.0
      %2272 = vmatpush2.msra.mxu0 0.0
      %2273 = vmatprep.subr.mxu0 0.0
      %2274 = vmatpush2.msra.mxu0 0.0
      %2275 = vmatprep.subr.mxu0 0.0
      %2276 = vmatpush2.msra.mxu0 0.0
      %2277 = vmatprep.subr.mxu0 0.0
      %2278 = vmatpush2.msra.mxu0 0.0
      %2279 = vmatprep.mubr.f32.mxu0 0.0
      %2280 = vmatmul.mubr.f32.gmra.mxu0 %v2213
      %v2281 = vpop.f32.mrf.mxu0
      %v2282 = vadd.f32 0.0, %v2281
      %v2283 = vpop.f32.mrf.mxu0
      %2284 = vdwg.mxu0
      %v2286 = vsel %vm1545, %v2047, 0
      %2288 = vmatprep.subr.mxu0 0.0
      %2289 = vmatpush1.msra.mxu0 0.0
      %2290 = vmatprep.subr.mxu0 0.0
      %2291 = vmatpush1.msra.mxu0 0.0
      %2292 = vmatprep.subr.mxu0 0.0
      %2293 = vmatpush1.msra.mxu0 0.0
      %2294 = vmatprep.subr.mxu0 0.0
      %2295 = vmatpush1.msra.mxu0 0.0
      %2296 = vmatprep.subr.mxu0 0.0
      %2297 = vmatpush1.msra.mxu0 0.0
      %2298 = vmatprep.subr.mxu0 0.0
      %2299 = vmatpush1.msra.mxu0 0.0
      %2300 = vmatprep.subr.mxu0 0.0
      %2301 = vmatpush1.msra.mxu0 0.0
      %2302 = vmatprep.subr.mxu0 0.0
      %2303 = vmatpush1.msra.mxu0 0.0
      %2304 = vmatprep.subr.mxu0 0.0
      %2305 = vmatpush1.msra.mxu0 0.0
      %2306 = vmatprep.subr.mxu0 0.0
      %2307 = vmatpush1.msra.mxu0 0.0
      %2308 = vmatprep.subr.mxu0 0.0
      %2309 = vmatpush1.msra.mxu0 0.0
      %2310 = vmatprep.subr.mxu0 0.0
      %2311 = vmatpush1.msra.mxu0 0.0
      %2312 = vmatprep.subr.mxu0 0.0
      %2313 = vmatpush1.msra.mxu0 %v2203
      %2314 = vmatprep.subr.mxu0 0.0
      %2315 = vmatpush1.msra.mxu0 %v2202
      %2316 = vmatprep.subr.mxu0 0.0
      %2317 = vmatpush1.msra.mxu0 %v2201
      %2318 = vmatprep.subr.mxu0 0.0
      %2319 = vmatpush1.msra.mxu0 %v2200
      %2320 = vmatprep.subr.mxu0 0.0
      %2321 = vmatpush2.msra.mxu0 0.0
      %2322 = vmatprep.subr.mxu0 0.0
      %2323 = vmatpush2.msra.mxu0 0.0
      %2324 = vmatprep.subr.mxu0 0.0
      %2325 = vmatpush2.msra.mxu0 0.0
      %2326 = vmatprep.subr.mxu0 0.0
      %2327 = vmatpush2.msra.mxu0 0.0
      %2328 = vmatprep.subr.mxu0 0.0
      %2329 = vmatpush2.msra.mxu0 0.0
      %2330 = vmatprep.subr.mxu0 0.0
      %2331 = vmatpush2.msra.mxu0 0.0
      %2332 = vmatprep.subr.mxu0 0.0
      %2333 = vmatpush2.msra.mxu0 0.0
      %2334 = vmatprep.subr.mxu0 0.0
      %2335 = vmatpush2.msra.mxu0 0.0
      %2336 = vmatprep.subr.mxu0 0.0
      %2337 = vmatpush2.msra.mxu0 0.0
      %2338 = vmatprep.subr.mxu0 0.0
      %2339 = vmatpush2.msra.mxu0 0.0
      %2340 = vmatprep.subr.mxu0 0.0
      %2341 = vmatpush2.msra.mxu0 0.0
      %2342 = vmatprep.subr.mxu0 0.0
      %2343 = vmatpush2.msra.mxu0 0.0
      %2344 = vmatprep.subr.mxu0 0.0
      %2345 = vmatpush2.msra.mxu0 0.0
      %2346 = vmatprep.subr.mxu0 0.0
      %2347 = vmatpush2.msra.mxu0 0.0
      %2348 = vmatprep.subr.mxu0 0.0
      %2349 = vmatpush2.msra.mxu0 0.0
      %2350 = vmatprep.subr.mxu0 0.0
      %2351 = vmatpush2.msra.mxu0 0.0
      %2352 = vmatprep.mubr.f32.mxu0 0.0
      %2353 = vmatmul.mubr.f32.gmra.mxu0 %v2286
      %v2354 = vpop.f32.mrf.mxu0
      %v2355 = vadd.f32 0.0, %v2354
      %v2356 = vpop.f32.mrf.mxu0
      %2357 = vdwg.mxu0
      %v2359 = vsel %vm1545, %v2120, 0
      %2361 = vmatprep.subr.mxu0 0.0
      %2362 = vmatpush1.msra.mxu0 0.0
      %2363 = vmatprep.subr.mxu0 0.0
      %2364 = vmatpush1.msra.mxu0 0.0
      %2365 = vmatprep.subr.mxu0 0.0
      %2366 = vmatpush1.msra.mxu0 0.0
      %2367 = vmatprep.subr.mxu0 0.0
      %2368 = vmatpush1.msra.mxu0 0.0
      %2369 = vmatprep.subr.mxu0 0.0
      %2370 = vmatpush1.msra.mxu0 0.0
      %2371 = vmatprep.subr.mxu0 0.0
      %2372 = vmatpush1.msra.mxu0 0.0
      %2373 = vmatprep.subr.mxu0 0.0
      %2374 = vmatpush1.msra.mxu0 0.0
      %2375 = vmatprep.subr.mxu0 0.0
      %2376 = vmatpush1.msra.mxu0 0.0
      %2377 = vmatprep.subr.mxu0 0.0
      %2378 = vmatpush1.msra.mxu0 0.0
      %2379 = vmatprep.subr.mxu0 0.0
      %2380 = vmatpush1.msra.mxu0 0.0
      %2381 = vmatprep.subr.mxu0 0.0
      %2382 = vmatpush1.msra.mxu0 0.0
      %2383 = vmatprep.subr.mxu0 0.0
      %2384 = vmatpush1.msra.mxu0 0.0
      %2385 = vmatprep.subr.mxu0 0.0
      %2386 = vmatpush1.msra.mxu0 %v2207
      %2387 = vmatprep.subr.mxu0 0.0
      %2388 = vmatpush1.msra.mxu0 %v2206
      %2389 = vmatprep.subr.mxu0 0.0
      %2390 = vmatpush1.msra.mxu0 %v2205
      %2391 = vmatprep.subr.mxu0 0.0
      %2392 = vmatpush1.msra.mxu0 %v2204
      %2393 = vmatprep.subr.mxu0 0.0
      %2394 = vmatpush2.msra.mxu0 0.0
      %2395 = vmatprep.subr.mxu0 0.0
      %2396 = vmatpush2.msra.mxu0 0.0
      %2397 = vmatprep.subr.mxu0 0.0
      %2398 = vmatpush2.msra.mxu0 0.0
      %2399 = vmatprep.subr.mxu0 0.0
      %2400 = vmatpush2.msra.mxu0 0.0
      %2401 = vmatprep.subr.mxu0 0.0
      %2402 = vmatpush2.msra.mxu0 0.0
      %2403 = vmatprep.subr.mxu0 0.0
      %2404 = vmatpush2.msra.mxu0 0.0
      %2405 = vmatprep.subr.mxu0 0.0
      %2406 = vmatpush2.msra.mxu0 0.0
      %2407 = vmatprep.subr.mxu0 0.0
      %2408 = vmatpush2.msra.mxu0 0.0
      %2409 = vmatprep.subr.mxu0 0.0
      %2410 = vmatpush2.msra.mxu0 0.0
      %2411 = vmatprep.subr.mxu0 0.0
      %2412 = vmatpush2.msra.mxu0 0.0
      %2413 = vmatprep.subr.mxu0 0.0
      %2414 = vmatpush2.msra.mxu0 0.0
      %2415 = vmatprep.subr.mxu0 0.0
      %2416 = vmatpush2.msra.mxu0 0.0
      %2417 = vmatprep.subr.mxu0 0.0
      %2418 = vmatpush2.msra.mxu0 0.0
      %2419 = vmatprep.subr.mxu0 0.0
      %2420 = vmatpush2.msra.mxu0 0.0
      %2421 = vmatprep.subr.mxu0 0.0
      %2422 = vmatpush2.msra.mxu0 0.0
      %2423 = vmatprep.subr.mxu0 0.0
      %2424 = vmatpush2.msra.mxu0 0.0
      %2425 = vmatprep.mubr.f32.mxu0 0.0
      %2426 = vmatmul.mubr.f32.gmra.mxu0 %v2359
      %v2427 = vpop.f32.mrf.mxu0
      %v2428 = vadd.f32 0.0, %v2427
      %v2429 = vpop.f32.mrf.mxu0
      %2430 = vdwg.mxu0
      %v2432 = vsel %vm1545, %v2193, 0
      %2434 = vmatprep.subr.mxu0 0.0
      %2435 = vmatpush1.msra.mxu0 0.0
      %2436 = vmatprep.subr.mxu0 0.0
      %2437 = vmatpush1.msra.mxu0 0.0
      %2438 = vmatprep.subr.mxu0 0.0
      %2439 = vmatpush1.msra.mxu0 0.0
      %2440 = vmatprep.subr.mxu0 0.0
      %2441 = vmatpush1.msra.mxu0 0.0
      %2442 = vmatprep.subr.mxu0 0.0
      %2443 = vmatpush1.msra.mxu0 0.0
      %2444 = vmatprep.subr.mxu0 0.0
      %2445 = vmatpush1.msra.mxu0 0.0
      %2446 = vmatprep.subr.mxu0 0.0
      %2447 = vmatpush1.msra.mxu0 0.0
      %2448 = vmatprep.subr.mxu0 0.0
      %2449 = vmatpush1.msra.mxu0 0.0
      %2450 = vmatprep.subr.mxu0 0.0
      %2451 = vmatpush1.msra.mxu0 0.0
      %2452 = vmatprep.subr.mxu0 0.0
      %2453 = vmatpush1.msra.mxu0 0.0
      %2454 = vmatprep.subr.mxu0 0.0
      %2455 = vmatpush1.msra.mxu0 0.0
      %2456 = vmatprep.subr.mxu0 0.0
      %2457 = vmatpush1.msra.mxu0 0.0
      %2458 = vmatprep.subr.mxu0 0.0
      %2459 = vmatpush1.msra.mxu0 %v2211
      %2460 = vmatprep.subr.mxu0 0.0
      %2461 = vmatpush1.msra.mxu0 %v2210
      %2462 = vmatprep.subr.mxu0 0.0
      %2463 = vmatpush1.msra.mxu0 %v2209
      %2464 = vmatprep.subr.mxu0 0.0
      %2465 = vmatpush1.msra.mxu0 %v2208
      %2466 = vmatprep.subr.mxu0 0.0
      %2467 = vmatpush2.msra.mxu0 0.0
      %2468 = vmatprep.subr.mxu0 0.0
      %2469 = vmatpush2.msra.mxu0 0.0
      %2470 = vmatprep.subr.mxu0 0.0
      %2471 = vmatpush2.msra.mxu0 0.0
      %2472 = vmatprep.subr.mxu0 0.0
      %2473 = vmatpush2.msra.mxu0 0.0
      %2474 = vmatprep.subr.mxu0 0.0
      %2475 = vmatpush2.msra.mxu0 0.0
      %2476 = vmatprep.subr.mxu0 0.0
      %2477 = vmatpush2.msra.mxu0 0.0
      %2478 = vmatprep.subr.mxu0 0.0
      %2479 = vmatpush2.msra.mxu0 0.0
      %2480 = vmatprep.subr.mxu0 0.0
      %2481 = vmatpush2.msra.mxu0 0.0
      %2482 = vmatprep.subr.mxu0 0.0
      %2483 = vmatpush2.msra.mxu0 0.0
      %2484 = vmatprep.subr.mxu0 0.0
      %2485 = vmatpush2.msra.mxu0 0.0
      %2486 = vmatprep.subr.mxu0 0.0
      %2487 = vmatpush2.msra.mxu0 0.0
      %2488 = vmatprep.subr.mxu0 0.0
      %2489 = vmatpush2.msra.mxu0 0.0
      %2490 = vmatprep.subr.mxu0 0.0
      %2491 = vmatpush2.msra.mxu0 0.0
      %2492 = vmatprep.subr.mxu0 0.0
      %2493 = vmatpush2.msra.mxu0 0.0
      %2494 = vmatprep.subr.mxu0 0.0
      %2495 = vmatpush2.msra.mxu0 0.0
      %2496 = vmatprep.subr.mxu0 0.0
      %2497 = vmatpush2.msra.mxu0 0.0
      %2498 = vmatprep.mubr.f32.mxu0 0.0
      %2499 = vmatmul.mubr.f32.gmra.mxu0 %v2432
      %v2500 = vpop.f32.mrf.mxu0
      %v2501 = vadd.f32 0.0, %v2500
      %v2502 = vpop.f32.mrf.mxu0
      %2503 = vdwg.mxu0
      %v2504 = vadd.f32 %v2282, %v2355
      %v2505 = vadd.f32 %v2504, %v2428
      %v2506 = vadd.f32 %v2505, %v2501
      %v2507 = vadd.f32 %v496, %v2506
      %v2508 = vld [vmem:[%s475] sm:$0x1]
      %v2509 = vmul.f32 %v2507, %v2507
      %2510 = vadd.xlane.f32.xlu0 %v2509
      %v2511 = vpop.xlane.xlu0 %2510
      %v2512 = vmul.f32 %v2511, %v501
      %v2513 = vadd.f32 %v2512, 1e-06
      %v2514 = vrsqrt.pop %v2513
      %v2515 = vmul.f32 %v2507, %v2514
      %v2517 = vlaneseq
      %v2518 = vshrl.u32 %v2517, 7
      %v2519 = vsub.s32 0, %v2518
      %v2520 = vrot.slane %v2508, %v2519
      %v2522 = vmul.f32 %v2515, %v2520
      %v2523 = vld [vmem:[%s480] sm:$0xff]
      %v2524 = vld [vmem:[%s480 + $0x8] sm:$0xff]
      %v2525 = vld [vmem:[%s480 + $0x10] sm:$0xff]
      %v2526 = vld [vmem:[%s480 + $0x18] sm:$0xff]
      %v2527 = vld [vmem:[%s480 + $0x20] sm:$0xff]
      %v2528 = vld [vmem:[%s480 + $0x28] sm:$0xff]
      %v2529 = vld [vmem:[%s480 + $0x30] sm:$0xff]
      %v2530 = vld [vmem:[%s480 + $0x38] sm:$0xff]
      %v2531 = vld [vmem:[%s480 + $0x40] sm:$0xff]
      %v2532 = vld [vmem:[%s480 + $0x48] sm:$0xff]
      %v2533 = vld [vmem:[%s480 + $0x50] sm:$0xff]
      %v2534 = vld [vmem:[%s480 + $0x58] sm:$0xff]
      %v2535 = vld [vmem:[%s480 + $0x60] sm:$0xff]
      %v2536 = vld [vmem:[%s480 + $0x68] sm:$0xff]
      %v2537 = vld [vmem:[%s480 + $0x70] sm:$0xff]
      %v2538 = vld [vmem:[%s480 + $0x78] sm:$0xff]
      %v2539 = vld [vmem:[%s480 + $0x80] sm:$0xff]
      %v2540 = vld [vmem:[%s480 + $0x88] sm:$0xff]
      %v2541 = vld [vmem:[%s480 + $0x90] sm:$0xff]
      %v2542 = vld [vmem:[%s480 + $0x98] sm:$0xff]
      %v2543 = vld [vmem:[%s480 + $0xa0] sm:$0xff]
      %v2544 = vld [vmem:[%s480 + $0xa8] sm:$0xff]
      %v2545 = vld [vmem:[%s480 + $0xb0] sm:$0xff]
      %v2546 = vld [vmem:[%s480 + $0xb8] sm:$0xff]
      %v2547 = vld [vmem:[%s480 + $0xc0] sm:$0xff]
      %v2548 = vld [vmem:[%s480 + $0xc8] sm:$0xff]
      %v2549 = vld [vmem:[%s480 + $0xd0] sm:$0xff]
      %v2550 = vld [vmem:[%s480 + $0xd8] sm:$0xff]
      %v2551 = vld [vmem:[%s480 + $0xe0] sm:$0xff]
      %v2552 = vld [vmem:[%s480 + $0xe8] sm:$0xff]
      %v2553 = vld [vmem:[%s480 + $0xf0] sm:$0xff]
      %v2554 = vld [vmem:[%s480 + $0xf8] sm:$0xff]
      %v2555 = vld [vmem:[%s480 + $0x100] sm:$0xff]
      %v2556 = vld [vmem:[%s480 + $0x108] sm:$0xff]
      %v2557 = vld [vmem:[%s480 + $0x110] sm:$0xff]
      %v2558 = vld [vmem:[%s480 + $0x118] sm:$0xff]
      %v2559 = vld [vmem:[%s480 + $0x120] sm:$0xff]
      %v2560 = vld [vmem:[%s480 + $0x128] sm:$0xff]
      %v2561 = vld [vmem:[%s480 + $0x130] sm:$0xff]
      %v2562 = vld [vmem:[%s480 + $0x138] sm:$0xff]
      %v2563 = vld [vmem:[%s480 + $0x140] sm:$0xff]
      %v2564 = vld [vmem:[%s480 + $0x148] sm:$0xff]
      %v2565 = vld [vmem:[%s480 + $0x150] sm:$0xff]
      %v2566 = vld [vmem:[%s480 + $0x158] sm:$0xff]
      %v2567 = vld [vmem:[%s480 + $0x160] sm:$0xff]
      %v2568 = vld [vmem:[%s480 + $0x168] sm:$0xff]
      %v2569 = vld [vmem:[%s480 + $0x170] sm:$0xff]
      %v2570 = vld [vmem:[%s480 + $0x178] sm:$0xff]
      %v2571 = vld [vmem:[%s480 + $0x180] sm:$0xff]
      %v2572 = vld [vmem:[%s480 + $0x188] sm:$0xff]
      %v2573 = vld [vmem:[%s480 + $0x190] sm:$0xff]
      %v2574 = vld [vmem:[%s480 + $0x198] sm:$0xff]
      %v2575 = vld [vmem:[%s480 + $0x1a0] sm:$0xff]
      %v2576 = vld [vmem:[%s480 + $0x1a8] sm:$0xff]
      %v2577 = vld [vmem:[%s480 + $0x1b0] sm:$0xff]
      %v2578 = vld [vmem:[%s480 + $0x1b8] sm:$0xff]
      %v2579 = vld [vmem:[%s480 + $0x1c0] sm:$0xff]
      %v2580 = vld [vmem:[%s480 + $0x1c8] sm:$0xff]
      %v2581 = vld [vmem:[%s480 + $0x1d0] sm:$0xff]
      %v2582 = vld [vmem:[%s480 + $0x1d8] sm:$0xff]
      %v2583 = vld [vmem:[%s480 + $0x1e0] sm:$0xff]
      %v2584 = vld [vmem:[%s480 + $0x1e8] sm:$0xff]
      %v2585 = vld [vmem:[%s480 + $0x1f0] sm:$0xff]
      %v2586 = vld [vmem:[%s480 + $0x1f8] sm:$0xff]
      %v2587 = vld [vmem:[%s484] sm:$0xf]
      %v2589 = vlaneseq
      %v2590 = vshrl.u32 %v2589, 7
      %v2591 = vsub.s32 0, %v2590
      %v2592 = vrot.slane %v2587, %v2591
      %v2593 = vlaneseq
      %v2594 = vshrl.u32 %v2593, 7
      %v2595 = vsub.s32 1, %v2594
      %v2596 = vrot.slane %v2587, %v2595
      %v2597 = vlaneseq
      %v2598 = vshrl.u32 %v2597, 7
      %v2599 = vsub.s32 2, %v2598
      %v2600 = vrot.slane %v2587, %v2599
      %v2601 = vlaneseq
      %v2602 = vshrl.u32 %v2601, 7
      %v2603 = vsub.s32 3, %v2602
      %v2604 = vrot.slane %v2587, %v2603
      %2609 = vmatprep.subr.mxu0 %v2584
      %2610 = vmatpush1.msra.mxu0 %v2583
      %2611 = vmatprep.subr.mxu0 %v2580
      %2612 = vmatpush1.msra.mxu0 %v2579
      %2613 = vmatprep.subr.mxu0 %v2576
      %2614 = vmatpush1.msra.mxu0 %v2575
      %2615 = vmatprep.subr.mxu0 %v2572
      %2616 = vmatpush1.msra.mxu0 %v2571
      %2617 = vmatprep.subr.mxu0 %v2568
      %2618 = vmatpush1.msra.mxu0 %v2567
      %2619 = vmatprep.subr.mxu0 %v2564
      %2620 = vmatpush1.msra.mxu0 %v2563
      %2621 = vmatprep.subr.mxu0 %v2560
      %2622 = vmatpush1.msra.mxu0 %v2559
      %2623 = vmatprep.subr.mxu0 %v2556
      %2624 = vmatpush1.msra.mxu0 %v2555
      %2625 = vmatprep.subr.mxu0 %v2552
      %2626 = vmatpush1.msra.mxu0 %v2551
      %2627 = vmatprep.subr.mxu0 %v2548
      %2628 = vmatpush1.msra.mxu0 %v2547
      %2629 = vmatprep.subr.mxu0 %v2544
      %2630 = vmatpush1.msra.mxu0 %v2543
      %2631 = vmatprep.subr.mxu0 %v2540
      %2632 = vmatpush1.msra.mxu0 %v2539
      %2633 = vmatprep.subr.mxu0 %v2536
      %2634 = vmatpush1.msra.mxu0 %v2535
      %2635 = vmatprep.subr.mxu0 %v2532
      %2636 = vmatpush1.msra.mxu0 %v2531
      %2637 = vmatprep.subr.mxu0 %v2528
      %2638 = vmatpush1.msra.mxu0 %v2527
      %2639 = vmatprep.subr.mxu0 %v2524
      %2640 = vmatpush1.msra.mxu0 %v2523
      %2641 = vmatprep.subr.mxu0 0.0
      %2642 = vmatpush2.msra.mxu0 0.0
      %2643 = vmatprep.subr.mxu0 0.0
      %2644 = vmatpush2.msra.mxu0 0.0
      %2645 = vmatprep.subr.mxu0 0.0
      %2646 = vmatpush2.msra.mxu0 0.0
      %2647 = vmatprep.subr.mxu0 0.0
      %2648 = vmatpush2.msra.mxu0 0.0
      %2649 = vmatprep.subr.mxu0 0.0
      %2650 = vmatpush2.msra.mxu0 0.0
      %2651 = vmatprep.subr.mxu0 0.0
      %2652 = vmatpush2.msra.mxu0 0.0
      %2653 = vmatprep.subr.mxu0 0.0
      %2654 = vmatpush2.msra.mxu0 0.0
      %2655 = vmatprep.subr.mxu0 0.0
      %2656 = vmatpush2.msra.mxu0 0.0
      %2657 = vmatprep.subr.mxu0 0.0
      %2658 = vmatpush2.msra.mxu0 0.0
      %2659 = vmatprep.subr.mxu0 0.0
      %2660 = vmatpush2.msra.mxu0 0.0
      %2661 = vmatprep.subr.mxu0 0.0
      %2662 = vmatpush2.msra.mxu0 0.0
      %2663 = vmatprep.subr.mxu0 0.0
      %2664 = vmatpush2.msra.mxu0 0.0
      %2665 = vmatprep.subr.mxu0 0.0
      %2666 = vmatpush2.msra.mxu0 0.0
      %2667 = vmatprep.subr.mxu0 0.0
      %2668 = vmatpush2.msra.mxu0 0.0
      %2669 = vmatprep.subr.mxu0 0.0
      %2670 = vmatpush2.msra.mxu0 0.0
      %2671 = vmatprep.subr.mxu0 0.0
      %2672 = vmatpush2.msra.mxu0 0.0
      %2673 = vmatprep.mubr.f32.mxu0 0.0
      %2674 = vmatmul.mubr.f32.gmra.mxu0 %v2522
      %v2675 = vpop.f32.mrf.mxu0
      %v2676 = vadd.f32 %v2592, %v2675
      %v2677 = vpop.f32.mrf.mxu0
      %v2678 = vadd.f32 %v2596, %v2677
      %2679 = vdwg.mxu0
      %2680 = vmatprep.subr.mxu0 %v2586
      %2681 = vmatpush1.msra.mxu0 %v2585
      %2682 = vmatprep.subr.mxu0 %v2582
      %2683 = vmatpush1.msra.mxu0 %v2581
      %2684 = vmatprep.subr.mxu0 %v2578
      %2685 = vmatpush1.msra.mxu0 %v2577
      %2686 = vmatprep.subr.mxu0 %v2574
      %2687 = vmatpush1.msra.mxu0 %v2573
      %2688 = vmatprep.subr.mxu0 %v2570
      %2689 = vmatpush1.msra.mxu0 %v2569
      %2690 = vmatprep.subr.mxu0 %v2566
      %2691 = vmatpush1.msra.mxu0 %v2565
      %2692 = vmatprep.subr.mxu0 %v2562
      %2693 = vmatpush1.msra.mxu0 %v2561
      %2694 = vmatprep.subr.mxu0 %v2558
      %2695 = vmatpush1.msra.mxu0 %v2557
      %2696 = vmatprep.subr.mxu0 %v2554
      %2697 = vmatpush1.msra.mxu0 %v2553
      %2698 = vmatprep.subr.mxu0 %v2550
      %2699 = vmatpush1.msra.mxu0 %v2549
      %2700 = vmatprep.subr.mxu0 %v2546
      %2701 = vmatpush1.msra.mxu0 %v2545
      %2702 = vmatprep.subr.mxu0 %v2542
      %2703 = vmatpush1.msra.mxu0 %v2541
      %2704 = vmatprep.subr.mxu0 %v2538
      %2705 = vmatpush1.msra.mxu0 %v2537
      %2706 = vmatprep.subr.mxu0 %v2534
      %2707 = vmatpush1.msra.mxu0 %v2533
      %2708 = vmatprep.subr.mxu0 %v2530
      %2709 = vmatpush1.msra.mxu0 %v2529
      %2710 = vmatprep.subr.mxu0 %v2526
      %2711 = vmatpush1.msra.mxu0 %v2525
      %2712 = vmatprep.subr.mxu0 0.0
      %2713 = vmatpush2.msra.mxu0 0.0
      %2714 = vmatprep.subr.mxu0 0.0
      %2715 = vmatpush2.msra.mxu0 0.0
      %2716 = vmatprep.subr.mxu0 0.0
      %2717 = vmatpush2.msra.mxu0 0.0
      %2718 = vmatprep.subr.mxu0 0.0
      %2719 = vmatpush2.msra.mxu0 0.0
      %2720 = vmatprep.subr.mxu0 0.0
      %2721 = vmatpush2.msra.mxu0 0.0
      %2722 = vmatprep.subr.mxu0 0.0
      %2723 = vmatpush2.msra.mxu0 0.0
      %2724 = vmatprep.subr.mxu0 0.0
      %2725 = vmatpush2.msra.mxu0 0.0
      %2726 = vmatprep.subr.mxu0 0.0
      %2727 = vmatpush2.msra.mxu0 0.0
      %2728 = vmatprep.subr.mxu0 0.0
      %2729 = vmatpush2.msra.mxu0 0.0
      %2730 = vmatprep.subr.mxu0 0.0
      %2731 = vmatpush2.msra.mxu0 0.0
      %2732 = vmatprep.subr.mxu0 0.0
      %2733 = vmatpush2.msra.mxu0 0.0
      %2734 = vmatprep.subr.mxu0 0.0
      %2735 = vmatpush2.msra.mxu0 0.0
      %2736 = vmatprep.subr.mxu0 0.0
      %2737 = vmatpush2.msra.mxu0 0.0
      %2738 = vmatprep.subr.mxu0 0.0
      %2739 = vmatpush2.msra.mxu0 0.0
      %2740 = vmatprep.subr.mxu0 0.0
      %2741 = vmatpush2.msra.mxu0 0.0
      %2742 = vmatprep.subr.mxu0 0.0
      %2743 = vmatpush2.msra.mxu0 0.0
      %2744 = vmatprep.mubr.f32.mxu0 0.0
      %2745 = vmatmul.mubr.f32.gmra.mxu0 %v2522
      %v2746 = vpop.f32.mrf.mxu0
      %v2747 = vadd.f32 %v2600, %v2746
      %v2748 = vpop.f32.mrf.mxu0
      %v2749 = vadd.f32 %v2604, %v2748
      %2750 = vdwg.mxu0
      %v2751 = vmax.f32 %v2676, 0.0
      %v2752 = vmax.f32 %v2678, 0.0
      %v2753 = vmax.f32 %v2747, 0.0
      %v2754 = vmax.f32 %v2749, 0.0
      %v2755 = vld [vmem:[%s489] sm:$0xff]
      %v2756 = vld [vmem:[%s489 + $0x8] sm:$0xff]
      %v2757 = vld [vmem:[%s489 + $0x10] sm:$0xff]
      %v2758 = vld [vmem:[%s489 + $0x18] sm:$0xff]
      %v2759 = vld [vmem:[%s489 + $0x20] sm:$0xff]
      %v2760 = vld [vmem:[%s489 + $0x28] sm:$0xff]
      %v2761 = vld [vmem:[%s489 + $0x30] sm:$0xff]
      %v2762 = vld [vmem:[%s489 + $0x38] sm:$0xff]
      %v2763 = vld [vmem:[%s489 + $0x40] sm:$0xff]
      %v2764 = vld [vmem:[%s489 + $0x48] sm:$0xff]
      %v2765 = vld [vmem:[%s489 + $0x50] sm:$0xff]
      %v2766 = vld [vmem:[%s489 + $0x58] sm:$0xff]
      %v2767 = vld [vmem:[%s489 + $0x60] sm:$0xff]
      %v2768 = vld [vmem:[%s489 + $0x68] sm:$0xff]
      %v2769 = vld [vmem:[%s489 + $0x70] sm:$0xff]
      %v2770 = vld [vmem:[%s489 + $0x78] sm:$0xff]
      %v2771 = vld [vmem:[%s489 + $0x80] sm:$0xff]
      %v2772 = vld [vmem:[%s489 + $0x88] sm:$0xff]
      %v2773 = vld [vmem:[%s489 + $0x90] sm:$0xff]
      %v2774 = vld [vmem:[%s489 + $0x98] sm:$0xff]
      %v2775 = vld [vmem:[%s489 + $0xa0] sm:$0xff]
      %v2776 = vld [vmem:[%s489 + $0xa8] sm:$0xff]
      %v2777 = vld [vmem:[%s489 + $0xb0] sm:$0xff]
      %v2778 = vld [vmem:[%s489 + $0xb8] sm:$0xff]
      %v2779 = vld [vmem:[%s489 + $0xc0] sm:$0xff]
      %v2780 = vld [vmem:[%s489 + $0xc8] sm:$0xff]
      %v2781 = vld [vmem:[%s489 + $0xd0] sm:$0xff]
      %v2782 = vld [vmem:[%s489 + $0xd8] sm:$0xff]
      %v2783 = vld [vmem:[%s489 + $0xe0] sm:$0xff]
      %v2784 = vld [vmem:[%s489 + $0xe8] sm:$0xff]
      %v2785 = vld [vmem:[%s489 + $0xf0] sm:$0xff]
      %v2786 = vld [vmem:[%s489 + $0xf8] sm:$0xff]
      %v2787 = vld [vmem:[%s489 + $0x100] sm:$0xff]
      %v2788 = vld [vmem:[%s489 + $0x108] sm:$0xff]
      %v2789 = vld [vmem:[%s489 + $0x110] sm:$0xff]
      %v2790 = vld [vmem:[%s489 + $0x118] sm:$0xff]
      %v2791 = vld [vmem:[%s489 + $0x120] sm:$0xff]
      %v2792 = vld [vmem:[%s489 + $0x128] sm:$0xff]
      %v2793 = vld [vmem:[%s489 + $0x130] sm:$0xff]
      %v2794 = vld [vmem:[%s489 + $0x138] sm:$0xff]
      %v2795 = vld [vmem:[%s489 + $0x140] sm:$0xff]
      %v2796 = vld [vmem:[%s489 + $0x148] sm:$0xff]
      %v2797 = vld [vmem:[%s489 + $0x150] sm:$0xff]
      %v2798 = vld [vmem:[%s489 + $0x158] sm:$0xff]
      %v2799 = vld [vmem:[%s489 + $0x160] sm:$0xff]
      %v2800 = vld [vmem:[%s489 + $0x168] sm:$0xff]
      %v2801 = vld [vmem:[%s489 + $0x170] sm:$0xff]
      %v2802 = vld [vmem:[%s489 + $0x178] sm:$0xff]
      %v2803 = vld [vmem:[%s489 + $0x180] sm:$0xff]
      %v2804 = vld [vmem:[%s489 + $0x188] sm:$0xff]
      %v2805 = vld [vmem:[%s489 + $0x190] sm:$0xff]
      %v2806 = vld [vmem:[%s489 + $0x198] sm:$0xff]
      %v2807 = vld [vmem:[%s489 + $0x1a0] sm:$0xff]
      %v2808 = vld [vmem:[%s489 + $0x1a8] sm:$0xff]
      %v2809 = vld [vmem:[%s489 + $0x1b0] sm:$0xff]
      %v2810 = vld [vmem:[%s489 + $0x1b8] sm:$0xff]
      %v2811 = vld [vmem:[%s489 + $0x1c0] sm:$0xff]
      %v2812 = vld [vmem:[%s489 + $0x1c8] sm:$0xff]
      %v2813 = vld [vmem:[%s489 + $0x1d0] sm:$0xff]
      %v2814 = vld [vmem:[%s489 + $0x1d8] sm:$0xff]
      %v2815 = vld [vmem:[%s489 + $0x1e0] sm:$0xff]
      %v2816 = vld [vmem:[%s489 + $0x1e8] sm:$0xff]
      %v2817 = vld [vmem:[%s489 + $0x1f0] sm:$0xff]
      %v2818 = vld [vmem:[%s489 + $0x1f8] sm:$0xff]
      %2819 = vmatprep.subr.mxu0 0.0
      %2820 = vmatpush1.msra.mxu0 %v2770
      %2821 = vmatprep.subr.mxu0 0.0
      %2822 = vmatpush1.msra.mxu0 %v2769
      %2823 = vmatprep.subr.mxu0 0.0
      %2824 = vmatpush1.msra.mxu0 %v2768
      %2825 = vmatprep.subr.mxu0 0.0
      %2826 = vmatpush1.msra.mxu0 %v2767
      %2827 = vmatprep.subr.mxu0 0.0
      %2828 = vmatpush1.msra.mxu0 %v2766
      %2829 = vmatprep.subr.mxu0 0.0
      %2830 = vmatpush1.msra.mxu0 %v2765
      %2831 = vmatprep.subr.mxu0 0.0
      %2832 = vmatpush1.msra.mxu0 %v2764
      %2833 = vmatprep.subr.mxu0 0.0
      %2834 = vmatpush1.msra.mxu0 %v2763
      %2835 = vmatprep.subr.mxu0 0.0
      %2836 = vmatpush1.msra.mxu0 %v2762
      %2837 = vmatprep.subr.mxu0 0.0
      %2838 = vmatpush1.msra.mxu0 %v2761
      %2839 = vmatprep.subr.mxu0 0.0
      %2840 = vmatpush1.msra.mxu0 %v2760
      %2841 = vmatprep.subr.mxu0 0.0
      %2842 = vmatpush1.msra.mxu0 %v2759
      %2843 = vmatprep.subr.mxu0 0.0
      %2844 = vmatpush1.msra.mxu0 %v2758
      %2845 = vmatprep.subr.mxu0 0.0
      %2846 = vmatpush1.msra.mxu0 %v2757
      %2847 = vmatprep.subr.mxu0 0.0
      %2848 = vmatpush1.msra.mxu0 %v2756
      %2849 = vmatprep.subr.mxu0 0.0
      %2850 = vmatpush1.msra.mxu0 %v2755
      %2851 = vmatprep.subr.mxu0 0.0
      %2852 = vmatpush2.msra.mxu0 %v2786
      %2853 = vmatprep.subr.mxu0 0.0
      %2854 = vmatpush2.msra.mxu0 %v2785
      %2855 = vmatprep.subr.mxu0 0.0
      %2856 = vmatpush2.msra.mxu0 %v2784
      %2857 = vmatprep.subr.mxu0 0.0
      %2858 = vmatpush2.msra.mxu0 %v2783
      %2859 = vmatprep.subr.mxu0 0.0
      %2860 = vmatpush2.msra.mxu0 %v2782
      %2861 = vmatprep.subr.mxu0 0.0
      %2862 = vmatpush2.msra.mxu0 %v2781
      %2863 = vmatprep.subr.mxu0 0.0
      %2864 = vmatpush2.msra.mxu0 %v2780
      %2865 = vmatprep.subr.mxu0 0.0
      %2866 = vmatpush2.msra.mxu0 %v2779
      %2867 = vmatprep.subr.mxu0 0.0
      %2868 = vmatpush2.msra.mxu0 %v2778
      %2869 = vmatprep.subr.mxu0 0.0
      %2870 = vmatpush2.msra.mxu0 %v2777
      %2871 = vmatprep.subr.mxu0 0.0
      %2872 = vmatpush2.msra.mxu0 %v2776
      %2873 = vmatprep.subr.mxu0 0.0
      %2874 = vmatpush2.msra.mxu0 %v2775
      %2875 = vmatprep.subr.mxu0 0.0
      %2876 = vmatpush2.msra.mxu0 %v2774
      %2877 = vmatprep.subr.mxu0 0.0
      %2878 = vmatpush2.msra.mxu0 %v2773
      %2879 = vmatprep.subr.mxu0 0.0
      %2880 = vmatpush2.msra.mxu0 %v2772
      %2881 = vmatprep.subr.mxu0 0.0
      %2882 = vmatpush2.msra.mxu0 %v2771
      %2883 = vmatprep.mubr.f32.mxu0 %v2752
      %2884 = vmatmul.mubr.f32.gmra.mxu0 %v2751
      %v2885 = vpop.f32.mrf.mxu0
      %v2886 = vadd.f32 0.0, %v2885
      %v2887 = vpop.f32.mrf.mxu0
      %2888 = vdwg.mxu0
      %2889 = vmatprep.subr.mxu0 0.0
      %2890 = vmatpush1.msra.mxu0 %v2802
      %2891 = vmatprep.subr.mxu0 0.0
      %2892 = vmatpush1.msra.mxu0 %v2801
      %2893 = vmatprep.subr.mxu0 0.0
      %2894 = vmatpush1.msra.mxu0 %v2800
      %2895 = vmatprep.subr.mxu0 0.0
      %2896 = vmatpush1.msra.mxu0 %v2799
      %2897 = vmatprep.subr.mxu0 0.0
      %2898 = vmatpush1.msra.mxu0 %v2798
      %2899 = vmatprep.subr.mxu0 0.0
      %2900 = vmatpush1.msra.mxu0 %v2797
      %2901 = vmatprep.subr.mxu0 0.0
      %2902 = vmatpush1.msra.mxu0 %v2796
      %2903 = vmatprep.subr.mxu0 0.0
      %2904 = vmatpush1.msra.mxu0 %v2795
      %2905 = vmatprep.subr.mxu0 0.0
      %2906 = vmatpush1.msra.mxu0 %v2794
      %2907 = vmatprep.subr.mxu0 0.0
      %2908 = vmatpush1.msra.mxu0 %v2793
      %2909 = vmatprep.subr.mxu0 0.0
      %2910 = vmatpush1.msra.mxu0 %v2792
      %2911 = vmatprep.subr.mxu0 0.0
      %2912 = vmatpush1.msra.mxu0 %v2791
      %2913 = vmatprep.subr.mxu0 0.0
      %2914 = vmatpush1.msra.mxu0 %v2790
      %2915 = vmatprep.subr.mxu0 0.0
      %2916 = vmatpush1.msra.mxu0 %v2789
      %2917 = vmatprep.subr.mxu0 0.0
      %2918 = vmatpush1.msra.mxu0 %v2788
      %2919 = vmatprep.subr.mxu0 0.0
      %2920 = vmatpush1.msra.mxu0 %v2787
      %2921 = vmatprep.subr.mxu0 0.0
      %2922 = vmatpush2.msra.mxu0 %v2818
      %2923 = vmatprep.subr.mxu0 0.0
      %2924 = vmatpush2.msra.mxu0 %v2817
      %2925 = vmatprep.subr.mxu0 0.0
      %2926 = vmatpush2.msra.mxu0 %v2816
      %2927 = vmatprep.subr.mxu0 0.0
      %2928 = vmatpush2.msra.mxu0 %v2815
      %2929 = vmatprep.subr.mxu0 0.0
      %2930 = vmatpush2.msra.mxu0 %v2814
      %2931 = vmatprep.subr.mxu0 0.0
      %2932 = vmatpush2.msra.mxu0 %v2813
      %2933 = vmatprep.subr.mxu0 0.0
      %2934 = vmatpush2.msra.mxu0 %v2812
      %2935 = vmatprep.subr.mxu0 0.0
      %2936 = vmatpush2.msra.mxu0 %v2811
      %2937 = vmatprep.subr.mxu0 0.0
      %2938 = vmatpush2.msra.mxu0 %v2810
      %2939 = vmatprep.subr.mxu0 0.0
      %2940 = vmatpush2.msra.mxu0 %v2809
      %2941 = vmatprep.subr.mxu0 0.0
      %2942 = vmatpush2.msra.mxu0 %v2808
      %2943 = vmatprep.subr.mxu0 0.0
      %2944 = vmatpush2.msra.mxu0 %v2807
      %2945 = vmatprep.subr.mxu0 0.0
      %2946 = vmatpush2.msra.mxu0 %v2806
      %2947 = vmatprep.subr.mxu0 0.0
      %2948 = vmatpush2.msra.mxu0 %v2805
      %2949 = vmatprep.subr.mxu0 0.0
      %2950 = vmatpush2.msra.mxu0 %v2804
      %2951 = vmatprep.subr.mxu0 0.0
      %2952 = vmatpush2.msra.mxu0 %v2803
      %2953 = vmatprep.mubr.f32.mxu0 %v2754
      %2954 = vmatmul.mubr.f32.gmra.mxu0 %v2753
      %v2955 = vpop.f32.mrf.mxu0
      %v2956 = vadd.f32 %v2886, %v2955
      %v2957 = vpop.f32.mrf.mxu0
      %2958 = vdwg.mxu0
      %v2959 = vadd.f32 %v2507, %v2956
      %2960 = vst [vmem:[%s10] sm:$0xff] %v2959
      // Predicated region
      $region65: #{transformer_forward.2} parent=59 // pred_check
        %p2961 = pneg %p289
      $region66: #{transformer_forward.2} parent=59 // pred_check_branch
        %2963 = sbr.rel (%p2961) target = $region68
      $region67: #{transformer_forward.2} parent=59 // pred_region
        _
      $region68: #{transformer_forward.2} parent=59 // pred_fallthru
        _
      // Predicated region
      $region69: #{transformer_forward.2} parent=59 // pred_check
        %p2964 = pneg %p289
      $region70: #{transformer_forward.2} parent=59 // pred_check_branch
        %2966 = sbr.rel (%p2964) target = $region72
      $region71: #{transformer_forward.2} parent=59 // pred_region
        _
      $region72: #{transformer_forward.2} parent=59 // pred_fallthru
        _
    $region60: #{transformer_forward.2} parent=5 // pred_fallthru
      _
    %p2967 = scmp.le.s32.totalorder 2, %s16
    // Predicated region
    $region73: #{transformer_forward.2} parent=5 // pred_check
      %p2968 = pneg %p2967
    $region74: #{transformer_forward.2} parent=5 // pred_check_branch
      %2970 = sbr.rel (%p2968) target = $region76
    $region75: #{transformer_forward.2} parent=5 // pred_region
      %s2971 = ssub.s32 %s16, 2
    $region76: #{transformer_forward.2} parent=5 // pred_fallthru
      _
  $region6: #{transformer_forward.2} parent=0 // loop_footer
    %s20 = sadd.s32 1, %s16
  $region7: #{transformer_forward.2} parent=0 // loop_footer_branch
    %15 = sbr.rel target = $region3
  $region8: #{transformer_forward.2} parent=0 // loop_exit
    _

</llo_original>
